<compile_context>
chip_gen: v7x
topology: tpu7x:2x2x1
jax: 0.10.0
libtpu: 0.0.40
codegen_flags: <defaults>
</compile_context>

<pallas_src>
from functools import partial

import numpy as np
import jax
import jax.numpy as jnp
from jax.experimental import pallas as pl
from jax.experimental.pallas import tpu as pltpu


def _signal_lstm_kernel(x_ref,      # (T*Bp, 1)  f32, time-major, batch padded to Bp
                        wih0_ref,   # (1,  4Hp)  f32  layer-0 input weights (I == 1)
                        b0_ref,     # (1,  4Hp)  f32  (= b_ih_l0 + b_hh_l0)
                        whh0_ref,   # (Hp, 4Hp)  bf16
                        w1_ref,     # (2Hp,4Hp)  bf16 concat([w_ih_l1; w_hh_l1], axis=0)
                        b1_ref,     # (1,  4Hp)  f32  (= b_ih_l1 + b_hh_l1)
                        wfc_ref,    # (Hp, Op)   bf16
                        bfc_ref,    # (1,  Op)   f32
                        out_ref,    # (Bp, Op)   f32
                        xp_ref,     # scratch VMEM (T*Bp, 4Hp) f32
                        *, hidden_pad, seq_len, batch_pad):
    Hp, T, Bp = hidden_pad, seq_len, batch_pad

    # --- layer-0 input projection -------------------------------------------
    # I == 1, so x @ W_ih0 is an outer product: do it on the VPU (keeps the MXU
    # clear right before the latency-critical recurrence) and stage the whole
    # (T*Bp, 4Hp) result in VMEM scratch so per-step slabs are plain aligned loads.
    xp_ref[...] = x_ref[...] * wih0_ref[...] + b0_ref[...]

    whh0 = whh0_ref[...]                                     # (Hp, 4Hp)  bf16
    w1 = w1_ref[...]                                         # (2Hp, 4Hp) bf16
    # Hoist the bias broadcast (JAX does not CSE broadcast_in_dim inside loops).
    b1b = jnp.broadcast_to(b1_ref[...], (Bp, 4 * Hp))        # f32

    def gate_math(g, c):
        # Gate order (i, f, o, g): sigmoids contiguous -> one wide sigmoid + one
        # tanh; every slice falls exactly on a 128-lane vreg boundary (Hp = 128).
        s = jax.nn.sigmoid(g[:, :3 * Hp])
        cand = jnp.tanh(g[:, 3 * Hp:])
        i_g = s[:, 0 * Hp:1 * Hp]
        f_g = s[:, 1 * Hp:2 * Hp]
        o_g = s[:, 2 * Hp:3 * Hp]
        c_new = f_g * c + i_g * cand                          # f32 state math
        h_new = o_g * jnp.tanh(c_new)
        return h_new, c_new

    zf = jnp.zeros((Bp, Hp), jnp.float32)
    zb = jnp.zeros((Bp, Hp), jnp.bfloat16)
    h1, c1, h2, c2 = zb, zf, zb, zf

    # T is small and static: fully unroll so the scheduler can overlap the
    # layer-1 matmul of step t with layer-0 work of step t+1.
    for t in range(T):
        xp_t = xp_ref[t * Bp:(t + 1) * Bp, :]                 # aligned (Bp, 4Hp) slab

        # Layer 0: single recurrent matmul per step (input projection precomputed).
        g0 = xp_t + jnp.dot(h1, whh0, preferred_element_type=jnp.float32)
        h1f, c1 = gate_math(g0, c1)
        h1 = h1f.astype(jnp.bfloat16)                         # matmul-operand dtype

        # TODO(synk): inter-layer dropout(p=0.2) is train-mode only in PyTorch;
        # eval-mode (identity) semantics are implemented here.

        # Layer 1: fused input+recurrent matmul, K = 2*Hp = 256, one MXU pass.
        g1 = (jnp.dot(jnp.concatenate([h1, h2], axis=1), w1,
                      preferred_element_type=jnp.float32) + b1b)
        h2f, c2 = gate_math(g1, c2)
        h2 = h2f.astype(jnp.bfloat16)

    # fc(out[:, -1, :]) on the lane-dense padded output tile; padded h2 lanes are
    # zero and the matching wfc rows are zero, so real columns are exact.
    out_ref[...] = (jnp.dot(h2, wfc_ref[...], preferred_element_type=jnp.float32)
                    + bfc_ref[...])


def prepare_params(params, *, input_size=1, hidden_size=50, output_size=3,
                   hidden_pad=128, out_pad=128):
    """One-time weight preprocessing (reorder, pad, fuse, cast).

    Call this ONCE at model-load time and reuse the result for every forward
    call — none of this runs in the per-call path.
    """
    assert input_size == 1, "layer-0 VPU outer-product path assumes input_size == 1"
    H, Hp, O, Op = hidden_size, hidden_pad, output_size, out_pad

    def reorder_pad_cols(w):
        # (in, 4H) PyTorch gate order (i,f,g,o) -> (in, 4Hp) in (i,f,o,g), zero-padded.
        chunks = (w[:, 0:H], w[:, H:2 * H], w[:, 3 * H:4 * H], w[:, 2 * H:3 * H])
        return jnp.concatenate(
            [jnp.pad(c, ((0, 0), (0, Hp - H))) for c in chunks], axis=1)

    def pad_rows(w, rows):
        return jnp.pad(w, ((0, rows - w.shape[0]), (0, 0)))

    wih0 = reorder_pad_cols(params["w_ih_l0"]).astype(jnp.float32)            # (1, 4Hp)
    b0 = reorder_pad_cols(params["b_l0"]).astype(jnp.float32)                 # (1, 4Hp)
    whh0 = reorder_pad_cols(pad_rows(params["w_hh_l0"], Hp)).astype(jnp.bfloat16)
    wih1 = reorder_pad_cols(pad_rows(params["w_ih_l1"], Hp))
    whh1 = reorder_pad_cols(pad_rows(params["w_hh_l1"], Hp))
    w1 = jnp.concatenate([wih1, whh1], axis=0).astype(jnp.bfloat16)           # (2Hp, 4Hp)
    b1 = reorder_pad_cols(params["b_l1"]).astype(jnp.float32)                 # (1, 4Hp)
    wfc = jnp.pad(params["w_fc"],
                  ((0, Hp - H), (0, Op - O))).astype(jnp.bfloat16)            # (Hp, Op)
    bfc = jnp.pad(params["b_fc"], ((0, 0), (0, Op - O))).astype(jnp.float32)  # (1, Op)

    return {"wih0": wih0, "b0": b0, "whh0": whh0, "w1": w1, "b1": b1,
            "wfc": wfc, "bfc": bfc}


def signal_lstm_forward(x, prepared, *, hidden_size=50, output_size=3,
                        hidden_pad=128, out_pad=128, batch_pad=8):
    """x: (B, T, 1) batch-first. `prepared` is the output of prepare_params().
    Returns (B, output_size)."""
    B, T, I = x.shape
    assert I == 1
    Bp, Hp, Op = batch_pad, hidden_pad, out_pad
    assert Bp % 8 == 0 and Bp >= B

    # Per-call input prep is tiny (T*Bp floats): time-major + pad batch to a full
    # sublane tile so every per-step slab inside the kernel is (8,128)-tile aligned.
    x_tm = jnp.transpose(x.astype(jnp.float32), (1, 0, 2))    # (T, B, 1)
    x_tm = jnp.pad(x_tm, ((0, 0), (0, Bp - B), (0, 0)))       # (T, Bp, 1)
    x2d = x_tm.reshape(T * Bp, I)                             # (T*Bp, 1)

    kernel = partial(_signal_lstm_kernel, hidden_pad=Hp, seq_len=T, batch_pad=Bp)

    # Advisory cost for XLA's scheduler around this microsecond-scale call.
    flops = 2 * T * (Bp * Hp * 4 * Hp + Bp * 2 * Hp * 4 * Hp) + 2 * Bp * Hp * Op
    transcendentals = T * 2 * 5 * Bp * Hp
    bytes_accessed = (x2d.size * 4 + 2 * 4 * Hp * 4            # x, wih0, b0
                      + Hp * 4 * Hp * 2 + 2 * Hp * 4 * Hp * 2  # whh0, w1 (bf16)
                      + 4 * Hp * 4 + Hp * Op * 2 + Op * 4      # b1, wfc, bfc
                      + Bp * Op * 4)                           # out

    args = (x2d, prepared["wih0"], prepared["b0"], prepared["whh0"],
            prepared["w1"], prepared["b1"], prepared["wfc"], prepared["bfc"])

    out_padded = pl.pallas_call(
        kernel,
        out_shape=jax.ShapeDtypeStruct((Bp, Op), jnp.float32),
        in_specs=[pl.BlockSpec(memory_space=pltpu.MemorySpace.VMEM)] * len(args),
        out_specs=pl.BlockSpec(memory_space=pltpu.MemorySpace.VMEM),
        scratch_shapes=[pltpu.VMEM((T * Bp, 4 * Hp), jnp.float32)],
        cost_estimate=pl.CostEstimate(flops=flops,
                                      transcendentals=transcendentals,
                                      bytes_accessed=bytes_accessed),
    )(*args)

    return out_padded[:B, :output_size]


def init_params(key, input_size=1, hidden_size=50, output_size=3):
    """Deterministic init mimicking PyTorch's U(-1/sqrt(H), 1/sqrt(H))."""
    H = hidden_size
    bound = 1.0 / float(np.sqrt(H))
    keys = jax.random.split(key, 10)

    def u(k, shape):
        return jax.random.uniform(k, shape, jnp.float32, -bound, bound)

    # Weights pre-transposed relative to PyTorch storage ((4H, in) -> (in, 4H)),
    # kept in PyTorch gate order (i,f,g,o); prepare_params reorders/pads/casts.
    return {
        "w_ih_l0": u(keys[0], (input_size, 4 * H)),
        "w_hh_l0": u(keys[1], (H, 4 * H)),
        "b_l0":    u(keys[2], (1, 4 * H)) + u(keys[3], (1, 4 * H)),
        "w_ih_l1": u(keys[4], (H, 4 * H)),
        "w_hh_l1": u(keys[5], (H, 4 * H)),
        "b_l1":    u(keys[6], (1, 4 * H)) + u(keys[7], (1, 4 * H)),
        "w_fc":    u(keys[8], (H, output_size)),
        "b_fc":    u(keys[9], (1, output_size)),
    }


def reference_forward(x, params, *, hidden_size=50):
    """Pure-JAX f32 reference (eval-mode 2-layer LSTM + Linear head)."""
    H = hidden_size
    B = x.shape[0]

    def cell(x_in, h, c, wih, whh, b):
        g = x_in @ wih + h @ whh + b
        i = jax.nn.sigmoid(g[:, 0:H])
        f = jax.nn.sigmoid(g[:, H:2 * H])
        gg = jnp.tanh(g[:, 2 * H:3 * H])
        o = jax.nn.sigmoid(g[:, 3 * H:4 * H])
        c = f * c + i * gg
        h = o * jnp.tanh(c)
        return h, c

    h1 = c1 = h2 = c2 = jnp.zeros((B, H), jnp.float32)
    for t in range(x.shape[1]):
        x_t = x[:, t, :]
        h1, c1 = cell(x_t, h1, c1, params["w_ih_l0"], params["w_hh_l0"], params["b_l0"])
        h2, c2 = cell(h1, h2, c2, params["w_ih_l1"], params["w_hh_l1"], params["b_l1"])
    return h2 @ params["w_fc"] + params["b_fc"]


if __name__ == "__main__":
    key = jax.random.PRNGKey(0)
    pkey, xkey = jax.random.split(key)

    B, T, I = 2, 8, 1          # batch=2, seq_len=8, input_size=1
    H, O = 50, 3               # hidden_size=50, output_size=3 (module defaults)

    params = init_params(pkey, input_size=I, hidden_size=H, output_size=O)
    # One-time, model-load-time weight preprocessing (NOT in the per-call path).
    prepared = prepare_params(params, input_size=I, hidden_size=H, output_size=O)

    x = jax.random.normal(xkey, (B, T, I), jnp.float32)

    out = signal_lstm_forward(x, prepared, hidden_size=H, output_size=O)
    out = jax.block_until_ready(out)

    ref = reference_forward(x, params, hidden_size=H)
    assert out.shape == (B, O)
    # bf16 matmul operands (weights + h) -> tolerance ~1e-2 vs the f32 reference.
    np.testing.assert_allclose(np.asarray(out), np.asarray(ref), rtol=2e-2, atol=2e-2)

    print("KERNEL_OK")
</pallas_src>

<mosaic_0001>
module attributes {stable_mosaic.version = 11 : i64} {
  func.func @_signal_lstm_kernel(%arg0: memref<64x1xf32, #tpu.memory_space<vmem>>, %arg1: memref<1x512xf32, #tpu.memory_space<vmem>>, %arg2: memref<1x512xf32, #tpu.memory_space<vmem>>, %arg3: memref<128x512xbf16, #tpu.memory_space<vmem>>, %arg4: memref<256x512xbf16, #tpu.memory_space<vmem>>, %arg5: memref<1x512xf32, #tpu.memory_space<vmem>>, %arg6: memref<128x128xbf16, #tpu.memory_space<vmem>>, %arg7: memref<1x128xf32, #tpu.memory_space<vmem>>, %arg8: memref<8x128xf32, #tpu.memory_space<vmem>>, %arg9: memref<64x512xf32, #tpu.memory_space<vmem>>) attributes {dimension_semantics = [], scalar_prefetch = 0 : i64, scratch_operands = 1 : i64, tpu.core_type = #tpu.core_type<tc>} {
    %c0 = arith.constant 0 : index
    %c0_0 = arith.constant 0 : index
    %0 = vector.load %arg0[%c0, %c0_0] : memref<64x1xf32, #tpu.memory_space<vmem>>, vector<64x1xf32>
    %c0_1 = arith.constant 0 : index
    %c0_2 = arith.constant 0 : index
    %1 = vector.load %arg1[%c0_1, %c0_2] : memref<1x512xf32, #tpu.memory_space<vmem>>, vector<1x512xf32>
    %2 = vector.broadcast %0 : vector<64x1xf32> to vector<64x512xf32>
    %3 = vector.broadcast %1 : vector<1x512xf32> to vector<64x512xf32>
    %4 = arith.mulf %2, %3 : vector<64x512xf32>
    %c0_3 = arith.constant 0 : index
    %c0_4 = arith.constant 0 : index
    %5 = vector.load %arg2[%c0_3, %c0_4] : memref<1x512xf32, #tpu.memory_space<vmem>>, vector<1x512xf32>
    %6 = vector.broadcast %5 : vector<1x512xf32> to vector<64x512xf32>
    %7 = arith.addf %4, %6 : vector<64x512xf32>
    %c0_5 = arith.constant 0 : index
    %c0_6 = arith.constant 0 : index
    %8 = vector.load %arg9[%c0_5, %c0_6] : memref<64x512xf32, #tpu.memory_space<vmem>>, vector<64x512xf32>
    tpu.vector_store %arg9[%c0_5, %c0_6], %7 {strides = array<i32>} : memref<64x512xf32, #tpu.memory_space<vmem>>, vector<64x512xf32>,
    %c0_7 = arith.constant 0 : index
    %c0_8 = arith.constant 0 : index
    %9 = vector.load %arg3[%c0_7, %c0_8] : memref<128x512xbf16, #tpu.memory_space<vmem>>, vector<128x512xbf16>
    %c0_9 = arith.constant 0 : index
    %c0_10 = arith.constant 0 : index
    %10 = vector.load %arg4[%c0_9, %c0_10] : memref<256x512xbf16, #tpu.memory_space<vmem>>, vector<256x512xbf16>
    %c0_11 = arith.constant 0 : index
    %c0_12 = arith.constant 0 : index
    %11 = vector.load %arg5[%c0_11, %c0_12] : memref<1x512xf32, #tpu.memory_space<vmem>>, vector<1x512xf32>
    %12 = vector.shape_cast %11 : vector<1x512xf32> to vector<1x512xf32>
    %13 = vector.broadcast %12 : vector<1x512xf32> to vector<8x512xf32>
    %cst = arith.constant 0.000000e+00 : f32
    %14 = vector.broadcast %cst : f32 to vector<8x128xf32>
    %cst_13 = arith.constant 0.000000e+00 : bf16
    %15 = vector.broadcast %cst_13 : bf16 to vector<8x128xbf16>
    %c0_14 = arith.constant 0 : index
    %c0_15 = arith.constant 0 : index
    %16 = vector.load %arg9[%c0_14, %c0_15] : memref<64x512xf32, #tpu.memory_space<vmem>>, vector<8x512xf32>
    %cst_16 = arith.constant dense<0.000000e+00> : vector<8x512xf32>
    %17 = tpu.matmul %15, %9, %cst_16 {dimension_numbers = #tpu.dot_dimension_numbers<[1], [0], [0], [1], [0, 0, 1, 1], [], []>} : vector<8x128xbf16>, vector<128x512xbf16>, vector<8x512xf32> -> vector<8x512xf32>
    %18 = arith.addf %16, %17 : vector<8x512xf32>
    %19 = vector.extract_strided_slice %18 {offsets = [0, 0], sizes = [8, 384], strides = [1, 1]} : vector<8x512xf32> to vector<8x384xf32>
    %20 = arith.negf %19 : vector<8x384xf32>
    %21 = math.exp %20 : vector<8x384xf32>
    %cst_17 = arith.constant 1.000000e+00 : f32
    %22 = vector.broadcast %cst_17 : f32 to vector<8x384xf32>
    %23 = arith.addf %22, %21 : vector<8x384xf32>
    %24 = arith.divf %22, %23 : vector<8x384xf32>
    %25 = vector.extract_strided_slice %18 {offsets = [0, 384], sizes = [8, 128], strides = [1, 1]} : vector<8x512xf32> to vector<8x128xf32>
    %26 = math.tanh %25 : vector<8x128xf32>
    %27 = vector.extract_strided_slice %24 {offsets = [0, 0], sizes = [8, 128], strides = [1, 1]} : vector<8x384xf32> to vector<8x128xf32>
    %28 = vector.extract_strided_slice %24 {offsets = [0, 128], sizes = [8, 128], strides = [1, 1]} : vector<8x384xf32> to vector<8x128xf32>
    %29 = vector.extract_strided_slice %24 {offsets = [0, 256], sizes = [8, 128], strides = [1, 1]} : vector<8x384xf32> to vector<8x128xf32>
    %30 = arith.mulf %28, %14 : vector<8x128xf32>
    %31 = arith.mulf %27, %26 : vector<8x128xf32>
    %32 = arith.addf %30, %31 : vector<8x128xf32>
    %33 = math.tanh %32 : vector<8x128xf32>
    %34 = arith.mulf %29, %33 : vector<8x128xf32>
    %35 = arith.truncf %34 : vector<8x128xf32> to vector<8x128xbf16>
    %36 = tpu.concatenate %35, %15 in 1 : vector<8x128xbf16>, vector<8x128xbf16> -> vector<8x256xbf16>
    %cst_18 = arith.constant dense<0.000000e+00> : vector<8x512xf32>
    %37 = tpu.matmul %36, %10, %cst_18 {dimension_numbers = #tpu.dot_dimension_numbers<[1], [0], [0], [1], [0, 0, 1, 1], [], []>} : vector<8x256xbf16>, vector<256x512xbf16>, vector<8x512xf32> -> vector<8x512xf32>
    %38 = arith.addf %37, %13 : vector<8x512xf32>
    %39 = vector.extract_strided_slice %38 {offsets = [0, 0], sizes = [8, 384], strides = [1, 1]} : vector<8x512xf32> to vector<8x384xf32>
    %40 = arith.negf %39 : vector<8x384xf32>
    %41 = math.exp %40 : vector<8x384xf32>
    %cst_19 = arith.constant 1.000000e+00 : f32
    %42 = vector.broadcast %cst_19 : f32 to vector<8x384xf32>
    %43 = arith.addf %42, %41 : vector<8x384xf32>
    %44 = arith.divf %42, %43 : vector<8x384xf32>
    %45 = vector.extract_strided_slice %38 {offsets = [0, 384], sizes = [8, 128], strides = [1, 1]} : vector<8x512xf32> to vector<8x128xf32>
    %46 = math.tanh %45 : vector<8x128xf32>
    %47 = vector.extract_strided_slice %44 {offsets = [0, 0], sizes = [8, 128], strides = [1, 1]} : vector<8x384xf32> to vector<8x128xf32>
    %48 = vector.extract_strided_slice %44 {offsets = [0, 128], sizes = [8, 128], strides = [1, 1]} : vector<8x384xf32> to vector<8x128xf32>
    %49 = vector.extract_strided_slice %44 {offsets = [0, 256], sizes = [8, 128], strides = [1, 1]} : vector<8x384xf32> to vector<8x128xf32>
    %50 = arith.mulf %48, %14 : vector<8x128xf32>
    %51 = arith.mulf %47, %46 : vector<8x128xf32>
    %52 = arith.addf %50, %51 : vector<8x128xf32>
    %53 = math.tanh %52 : vector<8x128xf32>
    %54 = arith.mulf %49, %53 : vector<8x128xf32>
    %55 = arith.truncf %54 : vector<8x128xf32> to vector<8x128xbf16>
    %c8 = arith.constant 8 : index
    %c0_20 = arith.constant 0 : index
    %56 = vector.load %arg9[%c8, %c0_20] : memref<64x512xf32, #tpu.memory_space<vmem>>, vector<8x512xf32>
    %cst_21 = arith.constant dense<0.000000e+00> : vector<8x512xf32>
    %57 = tpu.matmul %35, %9, %cst_21 {dimension_numbers = #tpu.dot_dimension_numbers<[1], [0], [0], [1], [0, 0, 1, 1], [], []>} : vector<8x128xbf16>, vector<128x512xbf16>, vector<8x512xf32> -> vector<8x512xf32>
    %58 = arith.addf %56, %57 : vector<8x512xf32>
    %59 = vector.extract_strided_slice %58 {offsets = [0, 0], sizes = [8, 384], strides = [1, 1]} : vector<8x512xf32> to vector<8x384xf32>
    %60 = arith.negf %59 : vector<8x384xf32>
    %61 = math.exp %60 : vector<8x384xf32>
    %cst_22 = arith.constant 1.000000e+00 : f32
    %62 = vector.broadcast %cst_22 : f32 to vector<8x384xf32>
    %63 = arith.addf %62, %61 : vector<8x384xf32>
    %64 = arith.divf %62, %63 : vector<8x384xf32>
    %65 = vector.extract_strided_slice %58 {offsets = [0, 384], sizes = [8, 128], strides = [1, 1]} : vector<8x512xf32> to vector<8x128xf32>
    %66 = math.tanh %65 : vector<8x128xf32>
    %67 = vector.extract_strided_slice %64 {offsets = [0, 0], sizes = [8, 128], strides = [1, 1]} : vector<8x384xf32> to vector<8x128xf32>
    %68 = vector.extract_strided_slice %64 {offsets = [0, 128], sizes = [8, 128], strides = [1, 1]} : vector<8x384xf32> to vector<8x128xf32>
    %69 = vector.extract_strided_slice %64 {offsets = [0, 256], sizes = [8, 128], strides = [1, 1]} : vector<8x384xf32> to vector<8x128xf32>
    %70 = arith.mulf %68, %32 : vector<8x128xf32>
    %71 = arith.mulf %67, %66 : vector<8x128xf32>
    %72 = arith.addf %70, %71 : vector<8x128xf32>
    %73 = math.tanh %72 : vector<8x128xf32>
    %74 = arith.mulf %69, %73 : vector<8x128xf32>
    %75 = arith.truncf %74 : vector<8x128xf32> to vector<8x128xbf16>
    %76 = tpu.concatenate %75, %55 in 1 : vector<8x128xbf16>, vector<8x128xbf16> -> vector<8x256xbf16>
    %cst_23 = arith.constant dense<0.000000e+00> : vector<8x512xf32>
    %77 = tpu.matmul %76, %10, %cst_23 {dimension_numbers = #tpu.dot_dimension_numbers<[1], [0], [0], [1], [0, 0, 1, 1], [], []>} : vector<8x256xbf16>, vector<256x512xbf16>, vector<8x512xf32> -> vector<8x512xf32>
    %78 = arith.addf %77, %13 : vector<8x512xf32>
    %79 = vector.extract_strided_slice %78 {offsets = [0, 0], sizes = [8, 384], strides = [1, 1]} : vector<8x512xf32> to vector<8x384xf32>
    %80 = arith.negf %79 : vector<8x384xf32>
    %81 = math.exp %80 : vector<8x384xf32>
    %cst_24 = arith.constant 1.000000e+00 : f32
    %82 = vector.broadcast %cst_24 : f32 to vector<8x384xf32>
    %83 = arith.addf %82, %81 : vector<8x384xf32>
    %84 = arith.divf %82, %83 : vector<8x384xf32>
    %85 = vector.extract_strided_slice %78 {offsets = [0, 384], sizes = [8, 128], strides = [1, 1]} : vector<8x512xf32> to vector<8x128xf32>
    %86 = math.tanh %85 : vector<8x128xf32>
    %87 = vector.extract_strided_slice %84 {offsets = [0, 0], sizes = [8, 128], strides = [1, 1]} : vector<8x384xf32> to vector<8x128xf32>
    %88 = vector.extract_strided_slice %84 {offsets = [0, 128], sizes = [8, 128], strides = [1, 1]} : vector<8x384xf32> to vector<8x128xf32>
    %89 = vector.extract_strided_slice %84 {offsets = [0, 256], sizes = [8, 128], strides = [1, 1]} : vector<8x384xf32> to vector<8x128xf32>
    %90 = arith.mulf %88, %52 : vector<8x128xf32>
    %91 = arith.mulf %87, %86 : vector<8x128xf32>
    %92 = arith.addf %90, %91 : vector<8x128xf32>
    %93 = math.tanh %92 : vector<8x128xf32>
    %94 = arith.mulf %89, %93 : vector<8x128xf32>
    %95 = arith.truncf %94 : vector<8x128xf32> to vector<8x128xbf16>
    %c16 = arith.constant 16 : index
    %c0_25 = arith.constant 0 : index
    %96 = vector.load %arg9[%c16, %c0_25] : memref<64x512xf32, #tpu.memory_space<vmem>>, vector<8x512xf32>
    %cst_26 = arith.constant dense<0.000000e+00> : vector<8x512xf32>
    %97 = tpu.matmul %75, %9, %cst_26 {dimension_numbers = #tpu.dot_dimension_numbers<[1], [0], [0], [1], [0, 0, 1, 1], [], []>} : vector<8x128xbf16>, vector<128x512xbf16>, vector<8x512xf32> -> vector<8x512xf32>
    %98 = arith.addf %96, %97 : vector<8x512xf32>
    %99 = vector.extract_strided_slice %98 {offsets = [0, 0], sizes = [8, 384], strides = [1, 1]} : vector<8x512xf32> to vector<8x384xf32>
    %100 = arith.negf %99 : vector<8x384xf32>
    %101 = math.exp %100 : vector<8x384xf32>
    %cst_27 = arith.constant 1.000000e+00 : f32
    %102 = vector.broadcast %cst_27 : f32 to vector<8x384xf32>
    %103 = arith.addf %102, %101 : vector<8x384xf32>
    %104 = arith.divf %102, %103 : vector<8x384xf32>
    %105 = vector.extract_strided_slice %98 {offsets = [0, 384], sizes = [8, 128], strides = [1, 1]} : vector<8x512xf32> to vector<8x128xf32>
    %106 = math.tanh %105 : vector<8x128xf32>
    %107 = vector.extract_strided_slice %104 {offsets = [0, 0], sizes = [8, 128], strides = [1, 1]} : vector<8x384xf32> to vector<8x128xf32>
    %108 = vector.extract_strided_slice %104 {offsets = [0, 128], sizes = [8, 128], strides = [1, 1]} : vector<8x384xf32> to vector<8x128xf32>
    %109 = vector.extract_strided_slice %104 {offsets = [0, 256], sizes = [8, 128], strides = [1, 1]} : vector<8x384xf32> to vector<8x128xf32>
    %110 = arith.mulf %108, %72 : vector<8x128xf32>
    %111 = arith.mulf %107, %106 : vector<8x128xf32>
    %112 = arith.addf %110, %111 : vector<8x128xf32>
    %113 = math.tanh %112 : vector<8x128xf32>
    %114 = arith.mulf %109, %113 : vector<8x128xf32>
    %115 = arith.truncf %114 : vector<8x128xf32> to vector<8x128xbf16>
    %116 = tpu.concatenate %115, %95 in 1 : vector<8x128xbf16>, vector<8x128xbf16> -> vector<8x256xbf16>
    %cst_28 = arith.constant dense<0.000000e+00> : vector<8x512xf32>
    %117 = tpu.matmul %116, %10, %cst_28 {dimension_numbers = #tpu.dot_dimension_numbers<[1], [0], [0], [1], [0, 0, 1, 1], [], []>} : vector<8x256xbf16>, vector<256x512xbf16>, vector<8x512xf32> -> vector<8x512xf32>
    %118 = arith.addf %117, %13 : vector<8x512xf32>
    %119 = vector.extract_strided_slice %118 {offsets = [0, 0], sizes = [8, 384], strides = [1, 1]} : vector<8x512xf32> to vector<8x384xf32>
    %120 = arith.negf %119 : vector<8x384xf32>
    %121 = math.exp %120 : vector<8x384xf32>
    %cst_29 = arith.constant 1.000000e+00 : f32
    %122 = vector.broadcast %cst_29 : f32 to vector<8x384xf32>
    %123 = arith.addf %122, %121 : vector<8x384xf32>
    %124 = arith.divf %122, %123 : vector<8x384xf32>
    %125 = vector.extract_strided_slice %118 {offsets = [0, 384], sizes = [8, 128], strides = [1, 1]} : vector<8x512xf32> to vector<8x128xf32>
    %126 = math.tanh %125 : vector<8x128xf32>
    %127 = vector.extract_strided_slice %124 {offsets = [0, 0], sizes = [8, 128], strides = [1, 1]} : vector<8x384xf32> to vector<8x128xf32>
    %128 = vector.extract_strided_slice %124 {offsets = [0, 128], sizes = [8, 128], strides = [1, 1]} : vector<8x384xf32> to vector<8x128xf32>
    %129 = vector.extract_strided_slice %124 {offsets = [0, 256], sizes = [8, 128], strides = [1, 1]} : vector<8x384xf32> to vector<8x128xf32>
    %130 = arith.mulf %128, %92 : vector<8x128xf32>
    %131 = arith.mulf %127, %126 : vector<8x128xf32>
    %132 = arith.addf %130, %131 : vector<8x128xf32>
    %133 = math.tanh %132 : vector<8x128xf32>
    %134 = arith.mulf %129, %133 : vector<8x128xf32>
    %135 = arith.truncf %134 : vector<8x128xf32> to vector<8x128xbf16>
    %c24 = arith.constant 24 : index
    %c0_30 = arith.constant 0 : index
    %136 = vector.load %arg9[%c24, %c0_30] : memref<64x512xf32, #tpu.memory_space<vmem>>, vector<8x512xf32>
    %cst_31 = arith.constant dense<0.000000e+00> : vector<8x512xf32>
    %137 = tpu.matmul %115, %9, %cst_31 {dimension_numbers = #tpu.dot_dimension_numbers<[1], [0], [0], [1], [0, 0, 1, 1], [], []>} : vector<8x128xbf16>, vector<128x512xbf16>, vector<8x512xf32> -> vector<8x512xf32>
    %138 = arith.addf %136, %137 : vector<8x512xf32>
    %139 = vector.extract_strided_slice %138 {offsets = [0, 0], sizes = [8, 384], strides = [1, 1]} : vector<8x512xf32> to vector<8x384xf32>
    %140 = arith.negf %139 : vector<8x384xf32>
    %141 = math.exp %140 : vector<8x384xf32>
    %cst_32 = arith.constant 1.000000e+00 : f32
    %142 = vector.broadcast %cst_32 : f32 to vector<8x384xf32>
    %143 = arith.addf %142, %141 : vector<8x384xf32>
    %144 = arith.divf %142, %143 : vector<8x384xf32>
    %145 = vector.extract_strided_slice %138 {offsets = [0, 384], sizes = [8, 128], strides = [1, 1]} : vector<8x512xf32> to vector<8x128xf32>
    %146 = math.tanh %145 : vector<8x128xf32>
    %147 = vector.extract_strided_slice %144 {offsets = [0, 0], sizes = [8, 128], strides = [1, 1]} : vector<8x384xf32> to vector<8x128xf32>
    %148 = vector.extract_strided_slice %144 {offsets = [0, 128], sizes = [8, 128], strides = [1, 1]} : vector<8x384xf32> to vector<8x128xf32>
    %149 = vector.extract_strided_slice %144 {offsets = [0, 256], sizes = [8, 128], strides = [1, 1]} : vector<8x384xf32> to vector<8x128xf32>
    %150 = arith.mulf %148, %112 : vector<8x128xf32>
    %151 = arith.mulf %147, %146 : vector<8x128xf32>
    %152 = arith.addf %150, %151 : vector<8x128xf32>
    %153 = math.tanh %152 : vector<8x128xf32>
    %154 = arith.mulf %149, %153 : vector<8x128xf32>
    %155 = arith.truncf %154 : vector<8x128xf32> to vector<8x128xbf16>
    %156 = tpu.concatenate %155, %135 in 1 : vector<8x128xbf16>, vector<8x128xbf16> -> vector<8x256xbf16>
    %cst_33 = arith.constant dense<0.000000e+00> : vector<8x512xf32>
    %157 = tpu.matmul %156, %10, %cst_33 {dimension_numbers = #tpu.dot_dimension_numbers<[1], [0], [0], [1], [0, 0, 1, 1], [], []>} : vector<8x256xbf16>, vector<256x512xbf16>, vector<8x512xf32> -> vector<8x512xf32>
    %158 = arith.addf %157, %13 : vector<8x512xf32>
    %159 = vector.extract_strided_slice %158 {offsets = [0, 0], sizes = [8, 384], strides = [1, 1]} : vector<8x512xf32> to vector<8x384xf32>
    %160 = arith.negf %159 : vector<8x384xf32>
    %161 = math.exp %160 : vector<8x384xf32>
    %cst_34 = arith.constant 1.000000e+00 : f32
    %162 = vector.broadcast %cst_34 : f32 to vector<8x384xf32>
    %163 = arith.addf %162, %161 : vector<8x384xf32>
    %164 = arith.divf %162, %163 : vector<8x384xf32>
    %165 = vector.extract_strided_slice %158 {offsets = [0, 384], sizes = [8, 128], strides = [1, 1]} : vector<8x512xf32> to vector<8x128xf32>
    %166 = math.tanh %165 : vector<8x128xf32>
    %167 = vector.extract_strided_slice %164 {offsets = [0, 0], sizes = [8, 128], strides = [1, 1]} : vector<8x384xf32> to vector<8x128xf32>
    %168 = vector.extract_strided_slice %164 {offsets = [0, 128], sizes = [8, 128], strides = [1, 1]} : vector<8x384xf32> to vector<8x128xf32>
    %169 = vector.extract_strided_slice %164 {offsets = [0, 256], sizes = [8, 128], strides = [1, 1]} : vector<8x384xf32> to vector<8x128xf32>
    %170 = arith.mulf %168, %132 : vector<8x128xf32>
    %171 = arith.mulf %167, %166 : vector<8x128xf32>
    %172 = arith.addf %170, %171 : vector<8x128xf32>
    %173 = math.tanh %172 : vector<8x128xf32>
    %174 = arith.mulf %169, %173 : vector<8x128xf32>
    %175 = arith.truncf %174 : vector<8x128xf32> to vector<8x128xbf16>
    %c32 = arith.constant 32 : index
    %c0_35 = arith.constant 0 : index
    %176 = vector.load %arg9[%c32, %c0_35] : memref<64x512xf32, #tpu.memory_space<vmem>>, vector<8x512xf32>
    %cst_36 = arith.constant dense<0.000000e+00> : vector<8x512xf32>
    %177 = tpu.matmul %155, %9, %cst_36 {dimension_numbers = #tpu.dot_dimension_numbers<[1], [0], [0], [1], [0, 0, 1, 1], [], []>} : vector<8x128xbf16>, vector<128x512xbf16>, vector<8x512xf32> -> vector<8x512xf32>
    %178 = arith.addf %176, %177 : vector<8x512xf32>
    %179 = vector.extract_strided_slice %178 {offsets = [0, 0], sizes = [8, 384], strides = [1, 1]} : vector<8x512xf32> to vector<8x384xf32>
    %180 = arith.negf %179 : vector<8x384xf32>
    %181 = math.exp %180 : vector<8x384xf32>
    %cst_37 = arith.constant 1.000000e+00 : f32
    %182 = vector.broadcast %cst_37 : f32 to vector<8x384xf32>
    %183 = arith.addf %182, %181 : vector<8x384xf32>
    %184 = arith.divf %182, %183 : vector<8x384xf32>
    %185 = vector.extract_strided_slice %178 {offsets = [0, 384], sizes = [8, 128], strides = [1, 1]} : vector<8x512xf32> to vector<8x128xf32>
    %186 = math.tanh %185 : vector<8x128xf32>
    %187 = vector.extract_strided_slice %184 {offsets = [0, 0], sizes = [8, 128], strides = [1, 1]} : vector<8x384xf32> to vector<8x128xf32>
    %188 = vector.extract_strided_slice %184 {offsets = [0, 128], sizes = [8, 128], strides = [1, 1]} : vector<8x384xf32> to vector<8x128xf32>
    %189 = vector.extract_strided_slice %184 {offsets = [0, 256], sizes = [8, 128], strides = [1, 1]} : vector<8x384xf32> to vector<8x128xf32>
    %190 = arith.mulf %188, %152 : vector<8x128xf32>
    %191 = arith.mulf %187, %186 : vector<8x128xf32>
    %192 = arith.addf %190, %191 : vector<8x128xf32>
    %193 = math.tanh %192 : vector<8x128xf32>
    %194 = arith.mulf %189, %193 : vector<8x128xf32>
    %195 = arith.truncf %194 : vector<8x128xf32> to vector<8x128xbf16>
    %196 = tpu.concatenate %195, %175 in 1 : vector<8x128xbf16>, vector<8x128xbf16> -> vector<8x256xbf16>
    %cst_38 = arith.constant dense<0.000000e+00> : vector<8x512xf32>
    %197 = tpu.matmul %196, %10, %cst_38 {dimension_numbers = #tpu.dot_dimension_numbers<[1], [0], [0], [1], [0, 0, 1, 1], [], []>} : vector<8x256xbf16>, vector<256x512xbf16>, vector<8x512xf32> -> vector<8x512xf32>
    %198 = arith.addf %197, %13 : vector<8x512xf32>
    %199 = vector.extract_strided_slice %198 {offsets = [0, 0], sizes = [8, 384], strides = [1, 1]} : vector<8x512xf32> to vector<8x384xf32>
    %200 = arith.negf %199 : vector<8x384xf32>
    %201 = math.exp %200 : vector<8x384xf32>
    %cst_39 = arith.constant 1.000000e+00 : f32
    %202 = vector.broadcast %cst_39 : f32 to vector<8x384xf32>
    %203 = arith.addf %202, %201 : vector<8x384xf32>
    %204 = arith.divf %202, %203 : vector<8x384xf32>
    %205 = vector.extract_strided_slice %198 {offsets = [0, 384], sizes = [8, 128], strides = [1, 1]} : vector<8x512xf32> to vector<8x128xf32>
    %206 = math.tanh %205 : vector<8x128xf32>
    %207 = vector.extract_strided_slice %204 {offsets = [0, 0], sizes = [8, 128], strides = [1, 1]} : vector<8x384xf32> to vector<8x128xf32>
    %208 = vector.extract_strided_slice %204 {offsets = [0, 128], sizes = [8, 128], strides = [1, 1]} : vector<8x384xf32> to vector<8x128xf32>
    %209 = vector.extract_strided_slice %204 {offsets = [0, 256], sizes = [8, 128], strides = [1, 1]} : vector<8x384xf32> to vector<8x128xf32>
    %210 = arith.mulf %208, %172 : vector<8x128xf32>
    %211 = arith.mulf %207, %206 : vector<8x128xf32>
    %212 = arith.addf %210, %211 : vector<8x128xf32>
    %213 = math.tanh %212 : vector<8x128xf32>
    %214 = arith.mulf %209, %213 : vector<8x128xf32>
    %215 = arith.truncf %214 : vector<8x128xf32> to vector<8x128xbf16>
    %c40 = arith.constant 40 : index
    %c0_40 = arith.constant 0 : index
    %216 = vector.load %arg9[%c40, %c0_40] : memref<64x512xf32, #tpu.memory_space<vmem>>, vector<8x512xf32>
    %cst_41 = arith.constant dense<0.000000e+00> : vector<8x512xf32>
    %217 = tpu.matmul %195, %9, %cst_41 {dimension_numbers = #tpu.dot_dimension_numbers<[1], [0], [0], [1], [0, 0, 1, 1], [], []>} : vector<8x128xbf16>, vector<128x512xbf16>, vector<8x512xf32> -> vector<8x512xf32>
    %218 = arith.addf %216, %217 : vector<8x512xf32>
    %219 = vector.extract_strided_slice %218 {offsets = [0, 0], sizes = [8, 384], strides = [1, 1]} : vector<8x512xf32> to vector<8x384xf32>
    %220 = arith.negf %219 : vector<8x384xf32>
    %221 = math.exp %220 : vector<8x384xf32>
    %cst_42 = arith.constant 1.000000e+00 : f32
    %222 = vector.broadcast %cst_42 : f32 to vector<8x384xf32>
    %223 = arith.addf %222, %221 : vector<8x384xf32>
    %224 = arith.divf %222, %223 : vector<8x384xf32>
    %225 = vector.extract_strided_slice %218 {offsets = [0, 384], sizes = [8, 128], strides = [1, 1]} : vector<8x512xf32> to vector<8x128xf32>
    %226 = math.tanh %225 : vector<8x128xf32>
    %227 = vector.extract_strided_slice %224 {offsets = [0, 0], sizes = [8, 128], strides = [1, 1]} : vector<8x384xf32> to vector<8x128xf32>
    %228 = vector.extract_strided_slice %224 {offsets = [0, 128], sizes = [8, 128], strides = [1, 1]} : vector<8x384xf32> to vector<8x128xf32>
    %229 = vector.extract_strided_slice %224 {offsets = [0, 256], sizes = [8, 128], strides = [1, 1]} : vector<8x384xf32> to vector<8x128xf32>
    %230 = arith.mulf %228, %192 : vector<8x128xf32>
    %231 = arith.mulf %227, %226 : vector<8x128xf32>
    %232 = arith.addf %230, %231 : vector<8x128xf32>
    %233 = math.tanh %232 : vector<8x128xf32>
    %234 = arith.mulf %229, %233 : vector<8x128xf32>
    %235 = arith.truncf %234 : vector<8x128xf32> to vector<8x128xbf16>
    %236 = tpu.concatenate %235, %215 in 1 : vector<8x128xbf16>, vector<8x128xbf16> -> vector<8x256xbf16>
    %cst_43 = arith.constant dense<0.000000e+00> : vector<8x512xf32>
    %237 = tpu.matmul %236, %10, %cst_43 {dimension_numbers = #tpu.dot_dimension_numbers<[1], [0], [0], [1], [0, 0, 1, 1], [], []>} : vector<8x256xbf16>, vector<256x512xbf16>, vector<8x512xf32> -> vector<8x512xf32>
    %238 = arith.addf %237, %13 : vector<8x512xf32>
    %239 = vector.extract_strided_slice %238 {offsets = [0, 0], sizes = [8, 384], strides = [1, 1]} : vector<8x512xf32> to vector<8x384xf32>
    %240 = arith.negf %239 : vector<8x384xf32>
    %241 = math.exp %240 : vector<8x384xf32>
    %cst_44 = arith.constant 1.000000e+00 : f32
    %242 = vector.broadcast %cst_44 : f32 to vector<8x384xf32>
    %243 = arith.addf %242, %241 : vector<8x384xf32>
    %244 = arith.divf %242, %243 : vector<8x384xf32>
    %245 = vector.extract_strided_slice %238 {offsets = [0, 384], sizes = [8, 128], strides = [1, 1]} : vector<8x512xf32> to vector<8x128xf32>
    %246 = math.tanh %245 : vector<8x128xf32>
    %247 = vector.extract_strided_slice %244 {offsets = [0, 0], sizes = [8, 128], strides = [1, 1]} : vector<8x384xf32> to vector<8x128xf32>
    %248 = vector.extract_strided_slice %244 {offsets = [0, 128], sizes = [8, 128], strides = [1, 1]} : vector<8x384xf32> to vector<8x128xf32>
    %249 = vector.extract_strided_slice %244 {offsets = [0, 256], sizes = [8, 128], strides = [1, 1]} : vector<8x384xf32> to vector<8x128xf32>
    %250 = arith.mulf %248, %212 : vector<8x128xf32>
    %251 = arith.mulf %247, %246 : vector<8x128xf32>
    %252 = arith.addf %250, %251 : vector<8x128xf32>
    %253 = math.tanh %252 : vector<8x128xf32>
    %254 = arith.mulf %249, %253 : vector<8x128xf32>
    %255 = arith.truncf %254 : vector<8x128xf32> to vector<8x128xbf16>
    %c48 = arith.constant 48 : index
    %c0_45 = arith.constant 0 : index
    %256 = vector.load %arg9[%c48, %c0_45] : memref<64x512xf32, #tpu.memory_space<vmem>>, vector<8x512xf32>
    %cst_46 = arith.constant dense<0.000000e+00> : vector<8x512xf32>
    %257 = tpu.matmul %235, %9, %cst_46 {dimension_numbers = #tpu.dot_dimension_numbers<[1], [0], [0], [1], [0, 0, 1, 1], [], []>} : vector<8x128xbf16>, vector<128x512xbf16>, vector<8x512xf32> -> vector<8x512xf32>
    %258 = arith.addf %256, %257 : vector<8x512xf32>
    %259 = vector.extract_strided_slice %258 {offsets = [0, 0], sizes = [8, 384], strides = [1, 1]} : vector<8x512xf32> to vector<8x384xf32>
    %260 = arith.negf %259 : vector<8x384xf32>
    %261 = math.exp %260 : vector<8x384xf32>
    %cst_47 = arith.constant 1.000000e+00 : f32
    %262 = vector.broadcast %cst_47 : f32 to vector<8x384xf32>
    %263 = arith.addf %262, %261 : vector<8x384xf32>
    %264 = arith.divf %262, %263 : vector<8x384xf32>
    %265 = vector.extract_strided_slice %258 {offsets = [0, 384], sizes = [8, 128], strides = [1, 1]} : vector<8x512xf32> to vector<8x128xf32>
    %266 = math.tanh %265 : vector<8x128xf32>
    %267 = vector.extract_strided_slice %264 {offsets = [0, 0], sizes = [8, 128], strides = [1, 1]} : vector<8x384xf32> to vector<8x128xf32>
    %268 = vector.extract_strided_slice %264 {offsets = [0, 128], sizes = [8, 128], strides = [1, 1]} : vector<8x384xf32> to vector<8x128xf32>
    %269 = vector.extract_strided_slice %264 {offsets = [0, 256], sizes = [8, 128], strides = [1, 1]} : vector<8x384xf32> to vector<8x128xf32>
    %270 = arith.mulf %268, %232 : vector<8x128xf32>
    %271 = arith.mulf %267, %266 : vector<8x128xf32>
    %272 = arith.addf %270, %271 : vector<8x128xf32>
    %273 = math.tanh %272 : vector<8x128xf32>
    %274 = arith.mulf %269, %273 : vector<8x128xf32>
    %275 = arith.truncf %274 : vector<8x128xf32> to vector<8x128xbf16>
    %276 = tpu.concatenate %275, %255 in 1 : vector<8x128xbf16>, vector<8x128xbf16> -> vector<8x256xbf16>
    %cst_48 = arith.constant dense<0.000000e+00> : vector<8x512xf32>
    %277 = tpu.matmul %276, %10, %cst_48 {dimension_numbers = #tpu.dot_dimension_numbers<[1], [0], [0], [1], [0, 0, 1, 1], [], []>} : vector<8x256xbf16>, vector<256x512xbf16>, vector<8x512xf32> -> vector<8x512xf32>
    %278 = arith.addf %277, %13 : vector<8x512xf32>
    %279 = vector.extract_strided_slice %278 {offsets = [0, 0], sizes = [8, 384], strides = [1, 1]} : vector<8x512xf32> to vector<8x384xf32>
    %280 = arith.negf %279 : vector<8x384xf32>
    %281 = math.exp %280 : vector<8x384xf32>
    %cst_49 = arith.constant 1.000000e+00 : f32
    %282 = vector.broadcast %cst_49 : f32 to vector<8x384xf32>
    %283 = arith.addf %282, %281 : vector<8x384xf32>
    %284 = arith.divf %282, %283 : vector<8x384xf32>
    %285 = vector.extract_strided_slice %278 {offsets = [0, 384], sizes = [8, 128], strides = [1, 1]} : vector<8x512xf32> to vector<8x128xf32>
    %286 = math.tanh %285 : vector<8x128xf32>
    %287 = vector.extract_strided_slice %284 {offsets = [0, 0], sizes = [8, 128], strides = [1, 1]} : vector<8x384xf32> to vector<8x128xf32>
    %288 = vector.extract_strided_slice %284 {offsets = [0, 128], sizes = [8, 128], strides = [1, 1]} : vector<8x384xf32> to vector<8x128xf32>
    %289 = vector.extract_strided_slice %284 {offsets = [0, 256], sizes = [8, 128], strides = [1, 1]} : vector<8x384xf32> to vector<8x128xf32>
    %290 = arith.mulf %288, %252 : vector<8x128xf32>
    %291 = arith.mulf %287, %286 : vector<8x128xf32>
    %292 = arith.addf %290, %291 : vector<8x128xf32>
    %293 = math.tanh %292 : vector<8x128xf32>
    %294 = arith.mulf %289, %293 : vector<8x128xf32>
    %295 = arith.truncf %294 : vector<8x128xf32> to vector<8x128xbf16>
    %c56 = arith.constant 56 : index
    %c0_50 = arith.constant 0 : index
    %296 = vector.load %arg9[%c56, %c0_50] : memref<64x512xf32, #tpu.memory_space<vmem>>, vector<8x512xf32>
    %cst_51 = arith.constant dense<0.000000e+00> : vector<8x512xf32>
    %297 = tpu.matmul %275, %9, %cst_51 {dimension_numbers = #tpu.dot_dimension_numbers<[1], [0], [0], [1], [0, 0, 1, 1], [], []>} : vector<8x128xbf16>, vector<128x512xbf16>, vector<8x512xf32> -> vector<8x512xf32>
    %298 = arith.addf %296, %297 : vector<8x512xf32>
    %299 = vector.extract_strided_slice %298 {offsets = [0, 0], sizes = [8, 384], strides = [1, 1]} : vector<8x512xf32> to vector<8x384xf32>
    %300 = arith.negf %299 : vector<8x384xf32>
    %301 = math.exp %300 : vector<8x384xf32>
    %cst_52 = arith.constant 1.000000e+00 : f32
    %302 = vector.broadcast %cst_52 : f32 to vector<8x384xf32>
    %303 = arith.addf %302, %301 : vector<8x384xf32>
    %304 = arith.divf %302, %303 : vector<8x384xf32>
    %305 = vector.extract_strided_slice %298 {offsets = [0, 384], sizes = [8, 128], strides = [1, 1]} : vector<8x512xf32> to vector<8x128xf32>
    %306 = math.tanh %305 : vector<8x128xf32>
    %307 = vector.extract_strided_slice %304 {offsets = [0, 0], sizes = [8, 128], strides = [1, 1]} : vector<8x384xf32> to vector<8x128xf32>
    %308 = vector.extract_strided_slice %304 {offsets = [0, 128], sizes = [8, 128], strides = [1, 1]} : vector<8x384xf32> to vector<8x128xf32>
    %309 = vector.extract_strided_slice %304 {offsets = [0, 256], sizes = [8, 128], strides = [1, 1]} : vector<8x384xf32> to vector<8x128xf32>
    %310 = arith.mulf %308, %272 : vector<8x128xf32>
    %311 = arith.mulf %307, %306 : vector<8x128xf32>
    %312 = arith.addf %310, %311 : vector<8x128xf32>
    %313 = math.tanh %312 : vector<8x128xf32>
    %314 = arith.mulf %309, %313 : vector<8x128xf32>
    %315 = arith.truncf %314 : vector<8x128xf32> to vector<8x128xbf16>
    %316 = tpu.concatenate %315, %295 in 1 : vector<8x128xbf16>, vector<8x128xbf16> -> vector<8x256xbf16>
    %cst_53 = arith.constant dense<0.000000e+00> : vector<8x512xf32>
    %317 = tpu.matmul %316, %10, %cst_53 {dimension_numbers = #tpu.dot_dimension_numbers<[1], [0], [0], [1], [0, 0, 1, 1], [], []>} : vector<8x256xbf16>, vector<256x512xbf16>, vector<8x512xf32> -> vector<8x512xf32>
    %318 = arith.addf %317, %13 : vector<8x512xf32>
    %319 = vector.extract_strided_slice %318 {offsets = [0, 0], sizes = [8, 384], strides = [1, 1]} : vector<8x512xf32> to vector<8x384xf32>
    %320 = arith.negf %319 : vector<8x384xf32>
    %321 = math.exp %320 : vector<8x384xf32>
    %cst_54 = arith.constant 1.000000e+00 : f32
    %322 = vector.broadcast %cst_54 : f32 to vector<8x384xf32>
    %323 = arith.addf %322, %321 : vector<8x384xf32>
    %324 = arith.divf %322, %323 : vector<8x384xf32>
    %325 = vector.extract_strided_slice %318 {offsets = [0, 384], sizes = [8, 128], strides = [1, 1]} : vector<8x512xf32> to vector<8x128xf32>
    %326 = math.tanh %325 : vector<8x128xf32>
    %327 = vector.extract_strided_slice %324 {offsets = [0, 0], sizes = [8, 128], strides = [1, 1]} : vector<8x384xf32> to vector<8x128xf32>
    %328 = vector.extract_strided_slice %324 {offsets = [0, 128], sizes = [8, 128], strides = [1, 1]} : vector<8x384xf32> to vector<8x128xf32>
    %329 = vector.extract_strided_slice %324 {offsets = [0, 256], sizes = [8, 128], strides = [1, 1]} : vector<8x384xf32> to vector<8x128xf32>
    %330 = arith.mulf %328, %292 : vector<8x128xf32>
    %331 = arith.mulf %327, %326 : vector<8x128xf32>
    %332 = arith.addf %330, %331 : vector<8x128xf32>
    %333 = math.tanh %332 : vector<8x128xf32>
    %334 = arith.mulf %329, %333 : vector<8x128xf32>
    %335 = arith.truncf %334 : vector<8x128xf32> to vector<8x128xbf16>
    %c0_55 = arith.constant 0 : index
    %c0_56 = arith.constant 0 : index
    %336 = vector.load %arg6[%c0_55, %c0_56] : memref<128x128xbf16, #tpu.memory_space<vmem>>, vector<128x128xbf16>
    %cst_57 = arith.constant dense<0.000000e+00> : vector<8x128xf32>
    %337 = tpu.matmul %335, %336, %cst_57 {dimension_numbers = #tpu.dot_dimension_numbers<[1], [0], [0], [1], [0, 0, 1, 1], [], []>} : vector<8x128xbf16>, vector<128x128xbf16>, vector<8x128xf32> -> vector<8x128xf32>
    %c0_58 = arith.constant 0 : index
    %c0_59 = arith.constant 0 : index
    %338 = vector.load %arg7[%c0_58, %c0_59] : memref<1x128xf32, #tpu.memory_space<vmem>>, vector<1x128xf32>
    %339 = vector.broadcast %338 : vector<1x128xf32> to vector<8x128xf32>
    %340 = arith.addf %337, %339 : vector<8x128xf32>
    %c0_60 = arith.constant 0 : index
    %c0_61 = arith.constant 0 : index
    %341 = vector.load %arg8[%c0_60, %c0_61] : memref<8x128xf32, #tpu.memory_space<vmem>>, vector<8x128xf32>
    tpu.vector_store %arg8[%c0_60, %c0_61], %340 {strides = array<i32>} : memref<8x128xf32, #tpu.memory_space<vmem>>, vector<8x128xf32>,
    return
  }
}

</mosaic_0001>

<llo_original>
// kernel: tpu_custom_call.1
$region0: #{tpu_custom_call.1}
  #allocation0 [shape = 'u32[]', space=smem, size = 0x4, offset = 0x4, fixed_abs, tag = 'smem constant byte address 0x4 - core index']
  #allocation1 [shape = 'u32[144,128]{1,0:T(1,128)}', space=vmem, size = 0x12000, scoped, tag = 'internal scratch']
  #allocation2 [shape = 'f32[64,512]{1,0:T(8,128)}', space=vmem, size = 0x20000, scoped, tag = 'scratch operand']
  %s0 = inlined_call_operand.vmem [shape: f32[64,1], index: 0, kind: input, shape index: {}]
  %s1 = inlined_call_operand.vmem [shape: f32[1,512], index: 1, kind: input, shape index: {}]
  %s2 = inlined_call_operand.vmem [shape: f32[1,512], index: 2, kind: input, shape index: {}]
  %s3 = inlined_call_operand.hbm [shape: bf16[128,512], index: 3, kind: input, shape index: {}]
  %s4 = inlined_call_operand.hbm [shape: bf16[256,512], index: 4, kind: input, shape index: {}]
  %s5 = inlined_call_operand.vmem [shape: f32[1,512], index: 5, kind: input, shape index: {}]
  %s6 = inlined_call_operand.vmem [shape: bf16[128,128], index: 6, kind: input, shape index: {}]
  %s7 = inlined_call_operand.vmem [shape: f32[1,128], index: 7, kind: input, shape index: {}]
  %s8 = inlined_call_operand.hbm [shape: f32[8,128], index: 8, kind: output, shape index: {}]
  %s9 = sld [smem:[#allocation0]]
  $region50: #{tpu_custom_call.1} parent=0
    _
  %s11 = ssub.s32 1, %s9
  %s12 = scalar_select 0, %s11, %s9
  $region1: #{tpu_custom_call.1} parent=0
    #allocation3 [shape = 'u8[131072]{0}', space=vmem, size = 0x20000, scoped, tag = 'input window, operand 3, single buffered']
    #allocation4 [shape = 's32[1]{0}', space=sflag, size = 0x4, scoped, tag = 'scoped memory for tpu_custom_call.1']
    #allocation5 [shape = 's32[1]{0}', space=sflag, size = 0x4, scoped, tag = 'scoped memory for tpu_custom_call.1']
    #allocation6 [shape = 'u8[262144]{0}', space=vmem, size = 0x40000, scoped, tag = 'input window, operand 4, single buffered']
    #allocation7 [shape = 's32[1]{0}', space=sflag, size = 0x4, scoped, tag = 'scoped memory for tpu_custom_call.1']
    #allocation8 [shape = 'u8[4096]{0}', space=vmem, size = 0x1000, scoped, tag = 'output window, operand 0, single buffered']
    %13 = vsyncpa [#allocation4], 0
    %14 = vsyncpa [#allocation7], 0
    %15 = vsyncpa [#allocation5], 0
    // Predicated region
    $region2: #{tpu_custom_call.1} parent=1 // pred_check
      _
    $region3: #{tpu_custom_call.1} parent=1 // pred_check_branch
      %17 = sbr.rel (0) target = $region5
    $region4: #{tpu_custom_call.1} parent=1 // pred_region
      _
    $region5: #{tpu_custom_call.1} parent=1 // pred_fallthru
      _
    // Predicated region
    $region6: #{tpu_custom_call.1} parent=1 // pred_check
      _
    $region7: #{tpu_custom_call.1} parent=1 // pred_check_branch
      %19 = sbr.rel (0) target = $region9
    $region8: #{tpu_custom_call.1} parent=1 // pred_region
      _
    $region9: #{tpu_custom_call.1} parent=1 // pred_fallthru
      _
    // Predicated region
    $region10: #{tpu_custom_call.1} parent=1 // pred_check
      _
    $region11: #{tpu_custom_call.1} parent=1 // pred_check_branch
      %21 = sbr.rel (0) target = $region13
    $region12: #{tpu_custom_call.1} parent=1 // pred_region
      _
    $region13: #{tpu_custom_call.1} parent=1 // pred_fallthru
      _
    // Predicated region
    $region14: #{tpu_custom_call.1} parent=1 // pred_check
      _
    $region15: #{tpu_custom_call.1} parent=1 // pred_check_branch
      %23 = sbr.rel (0) target = $region17
    $region16: #{tpu_custom_call.1} parent=1 // pred_region
      %s25 = ssub.s32 4096, 4096
      %26 = vsyncadd [#allocation4], %s25
      %s27 = sshll.u32 [#allocation3], 4
      %s28 = int_to_ptr.vmem [resolvable:$true] %s27
      %33 = dma.hbm_to_vmem [thread:$0]  %s3, 4096, %s28, [#allocation4], 256, 256, 16
    $region17: #{tpu_custom_call.1} parent=1 // pred_fallthru
      _
    // Predicated region
    $region18: #{tpu_custom_call.1} parent=1 // pred_check
      _
    $region19: #{tpu_custom_call.1} parent=1 // pred_check_branch
      %35 = sbr.rel (0) target = $region21
    $region20: #{tpu_custom_call.1} parent=1 // pred_region
      %s37 = ssub.s32 8192, 8192
      %38 = vsyncadd [#allocation7], %s37
      %s39 = sshll.u32 [#allocation6], 4
      %s40 = int_to_ptr.vmem [resolvable:$true] %s39
      %45 = dma.hbm_to_vmem [thread:$0]  %s4, 8192, %s40, [#allocation7], 256, 256, 16
    $region21: #{tpu_custom_call.1} parent=1 // pred_fallthru
      _
    // Predicated region
    $region22: #{tpu_custom_call.1} parent=1 // pred_check
      _
    $region23: #{tpu_custom_call.1} parent=1 // pred_check_branch
      %47 = sbr.rel (0) target = $region25
    $region24: #{tpu_custom_call.1} parent=1 // pred_region
      _
    $region25: #{tpu_custom_call.1} parent=1 // pred_fallthru
      _
    // Predicated region
    $region26: #{tpu_custom_call.1} parent=1 // pred_check
      _
    $region27: #{tpu_custom_call.1} parent=1 // pred_check_branch
      %49 = sbr.rel (0) target = $region29
    $region28: #{tpu_custom_call.1} parent=1 // pred_region
      _
    $region29: #{tpu_custom_call.1} parent=1 // pred_fallthru
      _
    // Predicated region
    $region30: #{tpu_custom_call.1} parent=1 // pred_check
      _
    $region31: #{tpu_custom_call.1} parent=1 // pred_check_branch
      %51 = sbr.rel (0) target = $region33
    $region32: #{tpu_custom_call.1} parent=1 // pred_region
      _
    $region33: #{tpu_custom_call.1} parent=1 // pred_fallthru
      _
    // Predicated region
    $region34: #{tpu_custom_call.1} parent=1 // pred_check
      _
    $region35: #{tpu_custom_call.1} parent=1 // pred_check_branch
      %53 = sbr.rel (0) target = $region37
    $region36: #{tpu_custom_call.1} parent=1 // pred_region
      %54 = dma.done [#allocation4], 4096
    $region37: #{tpu_custom_call.1} parent=1 // pred_fallthru
      _
    // Predicated region
    $region38: #{tpu_custom_call.1} parent=1 // pred_check
      _
    $region39: #{tpu_custom_call.1} parent=1 // pred_check_branch
      %56 = sbr.rel (0) target = $region41
    $region40: #{tpu_custom_call.1} parent=1 // pred_region
      %57 = dma.done [#allocation7], 8192
    $region41: #{tpu_custom_call.1} parent=1 // pred_fallthru
      _
    %v59 = vld [vmem:[%s0] sm:$0xff]
    %v60 = vld [vmem:[%s0 + $0x8] sm:$0xff]
    %v61 = vld [vmem:[%s0 + $0x10] sm:$0xff]
    %v62 = vld [vmem:[%s0 + $0x18] sm:$0xff]
    %v63 = vld [vmem:[%s0 + $0x20] sm:$0xff]
    %v64 = vld [vmem:[%s0 + $0x28] sm:$0xff]
    %v65 = vld [vmem:[%s0 + $0x30] sm:$0xff]
    %v66 = vld [vmem:[%s0 + $0x38] sm:$0xff]
    %v67 = vld [vmem:[%s1] sm:$0xf]
    %69 = vset.pattern.permute.xlu0 0
    %70 = vperm.xlu0 %69, %v59
    %v71 = vpop.permute.xlu0 %70
    %74 = vset.pattern.permute.xlu0 0
    %75 = vperm.xlu0 %74, %v60
    %v76 = vpop.permute.xlu0 %75
    %79 = vset.pattern.permute.xlu0 0
    %80 = vperm.xlu0 %79, %v61
    %v81 = vpop.permute.xlu0 %80
    %84 = vset.pattern.permute.xlu0 0
    %85 = vperm.xlu0 %84, %v62
    %v86 = vpop.permute.xlu0 %85
    %89 = vset.pattern.permute.xlu0 0
    %90 = vperm.xlu0 %89, %v63
    %v91 = vpop.permute.xlu0 %90
    %94 = vset.pattern.permute.xlu0 0
    %95 = vperm.xlu0 %94, %v64
    %v96 = vpop.permute.xlu0 %95
    %99 = vset.pattern.permute.xlu0 0
    %100 = vperm.xlu0 %99, %v65
    %v101 = vpop.permute.xlu0 %100
    %104 = vset.pattern.permute.xlu0 0
    %105 = vperm.xlu0 %104, %v66
    %v106 = vpop.permute.xlu0 %105
    %v109 = vlaneseq
    %v110 = vshrl.u32 %v109, 7
    %v111 = vsub.s32 0, %v110
    %v112 = vrot.slane %v67, %v111
    %v113 = vlaneseq
    %v114 = vshrl.u32 %v113, 7
    %v115 = vsub.s32 1, %v114
    %v116 = vrot.slane %v67, %v115
    %v117 = vlaneseq
    %v118 = vshrl.u32 %v117, 7
    %v119 = vsub.s32 2, %v118
    %v120 = vrot.slane %v67, %v119
    %v121 = vlaneseq
    %v122 = vshrl.u32 %v121, 7
    %v123 = vsub.s32 3, %v122
    %v124 = vrot.slane %v67, %v123
    %v129 = vmul.f32 %v71, %v112
    %v130 = vmul.f32 %v71, %v116
    %v131 = vmul.f32 %v71, %v120
    %v132 = vmul.f32 %v71, %v124
    %v133 = vmul.f32 %v76, %v112
    %v134 = vmul.f32 %v76, %v116
    %v135 = vmul.f32 %v76, %v120
    %v136 = vmul.f32 %v76, %v124
    %v137 = vmul.f32 %v81, %v112
    %v138 = vmul.f32 %v81, %v116
    %v139 = vmul.f32 %v81, %v120
    %v140 = vmul.f32 %v81, %v124
    %v141 = vmul.f32 %v86, %v112
    %v142 = vmul.f32 %v86, %v116
    %v143 = vmul.f32 %v86, %v120
    %v144 = vmul.f32 %v86, %v124
    %v145 = vmul.f32 %v91, %v112
    %v146 = vmul.f32 %v91, %v116
    %v147 = vmul.f32 %v91, %v120
    %v148 = vmul.f32 %v91, %v124
    %v149 = vmul.f32 %v96, %v112
    %v150 = vmul.f32 %v96, %v116
    %v151 = vmul.f32 %v96, %v120
    %v152 = vmul.f32 %v96, %v124
    %v153 = vmul.f32 %v101, %v112
    %v154 = vmul.f32 %v101, %v116
    %v155 = vmul.f32 %v101, %v120
    %v156 = vmul.f32 %v101, %v124
    %v157 = vmul.f32 %v106, %v112
    %v158 = vmul.f32 %v106, %v116
    %v159 = vmul.f32 %v106, %v120
    %v160 = vmul.f32 %v106, %v124
    %v161 = vld [vmem:[%s2] sm:$0xf]
    %v163 = vlaneseq
    %v164 = vshrl.u32 %v163, 7
    %v165 = vsub.s32 0, %v164
    %v166 = vrot.slane %v161, %v165
    %v167 = vlaneseq
    %v168 = vshrl.u32 %v167, 7
    %v169 = vsub.s32 1, %v168
    %v170 = vrot.slane %v161, %v169
    %v171 = vlaneseq
    %v172 = vshrl.u32 %v171, 7
    %v173 = vsub.s32 2, %v172
    %v174 = vrot.slane %v161, %v173
    %v175 = vlaneseq
    %v176 = vshrl.u32 %v175, 7
    %v177 = vsub.s32 3, %v176
    %v178 = vrot.slane %v161, %v177
    %v183 = vadd.f32 %v129, %v166
    %v184 = vadd.f32 %v130, %v170
    %v185 = vadd.f32 %v131, %v174
    %v186 = vadd.f32 %v132, %v178
    %v187 = vadd.f32 %v133, %v166
    %v188 = vadd.f32 %v134, %v170
    %v189 = vadd.f32 %v135, %v174
    %v190 = vadd.f32 %v136, %v178
    %v191 = vadd.f32 %v137, %v166
    %v192 = vadd.f32 %v138, %v170
    %v193 = vadd.f32 %v139, %v174
    %v194 = vadd.f32 %v140, %v178
    %v195 = vadd.f32 %v141, %v166
    %v196 = vadd.f32 %v142, %v170
    %v197 = vadd.f32 %v143, %v174
    %v198 = vadd.f32 %v144, %v178
    %v199 = vadd.f32 %v145, %v166
    %v200 = vadd.f32 %v146, %v170
    %v201 = vadd.f32 %v147, %v174
    %v202 = vadd.f32 %v148, %v178
    %v203 = vadd.f32 %v149, %v166
    %v204 = vadd.f32 %v150, %v170
    %v205 = vadd.f32 %v151, %v174
    %v206 = vadd.f32 %v152, %v178
    %v207 = vadd.f32 %v153, %v166
    %v208 = vadd.f32 %v154, %v170
    %v209 = vadd.f32 %v155, %v174
    %v210 = vadd.f32 %v156, %v178
    %v211 = vadd.f32 %v157, %v166
    %v212 = vadd.f32 %v158, %v170
    %v213 = vadd.f32 %v159, %v174
    %v214 = vadd.f32 %v160, %v178
    %215 = vst [vmem:[#allocation2] sm:$0xff] %v183
    %216 = vst [vmem:[#allocation2 + $0x8] sm:$0xff] %v184
    %217 = vst [vmem:[#allocation2 + $0x10] sm:$0xff] %v185
    %218 = vst [vmem:[#allocation2 + $0x18] sm:$0xff] %v186
    %219 = vst [vmem:[#allocation2 + $0x20] sm:$0xff] %v187
    %220 = vst [vmem:[#allocation2 + $0x28] sm:$0xff] %v188
    %221 = vst [vmem:[#allocation2 + $0x30] sm:$0xff] %v189
    %222 = vst [vmem:[#allocation2 + $0x38] sm:$0xff] %v190
    %223 = vst [vmem:[#allocation2 + $0x40] sm:$0xff] %v191
    %224 = vst [vmem:[#allocation2 + $0x48] sm:$0xff] %v192
    %225 = vst [vmem:[#allocation2 + $0x50] sm:$0xff] %v193
    %226 = vst [vmem:[#allocation2 + $0x58] sm:$0xff] %v194
    %227 = vst [vmem:[#allocation2 + $0x60] sm:$0xff] %v195
    %228 = vst [vmem:[#allocation2 + $0x68] sm:$0xff] %v196
    %229 = vst [vmem:[#allocation2 + $0x70] sm:$0xff] %v197
    %230 = vst [vmem:[#allocation2 + $0x78] sm:$0xff] %v198
    %231 = vst [vmem:[#allocation2 + $0x80] sm:$0xff] %v199
    %232 = vst [vmem:[#allocation2 + $0x88] sm:$0xff] %v200
    %233 = vst [vmem:[#allocation2 + $0x90] sm:$0xff] %v201
    %234 = vst [vmem:[#allocation2 + $0x98] sm:$0xff] %v202
    %235 = vst [vmem:[#allocation2 + $0xa0] sm:$0xff] %v203
    %236 = vst [vmem:[#allocation2 + $0xa8] sm:$0xff] %v204
    %237 = vst [vmem:[#allocation2 + $0xb0] sm:$0xff] %v205
    %238 = vst [vmem:[#allocation2 + $0xb8] sm:$0xff] %v206
    %239 = vst [vmem:[#allocation2 + $0xc0] sm:$0xff] %v207
    %240 = vst [vmem:[#allocation2 + $0xc8] sm:$0xff] %v208
    %241 = vst [vmem:[#allocation2 + $0xd0] sm:$0xff] %v209
    %242 = vst [vmem:[#allocation2 + $0xd8] sm:$0xff] %v210
    %243 = vst [vmem:[#allocation2 + $0xe0] sm:$0xff] %v211
    %244 = vst [vmem:[#allocation2 + $0xe8] sm:$0xff] %v212
    %245 = vst [vmem:[#allocation2 + $0xf0] sm:$0xff] %v213
    %246 = vst [vmem:[#allocation2 + $0xf8] sm:$0xff] %v214
    %v247 = vld [vmem:[#allocation3] sm:$0xff]
    %v248 = vld [vmem:[#allocation3 + $0x8] sm:$0xff]
    %v249 = vld [vmem:[#allocation3 + $0x10] sm:$0xff]
    %v250 = vld [vmem:[#allocation3 + $0x18] sm:$0xff]
    %v251 = vld [vmem:[#allocation3 + $0x20] sm:$0xff]
    %v252 = vld [vmem:[#allocation3 + $0x28] sm:$0xff]
    %v253 = vld [vmem:[#allocation3 + $0x30] sm:$0xff]
    %v254 = vld [vmem:[#allocation3 + $0x38] sm:$0xff]
    %v255 = vld [vmem:[#allocation3 + $0x40] sm:$0xff]
    %v256 = vld [vmem:[#allocation3 + $0x48] sm:$0xff]
    %v257 = vld [vmem:[#allocation3 + $0x50] sm:$0xff]
    %v258 = vld [vmem:[#allocation3 + $0x58] sm:$0xff]
    %v259 = vld [vmem:[#allocation3 + $0x60] sm:$0xff]
    %v260 = vld [vmem:[#allocation3 + $0x68] sm:$0xff]
    %v261 = vld [vmem:[#allocation3 + $0x70] sm:$0xff]
    %v262 = vld [vmem:[#allocation3 + $0x78] sm:$0xff]
    %v263 = vld [vmem:[#allocation3 + $0x80] sm:$0xff]
    %v264 = vld [vmem:[#allocation3 + $0x88] sm:$0xff]
    %v265 = vld [vmem:[#allocation3 + $0x90] sm:$0xff]
    %v266 = vld [vmem:[#allocation3 + $0x98] sm:$0xff]
    %v267 = vld [vmem:[#allocation3 + $0xa0] sm:$0xff]
    %v268 = vld [vmem:[#allocation3 + $0xa8] sm:$0xff]
    %v269 = vld [vmem:[#allocation3 + $0xb0] sm:$0xff]
    %v270 = vld [vmem:[#allocation3 + $0xb8] sm:$0xff]
    %v271 = vld [vmem:[#allocation3 + $0xc0] sm:$0xff]
    %v272 = vld [vmem:[#allocation3 + $0xc8] sm:$0xff]
    %v273 = vld [vmem:[#allocation3 + $0xd0] sm:$0xff]
    %v274 = vld [vmem:[#allocation3 + $0xd8] sm:$0xff]
    %v275 = vld [vmem:[#allocation3 + $0xe0] sm:$0xff]
    %v276 = vld [vmem:[#allocation3 + $0xe8] sm:$0xff]
    %v277 = vld [vmem:[#allocation3 + $0xf0] sm:$0xff]
    %v278 = vld [vmem:[#allocation3 + $0xf8] sm:$0xff]
    %v279 = vld [vmem:[#allocation6] sm:$0xff]
    %v280 = vld [vmem:[#allocation6 + $0x8] sm:$0xff]
    %v281 = vld [vmem:[#allocation6 + $0x10] sm:$0xff]
    %v282 = vld [vmem:[#allocation6 + $0x18] sm:$0xff]
    %v283 = vld [vmem:[#allocation6 + $0x20] sm:$0xff]
    %v284 = vld [vmem:[#allocation6 + $0x28] sm:$0xff]
    %v285 = vld [vmem:[#allocation6 + $0x30] sm:$0xff]
    %v286 = vld [vmem:[#allocation6 + $0x38] sm:$0xff]
    %v287 = vld [vmem:[#allocation6 + $0x40] sm:$0xff]
    %v288 = vld [vmem:[#allocation6 + $0x48] sm:$0xff]
    %v289 = vld [vmem:[#allocation6 + $0x50] sm:$0xff]
    %v290 = vld [vmem:[#allocation6 + $0x58] sm:$0xff]
    %v291 = vld [vmem:[#allocation6 + $0x60] sm:$0xff]
    %v292 = vld [vmem:[#allocation6 + $0x68] sm:$0xff]
    %v293 = vld [vmem:[#allocation6 + $0x70] sm:$0xff]
    %v294 = vld [vmem:[#allocation6 + $0x78] sm:$0xff]
    %v295 = vld [vmem:[#allocation6 + $0x80] sm:$0xff]
    %v296 = vld [vmem:[#allocation6 + $0x88] sm:$0xff]
    %v297 = vld [vmem:[#allocation6 + $0x90] sm:$0xff]
    %v298 = vld [vmem:[#allocation6 + $0x98] sm:$0xff]
    %v299 = vld [vmem:[#allocation6 + $0xa0] sm:$0xff]
    %v300 = vld [vmem:[#allocation6 + $0xa8] sm:$0xff]
    %v301 = vld [vmem:[#allocation6 + $0xb0] sm:$0xff]
    %v302 = vld [vmem:[#allocation6 + $0xb8] sm:$0xff]
    %v303 = vld [vmem:[#allocation6 + $0xc0] sm:$0xff]
    %v304 = vld [vmem:[#allocation6 + $0xc8] sm:$0xff]
    %v305 = vld [vmem:[#allocation6 + $0xd0] sm:$0xff]
    %v306 = vld [vmem:[#allocation6 + $0xd8] sm:$0xff]
    %v307 = vld [vmem:[#allocation6 + $0xe0] sm:$0xff]
    %v308 = vld [vmem:[#allocation6 + $0xe8] sm:$0xff]
    %v309 = vld [vmem:[#allocation6 + $0xf0] sm:$0xff]
    %v310 = vld [vmem:[#allocation6 + $0xf8] sm:$0xff]
    %v311 = vld [vmem:[#allocation6 + $0x100] sm:$0xff]
    %v312 = vld [vmem:[#allocation6 + $0x108] sm:$0xff]
    %v313 = vld [vmem:[#allocation6 + $0x110] sm:$0xff]
    %v314 = vld [vmem:[#allocation6 + $0x118] sm:$0xff]
    %v315 = vld [vmem:[#allocation6 + $0x120] sm:$0xff]
    %v316 = vld [vmem:[#allocation6 + $0x128] sm:$0xff]
    %v317 = vld [vmem:[#allocation6 + $0x130] sm:$0xff]
    %v318 = vld [vmem:[#allocation6 + $0x138] sm:$0xff]
    %v319 = vld [vmem:[#allocation6 + $0x140] sm:$0xff]
    %v320 = vld [vmem:[#allocation6 + $0x148] sm:$0xff]
    %v321 = vld [vmem:[#allocation6 + $0x150] sm:$0xff]
    %v322 = vld [vmem:[#allocation6 + $0x158] sm:$0xff]
    %v323 = vld [vmem:[#allocation6 + $0x160] sm:$0xff]
    %v324 = vld [vmem:[#allocation6 + $0x168] sm:$0xff]
    %v325 = vld [vmem:[#allocation6 + $0x170] sm:$0xff]
    %v326 = vld [vmem:[#allocation6 + $0x178] sm:$0xff]
    %v327 = vld [vmem:[#allocation6 + $0x180] sm:$0xff]
    %v328 = vld [vmem:[#allocation6 + $0x188] sm:$0xff]
    %v329 = vld [vmem:[#allocation6 + $0x190] sm:$0xff]
    %v330 = vld [vmem:[#allocation6 + $0x198] sm:$0xff]
    %v331 = vld [vmem:[#allocation6 + $0x1a0] sm:$0xff]
    %v332 = vld [vmem:[#allocation6 + $0x1a8] sm:$0xff]
    %v333 = vld [vmem:[#allocation6 + $0x1b0] sm:$0xff]
    %v334 = vld [vmem:[#allocation6 + $0x1b8] sm:$0xff]
    %v335 = vld [vmem:[#allocation6 + $0x1c0] sm:$0xff]
    %v336 = vld [vmem:[#allocation6 + $0x1c8] sm:$0xff]
    %v337 = vld [vmem:[#allocation6 + $0x1d0] sm:$0xff]
    %v338 = vld [vmem:[#allocation6 + $0x1d8] sm:$0xff]
    %v339 = vld [vmem:[#allocation6 + $0x1e0] sm:$0xff]
    %v340 = vld [vmem:[#allocation6 + $0x1e8] sm:$0xff]
    %v341 = vld [vmem:[#allocation6 + $0x1f0] sm:$0xff]
    %v342 = vld [vmem:[#allocation6 + $0x1f8] sm:$0xff]
    %v343 = vld [vmem:[%s5] sm:$0xf]
    %v345 = vlaneseq
    %v346 = vshrl.u32 %v345, 7
    %v347 = vsub.s32 0, %v346
    %v348 = vrot.slane %v343, %v347
    %v349 = vlaneseq
    %v350 = vshrl.u32 %v349, 7
    %v351 = vsub.s32 1, %v350
    %v352 = vrot.slane %v343, %v351
    %v353 = vlaneseq
    %v354 = vshrl.u32 %v353, 7
    %v355 = vsub.s32 2, %v354
    %v356 = vrot.slane %v343, %v355
    %v357 = vlaneseq
    %v358 = vshrl.u32 %v357, 7
    %v359 = vsub.s32 3, %v358
    %v360 = vrot.slane %v343, %v359
    %v365 = vld [vmem:[#allocation2] sm:$0xff]
    %v366 = vld [vmem:[#allocation2 + $0x8] sm:$0xff]
    %v367 = vld [vmem:[#allocation2 + $0x10] sm:$0xff]
    %v368 = vld [vmem:[#allocation2 + $0x18] sm:$0xff]
    %v401 = vunpack.c.l.b16 %v247
    %v402 = vunpack.c.h.b16 %v247
    %v403 = vunpack.c.l.b16 %v248
    %v404 = vunpack.c.h.b16 %v248
    %v405 = vunpack.c.l.b16 %v249
    %v406 = vunpack.c.h.b16 %v249
    %v407 = vunpack.c.l.b16 %v250
    %v408 = vunpack.c.h.b16 %v250
    %v409 = vunpack.c.l.b16 %v251
    %v410 = vunpack.c.h.b16 %v251
    %v411 = vunpack.c.l.b16 %v252
    %v412 = vunpack.c.h.b16 %v252
    %v413 = vunpack.c.l.b16 %v253
    %v414 = vunpack.c.h.b16 %v253
    %v415 = vunpack.c.l.b16 %v254
    %v416 = vunpack.c.h.b16 %v254
    %v417 = vunpack.c.l.b16 %v255
    %v418 = vunpack.c.h.b16 %v255
    %v419 = vunpack.c.l.b16 %v256
    %v420 = vunpack.c.h.b16 %v256
    %v421 = vunpack.c.l.b16 %v257
    %v422 = vunpack.c.h.b16 %v257
    %v423 = vunpack.c.l.b16 %v258
    %v424 = vunpack.c.h.b16 %v258
    %v425 = vunpack.c.l.b16 %v259
    %v426 = vunpack.c.h.b16 %v259
    %v427 = vunpack.c.l.b16 %v260
    %v428 = vunpack.c.h.b16 %v260
    %v429 = vunpack.c.l.b16 %v261
    %v430 = vunpack.c.h.b16 %v261
    %v431 = vunpack.c.l.b16 %v262
    %v432 = vunpack.c.h.b16 %v262
    %v433 = vunpack.c.l.b16 %v263
    %v434 = vunpack.c.h.b16 %v263
    %v435 = vunpack.c.l.b16 %v264
    %v436 = vunpack.c.h.b16 %v264
    %v437 = vunpack.c.l.b16 %v265
    %v438 = vunpack.c.h.b16 %v265
    %v439 = vunpack.c.l.b16 %v266
    %v440 = vunpack.c.h.b16 %v266
    %v441 = vunpack.c.l.b16 %v267
    %v442 = vunpack.c.h.b16 %v267
    %v443 = vunpack.c.l.b16 %v268
    %v444 = vunpack.c.h.b16 %v268
    %v445 = vunpack.c.l.b16 %v269
    %v446 = vunpack.c.h.b16 %v269
    %v447 = vunpack.c.l.b16 %v270
    %v448 = vunpack.c.h.b16 %v270
    %v449 = vunpack.c.l.b16 %v271
    %v450 = vunpack.c.h.b16 %v271
    %v451 = vunpack.c.l.b16 %v272
    %v452 = vunpack.c.h.b16 %v272
    %v453 = vunpack.c.l.b16 %v273
    %v454 = vunpack.c.h.b16 %v273
    %v455 = vunpack.c.l.b16 %v274
    %v456 = vunpack.c.h.b16 %v274
    %v457 = vunpack.c.l.b16 %v275
    %v458 = vunpack.c.h.b16 %v275
    %v459 = vunpack.c.l.b16 %v276
    %v460 = vunpack.c.h.b16 %v276
    %v461 = vunpack.c.l.b16 %v277
    %v462 = vunpack.c.h.b16 %v277
    %v463 = vunpack.c.l.b16 %v278
    %v464 = vunpack.c.h.b16 %v278
    %v465 = vpack.c.b16 %v405, %v401
    %v466 = vpack.c.b16 %v406, %v402
    %v467 = vpack.c.b16 %v407, %v403
    %v468 = vpack.c.b16 %v408, %v404
    %v469 = vpack.c.b16 %v413, %v409
    %v470 = vpack.c.b16 %v414, %v410
    %v471 = vpack.c.b16 %v415, %v411
    %v472 = vpack.c.b16 %v416, %v412
    %v473 = vpack.c.b16 %v421, %v417
    %v474 = vpack.c.b16 %v422, %v418
    %v475 = vpack.c.b16 %v423, %v419
    %v476 = vpack.c.b16 %v424, %v420
    %v477 = vpack.c.b16 %v429, %v425
    %v478 = vpack.c.b16 %v430, %v426
    %v479 = vpack.c.b16 %v431, %v427
    %v480 = vpack.c.b16 %v432, %v428
    %v481 = vpack.c.b16 %v437, %v433
    %v482 = vpack.c.b16 %v438, %v434
    %v483 = vpack.c.b16 %v439, %v435
    %v484 = vpack.c.b16 %v440, %v436
    %v485 = vpack.c.b16 %v445, %v441
    %v486 = vpack.c.b16 %v446, %v442
    %v487 = vpack.c.b16 %v447, %v443
    %v488 = vpack.c.b16 %v448, %v444
    %v489 = vpack.c.b16 %v453, %v449
    %v490 = vpack.c.b16 %v454, %v450
    %v491 = vpack.c.b16 %v455, %v451
    %v492 = vpack.c.b16 %v456, %v452
    %v493 = vpack.c.b16 %v461, %v457
    %v494 = vpack.c.b16 %v462, %v458
    %v495 = vpack.c.b16 %v463, %v459
    %v496 = vpack.c.b16 %v464, %v460
    %529 = vmatprep.subr.bf16.mxu0 %v466
    %530 = vmatpush1.bf16.msra.mxu0 %v465
    %531 = vmatprep.subr.bf16.mxu0 %v470
    %532 = vmatpush1.bf16.msra.mxu0 %v469
    %533 = vmatprep.subr.bf16.mxu0 %v474
    %534 = vmatpush1.bf16.msra.mxu0 %v473
    %535 = vmatprep.subr.bf16.mxu0 %v478
    %536 = vmatpush1.bf16.msra.mxu0 %v477
    %537 = vmatprep.subr.bf16.mxu0 %v482
    %538 = vmatpush1.bf16.msra.mxu0 %v481
    %539 = vmatprep.subr.bf16.mxu0 %v486
    %540 = vmatpush1.bf16.msra.mxu0 %v485
    %541 = vmatprep.subr.bf16.mxu0 %v490
    %542 = vmatpush1.bf16.msra.mxu0 %v489
    %543 = vmatprep.subr.bf16.mxu0 %v494
    %544 = vmatpush1.bf16.msra.mxu0 %v493
    %545 = vmatprep.subr.bf16.mxu0 0
    %546 = vmatpush1.bf16.msra.mxu0 0
    %547 = vmatprep.subr.bf16.mxu0 0
    %548 = vmatpush1.bf16.msra.mxu0 0
    %549 = vmatprep.subr.bf16.mxu0 0
    %550 = vmatpush1.bf16.msra.mxu0 0
    %551 = vmatprep.subr.bf16.mxu0 0
    %552 = vmatpush1.bf16.msra.mxu0 0
    %553 = vmatprep.subr.bf16.mxu0 0
    %554 = vmatpush1.bf16.msra.mxu0 0
    %555 = vmatprep.subr.bf16.mxu0 0
    %556 = vmatpush1.bf16.msra.mxu0 0
    %557 = vmatprep.subr.bf16.mxu0 0
    %558 = vmatpush1.bf16.msra.mxu0 0
    %559 = vmatprep.subr.bf16.mxu0 0
    %560 = vmatpush1.bf16.msra.mxu0 0
    %561 = vmatprep.mubr.bf16.mxu0 0
    %562 = vmatmul.mubr.bf16.gmra.mrb[0].mxu0 0
    %v563 = vpop.f32.mrb[0].mxu0
    %v564 = vadd.f32 0.0, %v563
    %v565 = vpop.f32.mrb[0].mxu0
    %v566 = vadd.f32 0.0, %v565
    %v567 = vpop.f32.mrb[0].mxu0
    %v568 = vpop.f32.mrb[0].mxu0
    %569 = vdwg.mxu0
    %570 = vmatprep.subr.bf16.mxu0 %v468
    %571 = vmatpush1.bf16.msra.mxu0 %v467
    %572 = vmatprep.subr.bf16.mxu0 %v472
    %573 = vmatpush1.bf16.msra.mxu0 %v471
    %574 = vmatprep.subr.bf16.mxu0 %v476
    %575 = vmatpush1.bf16.msra.mxu0 %v475
    %576 = vmatprep.subr.bf16.mxu0 %v480
    %577 = vmatpush1.bf16.msra.mxu0 %v479
    %578 = vmatprep.subr.bf16.mxu0 %v484
    %579 = vmatpush1.bf16.msra.mxu0 %v483
    %580 = vmatprep.subr.bf16.mxu0 %v488
    %581 = vmatpush1.bf16.msra.mxu0 %v487
    %582 = vmatprep.subr.bf16.mxu0 %v492
    %583 = vmatpush1.bf16.msra.mxu0 %v491
    %584 = vmatprep.subr.bf16.mxu0 %v496
    %585 = vmatpush1.bf16.msra.mxu0 %v495
    %586 = vmatprep.subr.bf16.mxu0 0
    %587 = vmatpush1.bf16.msra.mxu0 0
    %588 = vmatprep.subr.bf16.mxu0 0
    %589 = vmatpush1.bf16.msra.mxu0 0
    %590 = vmatprep.subr.bf16.mxu0 0
    %591 = vmatpush1.bf16.msra.mxu0 0
    %592 = vmatprep.subr.bf16.mxu0 0
    %593 = vmatpush1.bf16.msra.mxu0 0
    %594 = vmatprep.subr.bf16.mxu0 0
    %595 = vmatpush1.bf16.msra.mxu0 0
    %596 = vmatprep.subr.bf16.mxu0 0
    %597 = vmatpush1.bf16.msra.mxu0 0
    %598 = vmatprep.subr.bf16.mxu0 0
    %599 = vmatpush1.bf16.msra.mxu0 0
    %600 = vmatprep.subr.bf16.mxu0 0
    %601 = vmatpush1.bf16.msra.mxu0 0
    %602 = vmatprep.mubr.bf16.mxu0 0
    %603 = vmatmul.mubr.bf16.gmra.mrb[0].mxu0 0
    %v604 = vpop.f32.mrb[0].mxu0
    %v605 = vadd.f32 0.0, %v604
    %v606 = vpop.f32.mrb[0].mxu0
    %v607 = vadd.f32 0.0, %v606
    %v608 = vpop.f32.mrb[0].mxu0
    %v609 = vpop.f32.mrb[0].mxu0
    %610 = vdwg.mxu0
    %v611 = vadd.f32 %v365, %v564
    %v612 = vadd.f32 %v366, %v566
    %v613 = vadd.f32 %v367, %v605
    %v614 = vadd.f32 %v368, %v607
    %v615 = vxor.u32 %v611, 2147483648
    %v616 = vxor.u32 %v612, 2147483648
    %v617 = vxor.u32 %v613, 2147483648
    %v618 = vmul.f32 %v615, 1.442695
    %v619 = vpow.pop %v618
    %v620 = vmul.f32 %v616, 1.442695
    %v621 = vpow.pop %v620
    %v622 = vmul.f32 %v617, 1.442695
    %v623 = vpow.pop %v622
    %v624 = vadd.f32 %v619, 1.0
    %v625 = vadd.f32 %v621, 1.0
    %v626 = vadd.f32 %v623, 1.0
    %v627 = vrcp.pop %v624
    %v628 = vmul.f32 1.0, %v627
    %v629 = vrcp.pop %v625
    %v630 = vmul.f32 1.0, %v629
    %v631 = vrcp.pop %v626
    %v632 = vmul.f32 1.0, %v631
    %v633 = vtanh.pop %v614
    %v634 = vmul.f32 %v630, 0.0
    %v635 = vmul.f32 %v628, %v633
    %v636 = vadd.f32 %v634, %v635
    %v637 = vtanh.pop %v636
    %v638 = vmul.f32 %v632, %v637
    %v639 = vpack.c.bf16 %v638, %v638
    %v704 = vunpack.c.l.b16 %v279
    %v705 = vunpack.c.h.b16 %v279
    %v706 = vunpack.c.l.b16 %v280
    %v707 = vunpack.c.h.b16 %v280
    %v708 = vunpack.c.l.b16 %v281
    %v709 = vunpack.c.h.b16 %v281
    %v710 = vunpack.c.l.b16 %v282
    %v711 = vunpack.c.h.b16 %v282
    %v712 = vunpack.c.l.b16 %v283
    %v713 = vunpack.c.h.b16 %v283
    %v714 = vunpack.c.l.b16 %v284
    %v715 = vunpack.c.h.b16 %v284
    %v716 = vunpack.c.l.b16 %v285
    %v717 = vunpack.c.h.b16 %v285
    %v718 = vunpack.c.l.b16 %v286
    %v719 = vunpack.c.h.b16 %v286
    %v720 = vunpack.c.l.b16 %v287
    %v721 = vunpack.c.h.b16 %v287
    %v722 = vunpack.c.l.b16 %v288
    %v723 = vunpack.c.h.b16 %v288
    %v724 = vunpack.c.l.b16 %v289
    %v725 = vunpack.c.h.b16 %v289
    %v726 = vunpack.c.l.b16 %v290
    %v727 = vunpack.c.h.b16 %v290
    %v728 = vunpack.c.l.b16 %v291
    %v729 = vunpack.c.h.b16 %v291
    %v730 = vunpack.c.l.b16 %v292
    %v731 = vunpack.c.h.b16 %v292
    %v732 = vunpack.c.l.b16 %v293
    %v733 = vunpack.c.h.b16 %v293
    %v734 = vunpack.c.l.b16 %v294
    %v735 = vunpack.c.h.b16 %v294
    %v736 = vunpack.c.l.b16 %v295
    %v737 = vunpack.c.h.b16 %v295
    %v738 = vunpack.c.l.b16 %v296
    %v739 = vunpack.c.h.b16 %v296
    %v740 = vunpack.c.l.b16 %v297
    %v741 = vunpack.c.h.b16 %v297
    %v742 = vunpack.c.l.b16 %v298
    %v743 = vunpack.c.h.b16 %v298
    %v744 = vunpack.c.l.b16 %v299
    %v745 = vunpack.c.h.b16 %v299
    %v746 = vunpack.c.l.b16 %v300
    %v747 = vunpack.c.h.b16 %v300
    %v748 = vunpack.c.l.b16 %v301
    %v749 = vunpack.c.h.b16 %v301
    %v750 = vunpack.c.l.b16 %v302
    %v751 = vunpack.c.h.b16 %v302
    %v752 = vunpack.c.l.b16 %v303
    %v753 = vunpack.c.h.b16 %v303
    %v754 = vunpack.c.l.b16 %v304
    %v755 = vunpack.c.h.b16 %v304
    %v756 = vunpack.c.l.b16 %v305
    %v757 = vunpack.c.h.b16 %v305
    %v758 = vunpack.c.l.b16 %v306
    %v759 = vunpack.c.h.b16 %v306
    %v760 = vunpack.c.l.b16 %v307
    %v761 = vunpack.c.h.b16 %v307
    %v762 = vunpack.c.l.b16 %v308
    %v763 = vunpack.c.h.b16 %v308
    %v764 = vunpack.c.l.b16 %v309
    %v765 = vunpack.c.h.b16 %v309
    %v766 = vunpack.c.l.b16 %v310
    %v767 = vunpack.c.h.b16 %v310
    %v768 = vunpack.c.l.b16 %v311
    %v769 = vunpack.c.h.b16 %v311
    %v770 = vunpack.c.l.b16 %v312
    %v771 = vunpack.c.h.b16 %v312
    %v772 = vunpack.c.l.b16 %v313
    %v773 = vunpack.c.h.b16 %v313
    %v774 = vunpack.c.l.b16 %v314
    %v775 = vunpack.c.h.b16 %v314
    %v776 = vunpack.c.l.b16 %v315
    %v777 = vunpack.c.h.b16 %v315
    %v778 = vunpack.c.l.b16 %v316
    %v779 = vunpack.c.h.b16 %v316
    %v780 = vunpack.c.l.b16 %v317
    %v781 = vunpack.c.h.b16 %v317
    %v782 = vunpack.c.l.b16 %v318
    %v783 = vunpack.c.h.b16 %v318
    %v784 = vunpack.c.l.b16 %v319
    %v785 = vunpack.c.h.b16 %v319
    %v786 = vunpack.c.l.b16 %v320
    %v787 = vunpack.c.h.b16 %v320
    %v788 = vunpack.c.l.b16 %v321
    %v789 = vunpack.c.h.b16 %v321
    %v790 = vunpack.c.l.b16 %v322
    %v791 = vunpack.c.h.b16 %v322
    %v792 = vunpack.c.l.b16 %v323
    %v793 = vunpack.c.h.b16 %v323
    %v794 = vunpack.c.l.b16 %v324
    %v795 = vunpack.c.h.b16 %v324
    %v796 = vunpack.c.l.b16 %v325
    %v797 = vunpack.c.h.b16 %v325
    %v798 = vunpack.c.l.b16 %v326
    %v799 = vunpack.c.h.b16 %v326
    %v800 = vunpack.c.l.b16 %v327
    %v801 = vunpack.c.h.b16 %v327
    %v802 = vunpack.c.l.b16 %v328
    %v803 = vunpack.c.h.b16 %v328
    %v804 = vunpack.c.l.b16 %v329
    %v805 = vunpack.c.h.b16 %v329
    %v806 = vunpack.c.l.b16 %v330
    %v807 = vunpack.c.h.b16 %v330
    %v808 = vunpack.c.l.b16 %v331
    %v809 = vunpack.c.h.b16 %v331
    %v810 = vunpack.c.l.b16 %v332
    %v811 = vunpack.c.h.b16 %v332
    %v812 = vunpack.c.l.b16 %v333
    %v813 = vunpack.c.h.b16 %v333
    %v814 = vunpack.c.l.b16 %v334
    %v815 = vunpack.c.h.b16 %v334
    %v816 = vunpack.c.l.b16 %v335
    %v817 = vunpack.c.h.b16 %v335
    %v818 = vunpack.c.l.b16 %v336
    %v819 = vunpack.c.h.b16 %v336
    %v820 = vunpack.c.l.b16 %v337
    %v821 = vunpack.c.h.b16 %v337
    %v822 = vunpack.c.l.b16 %v338
    %v823 = vunpack.c.h.b16 %v338
    %v824 = vunpack.c.l.b16 %v339
    %v825 = vunpack.c.h.b16 %v339
    %v826 = vunpack.c.l.b16 %v340
    %v827 = vunpack.c.h.b16 %v340
    %v828 = vunpack.c.l.b16 %v341
    %v829 = vunpack.c.h.b16 %v341
    %v830 = vunpack.c.l.b16 %v342
    %v831 = vunpack.c.h.b16 %v342
    %v832 = vpack.c.b16 %v708, %v704
    %v833 = vpack.c.b16 %v709, %v705
    %v834 = vpack.c.b16 %v710, %v706
    %v835 = vpack.c.b16 %v711, %v707
    %v836 = vpack.c.b16 %v716, %v712
    %v837 = vpack.c.b16 %v717, %v713
    %v838 = vpack.c.b16 %v718, %v714
    %v839 = vpack.c.b16 %v719, %v715
    %v840 = vpack.c.b16 %v724, %v720
    %v841 = vpack.c.b16 %v725, %v721
    %v842 = vpack.c.b16 %v726, %v722
    %v843 = vpack.c.b16 %v727, %v723
    %v844 = vpack.c.b16 %v732, %v728
    %v845 = vpack.c.b16 %v733, %v729
    %v846 = vpack.c.b16 %v734, %v730
    %v847 = vpack.c.b16 %v735, %v731
    %v848 = vpack.c.b16 %v740, %v736
    %v849 = vpack.c.b16 %v741, %v737
    %v850 = vpack.c.b16 %v742, %v738
    %v851 = vpack.c.b16 %v743, %v739
    %v852 = vpack.c.b16 %v748, %v744
    %v853 = vpack.c.b16 %v749, %v745
    %v854 = vpack.c.b16 %v750, %v746
    %v855 = vpack.c.b16 %v751, %v747
    %v856 = vpack.c.b16 %v756, %v752
    %v857 = vpack.c.b16 %v757, %v753
    %v858 = vpack.c.b16 %v758, %v754
    %v859 = vpack.c.b16 %v759, %v755
    %v860 = vpack.c.b16 %v764, %v760
    %v861 = vpack.c.b16 %v765, %v761
    %v862 = vpack.c.b16 %v766, %v762
    %v863 = vpack.c.b16 %v767, %v763
    %v864 = vpack.c.b16 %v772, %v768
    %v865 = vpack.c.b16 %v773, %v769
    %v866 = vpack.c.b16 %v774, %v770
    %v867 = vpack.c.b16 %v775, %v771
    %v868 = vpack.c.b16 %v780, %v776
    %v869 = vpack.c.b16 %v781, %v777
    %v870 = vpack.c.b16 %v782, %v778
    %v871 = vpack.c.b16 %v783, %v779
    %v872 = vpack.c.b16 %v788, %v784
    %v873 = vpack.c.b16 %v789, %v785
    %v874 = vpack.c.b16 %v790, %v786
    %v875 = vpack.c.b16 %v791, %v787
    %v876 = vpack.c.b16 %v796, %v792
    %v877 = vpack.c.b16 %v797, %v793
    %v878 = vpack.c.b16 %v798, %v794
    %v879 = vpack.c.b16 %v799, %v795
    %v880 = vpack.c.b16 %v804, %v800
    %v881 = vpack.c.b16 %v805, %v801
    %v882 = vpack.c.b16 %v806, %v802
    %v883 = vpack.c.b16 %v807, %v803
    %v884 = vpack.c.b16 %v812, %v808
    %v885 = vpack.c.b16 %v813, %v809
    %v886 = vpack.c.b16 %v814, %v810
    %v887 = vpack.c.b16 %v815, %v811
    %v888 = vpack.c.b16 %v820, %v816
    %v889 = vpack.c.b16 %v821, %v817
    %v890 = vpack.c.b16 %v822, %v818
    %v891 = vpack.c.b16 %v823, %v819
    %v892 = vpack.c.b16 %v828, %v824
    %v893 = vpack.c.b16 %v829, %v825
    %v894 = vpack.c.b16 %v830, %v826
    %v895 = vpack.c.b16 %v831, %v827
    %960 = vmatprep.subr.bf16.mxu0 %v833
    %961 = vmatpush1.bf16.msra.mxu0 %v832
    %962 = vmatprep.subr.bf16.mxu0 %v837
    %963 = vmatpush1.bf16.msra.mxu0 %v836
    %964 = vmatprep.subr.bf16.mxu0 %v841
    %965 = vmatpush1.bf16.msra.mxu0 %v840
    %966 = vmatprep.subr.bf16.mxu0 %v845
    %967 = vmatpush1.bf16.msra.mxu0 %v844
    %968 = vmatprep.subr.bf16.mxu0 %v849
    %969 = vmatpush1.bf16.msra.mxu0 %v848
    %970 = vmatprep.subr.bf16.mxu0 %v853
    %971 = vmatpush1.bf16.msra.mxu0 %v852
    %972 = vmatprep.subr.bf16.mxu0 %v857
    %973 = vmatpush1.bf16.msra.mxu0 %v856
    %974 = vmatprep.subr.bf16.mxu0 %v861
    %975 = vmatpush1.bf16.msra.mxu0 %v860
    %976 = vmatprep.subr.bf16.mxu0 %v865
    %977 = vmatpush1.bf16.msra.mxu0 %v864
    %978 = vmatprep.subr.bf16.mxu0 %v869
    %979 = vmatpush1.bf16.msra.mxu0 %v868
    %980 = vmatprep.subr.bf16.mxu0 %v873
    %981 = vmatpush1.bf16.msra.mxu0 %v872
    %982 = vmatprep.subr.bf16.mxu0 %v877
    %983 = vmatpush1.bf16.msra.mxu0 %v876
    %984 = vmatprep.subr.bf16.mxu0 %v881
    %985 = vmatpush1.bf16.msra.mxu0 %v880
    %986 = vmatprep.subr.bf16.mxu0 %v885
    %987 = vmatpush1.bf16.msra.mxu0 %v884
    %988 = vmatprep.subr.bf16.mxu0 %v889
    %989 = vmatpush1.bf16.msra.mxu0 %v888
    %990 = vmatprep.subr.bf16.mxu0 %v893
    %991 = vmatpush1.bf16.msra.mxu0 %v892
    %992 = vmatprep.mubr.bf16.mxu0 0
    %993 = vmatmul.mubr.bf16.gmra.mrb[0].mxu0 %v639
    %v994 = vpop.f32.mrb[0].mxu0
    %v995 = vadd.f32 %v348, %v994
    %v996 = vpop.f32.mrb[0].mxu0
    %v997 = vadd.f32 %v352, %v996
    %v998 = vpop.f32.mrb[0].mxu0
    %v999 = vpop.f32.mrb[0].mxu0
    %1000 = vdwg.mxu0
    %1001 = vmatprep.subr.bf16.mxu0 %v835
    %1002 = vmatpush1.bf16.msra.mxu0 %v834
    %1003 = vmatprep.subr.bf16.mxu0 %v839
    %1004 = vmatpush1.bf16.msra.mxu0 %v838
    %1005 = vmatprep.subr.bf16.mxu0 %v843
    %1006 = vmatpush1.bf16.msra.mxu0 %v842
    %1007 = vmatprep.subr.bf16.mxu0 %v847
    %1008 = vmatpush1.bf16.msra.mxu0 %v846
    %1009 = vmatprep.subr.bf16.mxu0 %v851
    %1010 = vmatpush1.bf16.msra.mxu0 %v850
    %1011 = vmatprep.subr.bf16.mxu0 %v855
    %1012 = vmatpush1.bf16.msra.mxu0 %v854
    %1013 = vmatprep.subr.bf16.mxu0 %v859
    %1014 = vmatpush1.bf16.msra.mxu0 %v858
    %1015 = vmatprep.subr.bf16.mxu0 %v863
    %1016 = vmatpush1.bf16.msra.mxu0 %v862
    %1017 = vmatprep.subr.bf16.mxu0 %v867
    %1018 = vmatpush1.bf16.msra.mxu0 %v866
    %1019 = vmatprep.subr.bf16.mxu0 %v871
    %1020 = vmatpush1.bf16.msra.mxu0 %v870
    %1021 = vmatprep.subr.bf16.mxu0 %v875
    %1022 = vmatpush1.bf16.msra.mxu0 %v874
    %1023 = vmatprep.subr.bf16.mxu0 %v879
    %1024 = vmatpush1.bf16.msra.mxu0 %v878
    %1025 = vmatprep.subr.bf16.mxu0 %v883
    %1026 = vmatpush1.bf16.msra.mxu0 %v882
    %1027 = vmatprep.subr.bf16.mxu0 %v887
    %1028 = vmatpush1.bf16.msra.mxu0 %v886
    %1029 = vmatprep.subr.bf16.mxu0 %v891
    %1030 = vmatpush1.bf16.msra.mxu0 %v890
    %1031 = vmatprep.subr.bf16.mxu0 %v895
    %1032 = vmatpush1.bf16.msra.mxu0 %v894
    %1033 = vmatprep.mubr.bf16.mxu0 0
    %1034 = vmatmul.mubr.bf16.gmra.mrb[0].mxu0 %v639
    %v1035 = vpop.f32.mrb[0].mxu0
    %v1036 = vadd.f32 %v356, %v1035
    %v1037 = vpop.f32.mrb[0].mxu0
    %v1038 = vadd.f32 %v360, %v1037
    %v1039 = vpop.f32.mrb[0].mxu0
    %v1040 = vpop.f32.mrb[0].mxu0
    %1041 = vdwg.mxu0
    %v1042 = vxor.u32 %v995, 2147483648
    %v1043 = vxor.u32 %v997, 2147483648
    %v1044 = vxor.u32 %v1036, 2147483648
    %v1045 = vmul.f32 %v1042, 1.442695
    %v1046 = vpow.pop %v1045
    %v1047 = vmul.f32 %v1043, 1.442695
    %v1048 = vpow.pop %v1047
    %v1049 = vmul.f32 %v1044, 1.442695
    %v1050 = vpow.pop %v1049
    %v1051 = vadd.f32 %v1046, 1.0
    %v1052 = vadd.f32 %v1048, 1.0
    %v1053 = vadd.f32 %v1050, 1.0
    %v1054 = vrcp.pop %v1051
    %v1055 = vmul.f32 1.0, %v1054
    %v1056 = vrcp.pop %v1052
    %v1057 = vmul.f32 1.0, %v1056
    %v1058 = vrcp.pop %v1053
    %v1059 = vmul.f32 1.0, %v1058
    %v1060 = vtanh.pop %v1038
    %v1061 = vmul.f32 %v1057, 0.0
    %v1062 = vmul.f32 %v1055, %v1060
    %v1063 = vadd.f32 %v1061, %v1062
    %v1064 = vtanh.pop %v1063
    %v1065 = vmul.f32 %v1059, %v1064
    %v1066 = vpack.c.bf16 %v1065, %v1065
    %v1067 = vld [vmem:[#allocation2 + $0x20] sm:$0xff]
    %v1068 = vld [vmem:[#allocation2 + $0x28] sm:$0xff]
    %v1069 = vld [vmem:[#allocation2 + $0x30] sm:$0xff]
    %v1070 = vld [vmem:[#allocation2 + $0x38] sm:$0xff]
    %1071 = vmatprep.subr.bf16.mxu0 %v466
    %1072 = vmatpush1.bf16.msra.mxu0 %v465
    %1073 = vmatprep.subr.bf16.mxu0 %v470
    %1074 = vmatpush1.bf16.msra.mxu0 %v469
    %1075 = vmatprep.subr.bf16.mxu0 %v474
    %1076 = vmatpush1.bf16.msra.mxu0 %v473
    %1077 = vmatprep.subr.bf16.mxu0 %v478
    %1078 = vmatpush1.bf16.msra.mxu0 %v477
    %1079 = vmatprep.subr.bf16.mxu0 %v482
    %1080 = vmatpush1.bf16.msra.mxu0 %v481
    %1081 = vmatprep.subr.bf16.mxu0 %v486
    %1082 = vmatpush1.bf16.msra.mxu0 %v485
    %1083 = vmatprep.subr.bf16.mxu0 %v490
    %1084 = vmatpush1.bf16.msra.mxu0 %v489
    %1085 = vmatprep.subr.bf16.mxu0 %v494
    %1086 = vmatpush1.bf16.msra.mxu0 %v493
    %1087 = vmatprep.subr.bf16.mxu0 0
    %1088 = vmatpush1.bf16.msra.mxu0 0
    %1089 = vmatprep.subr.bf16.mxu0 0
    %1090 = vmatpush1.bf16.msra.mxu0 0
    %1091 = vmatprep.subr.bf16.mxu0 0
    %1092 = vmatpush1.bf16.msra.mxu0 0
    %1093 = vmatprep.subr.bf16.mxu0 0
    %1094 = vmatpush1.bf16.msra.mxu0 0
    %1095 = vmatprep.subr.bf16.mxu0 0
    %1096 = vmatpush1.bf16.msra.mxu0 0
    %1097 = vmatprep.subr.bf16.mxu0 0
    %1098 = vmatpush1.bf16.msra.mxu0 0
    %1099 = vmatprep.subr.bf16.mxu0 0
    %1100 = vmatpush1.bf16.msra.mxu0 0
    %1101 = vmatprep.subr.bf16.mxu0 0
    %1102 = vmatpush1.bf16.msra.mxu0 0
    %1103 = vmatprep.mubr.bf16.mxu0 0
    %1104 = vmatmul.mubr.bf16.gmra.mrb[0].mxu0 %v639
    %v1105 = vpop.f32.mrb[0].mxu0
    %v1106 = vadd.f32 0.0, %v1105
    %v1107 = vpop.f32.mrb[0].mxu0
    %v1108 = vadd.f32 0.0, %v1107
    %v1109 = vpop.f32.mrb[0].mxu0
    %v1110 = vpop.f32.mrb[0].mxu0
    %1111 = vdwg.mxu0
    %1112 = vmatprep.subr.bf16.mxu0 %v468
    %1113 = vmatpush1.bf16.msra.mxu0 %v467
    %1114 = vmatprep.subr.bf16.mxu0 %v472
    %1115 = vmatpush1.bf16.msra.mxu0 %v471
    %1116 = vmatprep.subr.bf16.mxu0 %v476
    %1117 = vmatpush1.bf16.msra.mxu0 %v475
    %1118 = vmatprep.subr.bf16.mxu0 %v480
    %1119 = vmatpush1.bf16.msra.mxu0 %v479
    %1120 = vmatprep.subr.bf16.mxu0 %v484
    %1121 = vmatpush1.bf16.msra.mxu0 %v483
    %1122 = vmatprep.subr.bf16.mxu0 %v488
    %1123 = vmatpush1.bf16.msra.mxu0 %v487
    %1124 = vmatprep.subr.bf16.mxu0 %v492
    %1125 = vmatpush1.bf16.msra.mxu0 %v491
    %1126 = vmatprep.subr.bf16.mxu0 %v496
    %1127 = vmatpush1.bf16.msra.mxu0 %v495
    %1128 = vmatprep.subr.bf16.mxu0 0
    %1129 = vmatpush1.bf16.msra.mxu0 0
    %1130 = vmatprep.subr.bf16.mxu0 0
    %1131 = vmatpush1.bf16.msra.mxu0 0
    %1132 = vmatprep.subr.bf16.mxu0 0
    %1133 = vmatpush1.bf16.msra.mxu0 0
    %1134 = vmatprep.subr.bf16.mxu0 0
    %1135 = vmatpush1.bf16.msra.mxu0 0
    %1136 = vmatprep.subr.bf16.mxu0 0
    %1137 = vmatpush1.bf16.msra.mxu0 0
    %1138 = vmatprep.subr.bf16.mxu0 0
    %1139 = vmatpush1.bf16.msra.mxu0 0
    %1140 = vmatprep.subr.bf16.mxu0 0
    %1141 = vmatpush1.bf16.msra.mxu0 0
    %1142 = vmatprep.subr.bf16.mxu0 0
    %1143 = vmatpush1.bf16.msra.mxu0 0
    %1144 = vmatprep.mubr.bf16.mxu0 0
    %1145 = vmatmul.mubr.bf16.gmra.mrb[0].mxu0 %v639
    %v1146 = vpop.f32.mrb[0].mxu0
    %v1147 = vadd.f32 0.0, %v1146
    %v1148 = vpop.f32.mrb[0].mxu0
    %v1149 = vadd.f32 0.0, %v1148
    %v1150 = vpop.f32.mrb[0].mxu0
    %v1151 = vpop.f32.mrb[0].mxu0
    %1152 = vdwg.mxu0
    %v1153 = vadd.f32 %v1067, %v1106
    %v1154 = vadd.f32 %v1068, %v1108
    %v1155 = vadd.f32 %v1069, %v1147
    %v1156 = vadd.f32 %v1070, %v1149
    %v1157 = vxor.u32 %v1153, 2147483648
    %v1158 = vxor.u32 %v1154, 2147483648
    %v1159 = vxor.u32 %v1155, 2147483648
    %v1160 = vmul.f32 %v1157, 1.442695
    %v1161 = vpow.pop %v1160
    %v1162 = vmul.f32 %v1158, 1.442695
    %v1163 = vpow.pop %v1162
    %v1164 = vmul.f32 %v1159, 1.442695
    %v1165 = vpow.pop %v1164
    %v1166 = vadd.f32 %v1161, 1.0
    %v1167 = vadd.f32 %v1163, 1.0
    %v1168 = vadd.f32 %v1165, 1.0
    %v1169 = vrcp.pop %v1166
    %v1170 = vmul.f32 1.0, %v1169
    %v1171 = vrcp.pop %v1167
    %v1172 = vmul.f32 1.0, %v1171
    %v1173 = vrcp.pop %v1168
    %v1174 = vmul.f32 1.0, %v1173
    %v1175 = vtanh.pop %v1156
    %v1176 = vmul.f32 %v1172, %v636
    %v1177 = vmul.f32 %v1170, %v1175
    %v1178 = vadd.f32 %v1176, %v1177
    %v1179 = vtanh.pop %v1178
    %v1180 = vmul.f32 %v1174, %v1179
    %v1181 = vpack.c.bf16 %v1180, %v1180
    %1182 = vmatprep.subr.bf16.mxu0 %v833
    %1183 = vmatpush1.bf16.msra.mxu0 %v832
    %1184 = vmatprep.subr.bf16.mxu0 %v837
    %1185 = vmatpush1.bf16.msra.mxu0 %v836
    %1186 = vmatprep.subr.bf16.mxu0 %v841
    %1187 = vmatpush1.bf16.msra.mxu0 %v840
    %1188 = vmatprep.subr.bf16.mxu0 %v845
    %1189 = vmatpush1.bf16.msra.mxu0 %v844
    %1190 = vmatprep.subr.bf16.mxu0 %v849
    %1191 = vmatpush1.bf16.msra.mxu0 %v848
    %1192 = vmatprep.subr.bf16.mxu0 %v853
    %1193 = vmatpush1.bf16.msra.mxu0 %v852
    %1194 = vmatprep.subr.bf16.mxu0 %v857
    %1195 = vmatpush1.bf16.msra.mxu0 %v856
    %1196 = vmatprep.subr.bf16.mxu0 %v861
    %1197 = vmatpush1.bf16.msra.mxu0 %v860
    %1198 = vmatprep.subr.bf16.mxu0 %v865
    %1199 = vmatpush1.bf16.msra.mxu0 %v864
    %1200 = vmatprep.subr.bf16.mxu0 %v869
    %1201 = vmatpush1.bf16.msra.mxu0 %v868
    %1202 = vmatprep.subr.bf16.mxu0 %v873
    %1203 = vmatpush1.bf16.msra.mxu0 %v872
    %1204 = vmatprep.subr.bf16.mxu0 %v877
    %1205 = vmatpush1.bf16.msra.mxu0 %v876
    %1206 = vmatprep.subr.bf16.mxu0 %v881
    %1207 = vmatpush1.bf16.msra.mxu0 %v880
    %1208 = vmatprep.subr.bf16.mxu0 %v885
    %1209 = vmatpush1.bf16.msra.mxu0 %v884
    %1210 = vmatprep.subr.bf16.mxu0 %v889
    %1211 = vmatpush1.bf16.msra.mxu0 %v888
    %1212 = vmatprep.subr.bf16.mxu0 %v893
    %1213 = vmatpush1.bf16.msra.mxu0 %v892
    %1214 = vmatprep.mubr.bf16.mxu0 %v1066
    %1215 = vmatmul.mubr.bf16.gmra.mrb[0].mxu0 %v1181
    %v1216 = vpop.f32.mrb[0].mxu0
    %v1217 = vadd.f32 %v348, %v1216
    %v1218 = vpop.f32.mrb[0].mxu0
    %v1219 = vadd.f32 %v352, %v1218
    %v1220 = vpop.f32.mrb[0].mxu0
    %v1221 = vpop.f32.mrb[0].mxu0
    %1222 = vdwg.mxu0
    %1223 = vmatprep.subr.bf16.mxu0 %v835
    %1224 = vmatpush1.bf16.msra.mxu0 %v834
    %1225 = vmatprep.subr.bf16.mxu0 %v839
    %1226 = vmatpush1.bf16.msra.mxu0 %v838
    %1227 = vmatprep.subr.bf16.mxu0 %v843
    %1228 = vmatpush1.bf16.msra.mxu0 %v842
    %1229 = vmatprep.subr.bf16.mxu0 %v847
    %1230 = vmatpush1.bf16.msra.mxu0 %v846
    %1231 = vmatprep.subr.bf16.mxu0 %v851
    %1232 = vmatpush1.bf16.msra.mxu0 %v850
    %1233 = vmatprep.subr.bf16.mxu0 %v855
    %1234 = vmatpush1.bf16.msra.mxu0 %v854
    %1235 = vmatprep.subr.bf16.mxu0 %v859
    %1236 = vmatpush1.bf16.msra.mxu0 %v858
    %1237 = vmatprep.subr.bf16.mxu0 %v863
    %1238 = vmatpush1.bf16.msra.mxu0 %v862
    %1239 = vmatprep.subr.bf16.mxu0 %v867
    %1240 = vmatpush1.bf16.msra.mxu0 %v866
    %1241 = vmatprep.subr.bf16.mxu0 %v871
    %1242 = vmatpush1.bf16.msra.mxu0 %v870
    %1243 = vmatprep.subr.bf16.mxu0 %v875
    %1244 = vmatpush1.bf16.msra.mxu0 %v874
    %1245 = vmatprep.subr.bf16.mxu0 %v879
    %1246 = vmatpush1.bf16.msra.mxu0 %v878
    %1247 = vmatprep.subr.bf16.mxu0 %v883
    %1248 = vmatpush1.bf16.msra.mxu0 %v882
    %1249 = vmatprep.subr.bf16.mxu0 %v887
    %1250 = vmatpush1.bf16.msra.mxu0 %v886
    %1251 = vmatprep.subr.bf16.mxu0 %v891
    %1252 = vmatpush1.bf16.msra.mxu0 %v890
    %1253 = vmatprep.subr.bf16.mxu0 %v895
    %1254 = vmatpush1.bf16.msra.mxu0 %v894
    %1255 = vmatprep.mubr.bf16.mxu0 %v1066
    %1256 = vmatmul.mubr.bf16.gmra.mrb[0].mxu0 %v1181
    %v1257 = vpop.f32.mrb[0].mxu0
    %v1258 = vadd.f32 %v356, %v1257
    %v1259 = vpop.f32.mrb[0].mxu0
    %v1260 = vadd.f32 %v360, %v1259
    %v1261 = vpop.f32.mrb[0].mxu0
    %v1262 = vpop.f32.mrb[0].mxu0
    %1263 = vdwg.mxu0
    %v1264 = vxor.u32 %v1217, 2147483648
    %v1265 = vxor.u32 %v1219, 2147483648
    %v1266 = vxor.u32 %v1258, 2147483648
    %v1267 = vmul.f32 %v1264, 1.442695
    %v1268 = vpow.pop %v1267
    %v1269 = vmul.f32 %v1265, 1.442695
    %v1270 = vpow.pop %v1269
    %v1271 = vmul.f32 %v1266, 1.442695
    %v1272 = vpow.pop %v1271
    %v1273 = vadd.f32 %v1268, 1.0
    %v1274 = vadd.f32 %v1270, 1.0
    %v1275 = vadd.f32 %v1272, 1.0
    %v1276 = vrcp.pop %v1273
    %v1277 = vmul.f32 1.0, %v1276
    %v1278 = vrcp.pop %v1274
    %v1279 = vmul.f32 1.0, %v1278
    %v1280 = vrcp.pop %v1275
    %v1281 = vmul.f32 1.0, %v1280
    %v1282 = vtanh.pop %v1260
    %v1283 = vmul.f32 %v1279, %v1063
    %v1284 = vmul.f32 %v1277, %v1282
    %v1285 = vadd.f32 %v1283, %v1284
    %v1286 = vtanh.pop %v1285
    %v1287 = vmul.f32 %v1281, %v1286
    %v1288 = vpack.c.bf16 %v1287, %v1287
    %v1289 = vld [vmem:[#allocation2 + $0x40] sm:$0xff]
    %v1290 = vld [vmem:[#allocation2 + $0x48] sm:$0xff]
    %v1291 = vld [vmem:[#allocation2 + $0x50] sm:$0xff]
    %v1292 = vld [vmem:[#allocation2 + $0x58] sm:$0xff]
    %1293 = vmatprep.subr.bf16.mxu0 %v466
    %1294 = vmatpush1.bf16.msra.mxu0 %v465
    %1295 = vmatprep.subr.bf16.mxu0 %v470
    %1296 = vmatpush1.bf16.msra.mxu0 %v469
    %1297 = vmatprep.subr.bf16.mxu0 %v474
    %1298 = vmatpush1.bf16.msra.mxu0 %v473
    %1299 = vmatprep.subr.bf16.mxu0 %v478
    %1300 = vmatpush1.bf16.msra.mxu0 %v477
    %1301 = vmatprep.subr.bf16.mxu0 %v482
    %1302 = vmatpush1.bf16.msra.mxu0 %v481
    %1303 = vmatprep.subr.bf16.mxu0 %v486
    %1304 = vmatpush1.bf16.msra.mxu0 %v485
    %1305 = vmatprep.subr.bf16.mxu0 %v490
    %1306 = vmatpush1.bf16.msra.mxu0 %v489
    %1307 = vmatprep.subr.bf16.mxu0 %v494
    %1308 = vmatpush1.bf16.msra.mxu0 %v493
    %1309 = vmatprep.subr.bf16.mxu0 0
    %1310 = vmatpush1.bf16.msra.mxu0 0
    %1311 = vmatprep.subr.bf16.mxu0 0
    %1312 = vmatpush1.bf16.msra.mxu0 0
    %1313 = vmatprep.subr.bf16.mxu0 0
    %1314 = vmatpush1.bf16.msra.mxu0 0
    %1315 = vmatprep.subr.bf16.mxu0 0
    %1316 = vmatpush1.bf16.msra.mxu0 0
    %1317 = vmatprep.subr.bf16.mxu0 0
    %1318 = vmatpush1.bf16.msra.mxu0 0
    %1319 = vmatprep.subr.bf16.mxu0 0
    %1320 = vmatpush1.bf16.msra.mxu0 0
    %1321 = vmatprep.subr.bf16.mxu0 0
    %1322 = vmatpush1.bf16.msra.mxu0 0
    %1323 = vmatprep.subr.bf16.mxu0 0
    %1324 = vmatpush1.bf16.msra.mxu0 0
    %1325 = vmatprep.mubr.bf16.mxu0 0
    %1326 = vmatmul.mubr.bf16.gmra.mrb[0].mxu0 %v1181
    %v1327 = vpop.f32.mrb[0].mxu0
    %v1328 = vadd.f32 0.0, %v1327
    %v1329 = vpop.f32.mrb[0].mxu0
    %v1330 = vadd.f32 0.0, %v1329
    %v1331 = vpop.f32.mrb[0].mxu0
    %v1332 = vpop.f32.mrb[0].mxu0
    %1333 = vdwg.mxu0
    %1334 = vmatprep.subr.bf16.mxu0 %v468
    %1335 = vmatpush1.bf16.msra.mxu0 %v467
    %1336 = vmatprep.subr.bf16.mxu0 %v472
    %1337 = vmatpush1.bf16.msra.mxu0 %v471
    %1338 = vmatprep.subr.bf16.mxu0 %v476
    %1339 = vmatpush1.bf16.msra.mxu0 %v475
    %1340 = vmatprep.subr.bf16.mxu0 %v480
    %1341 = vmatpush1.bf16.msra.mxu0 %v479
    %1342 = vmatprep.subr.bf16.mxu0 %v484
    %1343 = vmatpush1.bf16.msra.mxu0 %v483
    %1344 = vmatprep.subr.bf16.mxu0 %v488
    %1345 = vmatpush1.bf16.msra.mxu0 %v487
    %1346 = vmatprep.subr.bf16.mxu0 %v492
    %1347 = vmatpush1.bf16.msra.mxu0 %v491
    %1348 = vmatprep.subr.bf16.mxu0 %v496
    %1349 = vmatpush1.bf16.msra.mxu0 %v495
    %1350 = vmatprep.subr.bf16.mxu0 0
    %1351 = vmatpush1.bf16.msra.mxu0 0
    %1352 = vmatprep.subr.bf16.mxu0 0
    %1353 = vmatpush1.bf16.msra.mxu0 0
    %1354 = vmatprep.subr.bf16.mxu0 0
    %1355 = vmatpush1.bf16.msra.mxu0 0
    %1356 = vmatprep.subr.bf16.mxu0 0
    %1357 = vmatpush1.bf16.msra.mxu0 0
    %1358 = vmatprep.subr.bf16.mxu0 0
    %1359 = vmatpush1.bf16.msra.mxu0 0
    %1360 = vmatprep.subr.bf16.mxu0 0
    %1361 = vmatpush1.bf16.msra.mxu0 0
    %1362 = vmatprep.subr.bf16.mxu0 0
    %1363 = vmatpush1.bf16.msra.mxu0 0
    %1364 = vmatprep.subr.bf16.mxu0 0
    %1365 = vmatpush1.bf16.msra.mxu0 0
    %1366 = vmatprep.mubr.bf16.mxu0 0
    %1367 = vmatmul.mubr.bf16.gmra.mrb[0].mxu0 %v1181
    %v1368 = vpop.f32.mrb[0].mxu0
    %v1369 = vadd.f32 0.0, %v1368
    %v1370 = vpop.f32.mrb[0].mxu0
    %v1371 = vadd.f32 0.0, %v1370
    %v1372 = vpop.f32.mrb[0].mxu0
    %v1373 = vpop.f32.mrb[0].mxu0
    %1374 = vdwg.mxu0
    %v1375 = vadd.f32 %v1289, %v1328
    %v1376 = vadd.f32 %v1290, %v1330
    %v1377 = vadd.f32 %v1291, %v1369
    %v1378 = vadd.f32 %v1292, %v1371
    %v1379 = vxor.u32 %v1375, 2147483648
    %v1380 = vxor.u32 %v1376, 2147483648
    %v1381 = vxor.u32 %v1377, 2147483648
    %v1382 = vmul.f32 %v1379, 1.442695
    %v1383 = vpow.pop %v1382
    %v1384 = vmul.f32 %v1380, 1.442695
    %v1385 = vpow.pop %v1384
    %v1386 = vmul.f32 %v1381, 1.442695
    %v1387 = vpow.pop %v1386
    %v1388 = vadd.f32 %v1383, 1.0
    %v1389 = vadd.f32 %v1385, 1.0
    %v1390 = vadd.f32 %v1387, 1.0
    %v1391 = vrcp.pop %v1388
    %v1392 = vmul.f32 1.0, %v1391
    %v1393 = vrcp.pop %v1389
    %v1394 = vmul.f32 1.0, %v1393
    %v1395 = vrcp.pop %v1390
    %v1396 = vmul.f32 1.0, %v1395
    %v1397 = vtanh.pop %v1378
    %v1398 = vmul.f32 %v1394, %v1178
    %v1399 = vmul.f32 %v1392, %v1397
    %v1400 = vadd.f32 %v1398, %v1399
    %v1401 = vtanh.pop %v1400
    %v1402 = vmul.f32 %v1396, %v1401
    %v1403 = vpack.c.bf16 %v1402, %v1402
    %1404 = vmatprep.subr.bf16.mxu0 %v833
    %1405 = vmatpush1.bf16.msra.mxu0 %v832
    %1406 = vmatprep.subr.bf16.mxu0 %v837
    %1407 = vmatpush1.bf16.msra.mxu0 %v836
    %1408 = vmatprep.subr.bf16.mxu0 %v841
    %1409 = vmatpush1.bf16.msra.mxu0 %v840
    %1410 = vmatprep.subr.bf16.mxu0 %v845
    %1411 = vmatpush1.bf16.msra.mxu0 %v844
    %1412 = vmatprep.subr.bf16.mxu0 %v849
    %1413 = vmatpush1.bf16.msra.mxu0 %v848
    %1414 = vmatprep.subr.bf16.mxu0 %v853
    %1415 = vmatpush1.bf16.msra.mxu0 %v852
    %1416 = vmatprep.subr.bf16.mxu0 %v857
    %1417 = vmatpush1.bf16.msra.mxu0 %v856
    %1418 = vmatprep.subr.bf16.mxu0 %v861
    %1419 = vmatpush1.bf16.msra.mxu0 %v860
    %1420 = vmatprep.subr.bf16.mxu0 %v865
    %1421 = vmatpush1.bf16.msra.mxu0 %v864
    %1422 = vmatprep.subr.bf16.mxu0 %v869
    %1423 = vmatpush1.bf16.msra.mxu0 %v868
    %1424 = vmatprep.subr.bf16.mxu0 %v873
    %1425 = vmatpush1.bf16.msra.mxu0 %v872
    %1426 = vmatprep.subr.bf16.mxu0 %v877
    %1427 = vmatpush1.bf16.msra.mxu0 %v876
    %1428 = vmatprep.subr.bf16.mxu0 %v881
    %1429 = vmatpush1.bf16.msra.mxu0 %v880
    %1430 = vmatprep.subr.bf16.mxu0 %v885
    %1431 = vmatpush1.bf16.msra.mxu0 %v884
    %1432 = vmatprep.subr.bf16.mxu0 %v889
    %1433 = vmatpush1.bf16.msra.mxu0 %v888
    %1434 = vmatprep.subr.bf16.mxu0 %v893
    %1435 = vmatpush1.bf16.msra.mxu0 %v892
    %1436 = vmatprep.mubr.bf16.mxu0 %v1288
    %1437 = vmatmul.mubr.bf16.gmra.mrb[0].mxu0 %v1403
    %v1438 = vpop.f32.mrb[0].mxu0
    %v1439 = vadd.f32 %v348, %v1438
    %v1440 = vpop.f32.mrb[0].mxu0
    %v1441 = vadd.f32 %v352, %v1440
    %v1442 = vpop.f32.mrb[0].mxu0
    %v1443 = vpop.f32.mrb[0].mxu0
    %1444 = vdwg.mxu0
    %1445 = vmatprep.subr.bf16.mxu0 %v835
    %1446 = vmatpush1.bf16.msra.mxu0 %v834
    %1447 = vmatprep.subr.bf16.mxu0 %v839
    %1448 = vmatpush1.bf16.msra.mxu0 %v838
    %1449 = vmatprep.subr.bf16.mxu0 %v843
    %1450 = vmatpush1.bf16.msra.mxu0 %v842
    %1451 = vmatprep.subr.bf16.mxu0 %v847
    %1452 = vmatpush1.bf16.msra.mxu0 %v846
    %1453 = vmatprep.subr.bf16.mxu0 %v851
    %1454 = vmatpush1.bf16.msra.mxu0 %v850
    %1455 = vmatprep.subr.bf16.mxu0 %v855
    %1456 = vmatpush1.bf16.msra.mxu0 %v854
    %1457 = vmatprep.subr.bf16.mxu0 %v859
    %1458 = vmatpush1.bf16.msra.mxu0 %v858
    %1459 = vmatprep.subr.bf16.mxu0 %v863
    %1460 = vmatpush1.bf16.msra.mxu0 %v862
    %1461 = vmatprep.subr.bf16.mxu0 %v867
    %1462 = vmatpush1.bf16.msra.mxu0 %v866
    %1463 = vmatprep.subr.bf16.mxu0 %v871
    %1464 = vmatpush1.bf16.msra.mxu0 %v870
    %1465 = vmatprep.subr.bf16.mxu0 %v875
    %1466 = vmatpush1.bf16.msra.mxu0 %v874
    %1467 = vmatprep.subr.bf16.mxu0 %v879
    %1468 = vmatpush1.bf16.msra.mxu0 %v878
    %1469 = vmatprep.subr.bf16.mxu0 %v883
    %1470 = vmatpush1.bf16.msra.mxu0 %v882
    %1471 = vmatprep.subr.bf16.mxu0 %v887
    %1472 = vmatpush1.bf16.msra.mxu0 %v886
    %1473 = vmatprep.subr.bf16.mxu0 %v891
    %1474 = vmatpush1.bf16.msra.mxu0 %v890
    %1475 = vmatprep.subr.bf16.mxu0 %v895
    %1476 = vmatpush1.bf16.msra.mxu0 %v894
    %1477 = vmatprep.mubr.bf16.mxu0 %v1288
    %1478 = vmatmul.mubr.bf16.gmra.mrb[0].mxu0 %v1403
    %v1479 = vpop.f32.mrb[0].mxu0
    %v1480 = vadd.f32 %v356, %v1479
    %v1481 = vpop.f32.mrb[0].mxu0
    %v1482 = vadd.f32 %v360, %v1481
    %v1483 = vpop.f32.mrb[0].mxu0
    %v1484 = vpop.f32.mrb[0].mxu0
    %1485 = vdwg.mxu0
    %v1486 = vxor.u32 %v1439, 2147483648
    %v1487 = vxor.u32 %v1441, 2147483648
    %v1488 = vxor.u32 %v1480, 2147483648
    %v1489 = vmul.f32 %v1486, 1.442695
    %v1490 = vpow.pop %v1489
    %v1491 = vmul.f32 %v1487, 1.442695
    %v1492 = vpow.pop %v1491
    %v1493 = vmul.f32 %v1488, 1.442695
    %v1494 = vpow.pop %v1493
    %v1495 = vadd.f32 %v1490, 1.0
    %v1496 = vadd.f32 %v1492, 1.0
    %v1497 = vadd.f32 %v1494, 1.0
    %v1498 = vrcp.pop %v1495
    %v1499 = vmul.f32 1.0, %v1498
    %v1500 = vrcp.pop %v1496
    %v1501 = vmul.f32 1.0, %v1500
    %v1502 = vrcp.pop %v1497
    %v1503 = vmul.f32 1.0, %v1502
    %v1504 = vtanh.pop %v1482
    %v1505 = vmul.f32 %v1501, %v1285
    %v1506 = vmul.f32 %v1499, %v1504
    %v1507 = vadd.f32 %v1505, %v1506
    %v1508 = vtanh.pop %v1507
    %v1509 = vmul.f32 %v1503, %v1508
    %v1510 = vpack.c.bf16 %v1509, %v1509
    %v1511 = vld [vmem:[#allocation2 + $0x60] sm:$0xff]
    %v1512 = vld [vmem:[#allocation2 + $0x68] sm:$0xff]
    %v1513 = vld [vmem:[#allocation2 + $0x70] sm:$0xff]
    %v1514 = vld [vmem:[#allocation2 + $0x78] sm:$0xff]
    %1515 = vmatprep.subr.bf16.mxu0 %v466
    %1516 = vmatpush1.bf16.msra.mxu0 %v465
    %1517 = vmatprep.subr.bf16.mxu0 %v470
    %1518 = vmatpush1.bf16.msra.mxu0 %v469
    %1519 = vmatprep.subr.bf16.mxu0 %v474
    %1520 = vmatpush1.bf16.msra.mxu0 %v473
    %1521 = vmatprep.subr.bf16.mxu0 %v478
    %1522 = vmatpush1.bf16.msra.mxu0 %v477
    %1523 = vmatprep.subr.bf16.mxu0 %v482
    %1524 = vmatpush1.bf16.msra.mxu0 %v481
    %1525 = vmatprep.subr.bf16.mxu0 %v486
    %1526 = vmatpush1.bf16.msra.mxu0 %v485
    %1527 = vmatprep.subr.bf16.mxu0 %v490
    %1528 = vmatpush1.bf16.msra.mxu0 %v489
    %1529 = vmatprep.subr.bf16.mxu0 %v494
    %1530 = vmatpush1.bf16.msra.mxu0 %v493
    %1531 = vmatprep.subr.bf16.mxu0 0
    %1532 = vmatpush1.bf16.msra.mxu0 0
    %1533 = vmatprep.subr.bf16.mxu0 0
    %1534 = vmatpush1.bf16.msra.mxu0 0
    %1535 = vmatprep.subr.bf16.mxu0 0
    %1536 = vmatpush1.bf16.msra.mxu0 0
    %1537 = vmatprep.subr.bf16.mxu0 0
    %1538 = vmatpush1.bf16.msra.mxu0 0
    %1539 = vmatprep.subr.bf16.mxu0 0
    %1540 = vmatpush1.bf16.msra.mxu0 0
    %1541 = vmatprep.subr.bf16.mxu0 0
    %1542 = vmatpush1.bf16.msra.mxu0 0
    %1543 = vmatprep.subr.bf16.mxu0 0
    %1544 = vmatpush1.bf16.msra.mxu0 0
    %1545 = vmatprep.subr.bf16.mxu0 0
    %1546 = vmatpush1.bf16.msra.mxu0 0
    %1547 = vmatprep.mubr.bf16.mxu0 0
    %1548 = vmatmul.mubr.bf16.gmra.mrb[0].mxu0 %v1403
    %v1549 = vpop.f32.mrb[0].mxu0
    %v1550 = vadd.f32 0.0, %v1549
    %v1551 = vpop.f32.mrb[0].mxu0
    %v1552 = vadd.f32 0.0, %v1551
    %v1553 = vpop.f32.mrb[0].mxu0
    %v1554 = vpop.f32.mrb[0].mxu0
    %1555 = vdwg.mxu0
    %1556 = vmatprep.subr.bf16.mxu0 %v468
    %1557 = vmatpush1.bf16.msra.mxu0 %v467
    %1558 = vmatprep.subr.bf16.mxu0 %v472
    %1559 = vmatpush1.bf16.msra.mxu0 %v471
    %1560 = vmatprep.subr.bf16.mxu0 %v476
    %1561 = vmatpush1.bf16.msra.mxu0 %v475
    %1562 = vmatprep.subr.bf16.mxu0 %v480
    %1563 = vmatpush1.bf16.msra.mxu0 %v479
    %1564 = vmatprep.subr.bf16.mxu0 %v484
    %1565 = vmatpush1.bf16.msra.mxu0 %v483
    %1566 = vmatprep.subr.bf16.mxu0 %v488
    %1567 = vmatpush1.bf16.msra.mxu0 %v487
    %1568 = vmatprep.subr.bf16.mxu0 %v492
    %1569 = vmatpush1.bf16.msra.mxu0 %v491
    %1570 = vmatprep.subr.bf16.mxu0 %v496
    %1571 = vmatpush1.bf16.msra.mxu0 %v495
    %1572 = vmatprep.subr.bf16.mxu0 0
    %1573 = vmatpush1.bf16.msra.mxu0 0
    %1574 = vmatprep.subr.bf16.mxu0 0
    %1575 = vmatpush1.bf16.msra.mxu0 0
    %1576 = vmatprep.subr.bf16.mxu0 0
    %1577 = vmatpush1.bf16.msra.mxu0 0
    %1578 = vmatprep.subr.bf16.mxu0 0
    %1579 = vmatpush1.bf16.msra.mxu0 0
    %1580 = vmatprep.subr.bf16.mxu0 0
    %1581 = vmatpush1.bf16.msra.mxu0 0
    %1582 = vmatprep.subr.bf16.mxu0 0
    %1583 = vmatpush1.bf16.msra.mxu0 0
    %1584 = vmatprep.subr.bf16.mxu0 0
    %1585 = vmatpush1.bf16.msra.mxu0 0
    %1586 = vmatprep.subr.bf16.mxu0 0
    %1587 = vmatpush1.bf16.msra.mxu0 0
    %1588 = vmatprep.mubr.bf16.mxu0 0
    %1589 = vmatmul.mubr.bf16.gmra.mrb[0].mxu0 %v1403
    %v1590 = vpop.f32.mrb[0].mxu0
    %v1591 = vadd.f32 0.0, %v1590
    %v1592 = vpop.f32.mrb[0].mxu0
    %v1593 = vadd.f32 0.0, %v1592
    %v1594 = vpop.f32.mrb[0].mxu0
    %v1595 = vpop.f32.mrb[0].mxu0
    %1596 = vdwg.mxu0
    %v1597 = vadd.f32 %v1511, %v1550
    %v1598 = vadd.f32 %v1512, %v1552
    %v1599 = vadd.f32 %v1513, %v1591
    %v1600 = vadd.f32 %v1514, %v1593
    %v1601 = vxor.u32 %v1597, 2147483648
    %v1602 = vxor.u32 %v1598, 2147483648
    %v1603 = vxor.u32 %v1599, 2147483648
    %v1604 = vmul.f32 %v1601, 1.442695
    %v1605 = vpow.pop %v1604
    %v1606 = vmul.f32 %v1602, 1.442695
    %v1607 = vpow.pop %v1606
    %v1608 = vmul.f32 %v1603, 1.442695
    %v1609 = vpow.pop %v1608
    %v1610 = vadd.f32 %v1605, 1.0
    %v1611 = vadd.f32 %v1607, 1.0
    %v1612 = vadd.f32 %v1609, 1.0
    %v1613 = vrcp.pop %v1610
    %v1614 = vmul.f32 1.0, %v1613
    %v1615 = vrcp.pop %v1611
    %v1616 = vmul.f32 1.0, %v1615
    %v1617 = vrcp.pop %v1612
    %v1618 = vmul.f32 1.0, %v1617
    %v1619 = vtanh.pop %v1600
    %v1620 = vmul.f32 %v1616, %v1400
    %v1621 = vmul.f32 %v1614, %v1619
    %v1622 = vadd.f32 %v1620, %v1621
    %v1623 = vtanh.pop %v1622
    %v1624 = vmul.f32 %v1618, %v1623
    %v1625 = vpack.c.bf16 %v1624, %v1624
    %1626 = vmatprep.subr.bf16.mxu0 %v833
    %1627 = vmatpush1.bf16.msra.mxu0 %v832
    %1628 = vmatprep.subr.bf16.mxu0 %v837
    %1629 = vmatpush1.bf16.msra.mxu0 %v836
    %1630 = vmatprep.subr.bf16.mxu0 %v841
    %1631 = vmatpush1.bf16.msra.mxu0 %v840
    %1632 = vmatprep.subr.bf16.mxu0 %v845
    %1633 = vmatpush1.bf16.msra.mxu0 %v844
    %1634 = vmatprep.subr.bf16.mxu0 %v849
    %1635 = vmatpush1.bf16.msra.mxu0 %v848
    %1636 = vmatprep.subr.bf16.mxu0 %v853
    %1637 = vmatpush1.bf16.msra.mxu0 %v852
    %1638 = vmatprep.subr.bf16.mxu0 %v857
    %1639 = vmatpush1.bf16.msra.mxu0 %v856
    %1640 = vmatprep.subr.bf16.mxu0 %v861
    %1641 = vmatpush1.bf16.msra.mxu0 %v860
    %1642 = vmatprep.subr.bf16.mxu0 %v865
    %1643 = vmatpush1.bf16.msra.mxu0 %v864
    %1644 = vmatprep.subr.bf16.mxu0 %v869
    %1645 = vmatpush1.bf16.msra.mxu0 %v868
    %1646 = vmatprep.subr.bf16.mxu0 %v873
    %1647 = vmatpush1.bf16.msra.mxu0 %v872
    %1648 = vmatprep.subr.bf16.mxu0 %v877
    %1649 = vmatpush1.bf16.msra.mxu0 %v876
    %1650 = vmatprep.subr.bf16.mxu0 %v881
    %1651 = vmatpush1.bf16.msra.mxu0 %v880
    %1652 = vmatprep.subr.bf16.mxu0 %v885
    %1653 = vmatpush1.bf16.msra.mxu0 %v884
    %1654 = vmatprep.subr.bf16.mxu0 %v889
    %1655 = vmatpush1.bf16.msra.mxu0 %v888
    %1656 = vmatprep.subr.bf16.mxu0 %v893
    %1657 = vmatpush1.bf16.msra.mxu0 %v892
    %1658 = vmatprep.mubr.bf16.mxu0 %v1510
    %1659 = vmatmul.mubr.bf16.gmra.mrb[0].mxu0 %v1625
    %v1660 = vpop.f32.mrb[0].mxu0
    %v1661 = vadd.f32 %v348, %v1660
    %v1662 = vpop.f32.mrb[0].mxu0
    %v1663 = vadd.f32 %v352, %v1662
    %v1664 = vpop.f32.mrb[0].mxu0
    %v1665 = vpop.f32.mrb[0].mxu0
    %1666 = vdwg.mxu0
    %1667 = vmatprep.subr.bf16.mxu0 %v835
    %1668 = vmatpush1.bf16.msra.mxu0 %v834
    %1669 = vmatprep.subr.bf16.mxu0 %v839
    %1670 = vmatpush1.bf16.msra.mxu0 %v838
    %1671 = vmatprep.subr.bf16.mxu0 %v843
    %1672 = vmatpush1.bf16.msra.mxu0 %v842
    %1673 = vmatprep.subr.bf16.mxu0 %v847
    %1674 = vmatpush1.bf16.msra.mxu0 %v846
    %1675 = vmatprep.subr.bf16.mxu0 %v851
    %1676 = vmatpush1.bf16.msra.mxu0 %v850
    %1677 = vmatprep.subr.bf16.mxu0 %v855
    %1678 = vmatpush1.bf16.msra.mxu0 %v854
    %1679 = vmatprep.subr.bf16.mxu0 %v859
    %1680 = vmatpush1.bf16.msra.mxu0 %v858
    %1681 = vmatprep.subr.bf16.mxu0 %v863
    %1682 = vmatpush1.bf16.msra.mxu0 %v862
    %1683 = vmatprep.subr.bf16.mxu0 %v867
    %1684 = vmatpush1.bf16.msra.mxu0 %v866
    %1685 = vmatprep.subr.bf16.mxu0 %v871
    %1686 = vmatpush1.bf16.msra.mxu0 %v870
    %1687 = vmatprep.subr.bf16.mxu0 %v875
    %1688 = vmatpush1.bf16.msra.mxu0 %v874
    %1689 = vmatprep.subr.bf16.mxu0 %v879
    %1690 = vmatpush1.bf16.msra.mxu0 %v878
    %1691 = vmatprep.subr.bf16.mxu0 %v883
    %1692 = vmatpush1.bf16.msra.mxu0 %v882
    %1693 = vmatprep.subr.bf16.mxu0 %v887
    %1694 = vmatpush1.bf16.msra.mxu0 %v886
    %1695 = vmatprep.subr.bf16.mxu0 %v891
    %1696 = vmatpush1.bf16.msra.mxu0 %v890
    %1697 = vmatprep.subr.bf16.mxu0 %v895
    %1698 = vmatpush1.bf16.msra.mxu0 %v894
    %1699 = vmatprep.mubr.bf16.mxu0 %v1510
    %1700 = vmatmul.mubr.bf16.gmra.mrb[0].mxu0 %v1625
    %v1701 = vpop.f32.mrb[0].mxu0
    %v1702 = vadd.f32 %v356, %v1701
    %v1703 = vpop.f32.mrb[0].mxu0
    %v1704 = vadd.f32 %v360, %v1703
    %v1705 = vpop.f32.mrb[0].mxu0
    %v1706 = vpop.f32.mrb[0].mxu0
    %1707 = vdwg.mxu0
    %v1708 = vxor.u32 %v1661, 2147483648
    %v1709 = vxor.u32 %v1663, 2147483648
    %v1710 = vxor.u32 %v1702, 2147483648
    %v1711 = vmul.f32 %v1708, 1.442695
    %v1712 = vpow.pop %v1711
    %v1713 = vmul.f32 %v1709, 1.442695
    %v1714 = vpow.pop %v1713
    %v1715 = vmul.f32 %v1710, 1.442695
    %v1716 = vpow.pop %v1715
    %v1717 = vadd.f32 %v1712, 1.0
    %v1718 = vadd.f32 %v1714, 1.0
    %v1719 = vadd.f32 %v1716, 1.0
    %v1720 = vrcp.pop %v1717
    %v1721 = vmul.f32 1.0, %v1720
    %v1722 = vrcp.pop %v1718
    %v1723 = vmul.f32 1.0, %v1722
    %v1724 = vrcp.pop %v1719
    %v1725 = vmul.f32 1.0, %v1724
    %v1726 = vtanh.pop %v1704
    %v1727 = vmul.f32 %v1723, %v1507
    %v1728 = vmul.f32 %v1721, %v1726
    %v1729 = vadd.f32 %v1727, %v1728
    %v1730 = vtanh.pop %v1729
    %v1731 = vmul.f32 %v1725, %v1730
    %v1732 = vpack.c.bf16 %v1731, %v1731
    %v1733 = vld [vmem:[#allocation2 + $0x80] sm:$0xff]
    %v1734 = vld [vmem:[#allocation2 + $0x88] sm:$0xff]
    %v1735 = vld [vmem:[#allocation2 + $0x90] sm:$0xff]
    %v1736 = vld [vmem:[#allocation2 + $0x98] sm:$0xff]
    %1737 = vmatprep.subr.bf16.mxu0 %v466
    %1738 = vmatpush1.bf16.msra.mxu0 %v465
    %1739 = vmatprep.subr.bf16.mxu0 %v470
    %1740 = vmatpush1.bf16.msra.mxu0 %v469
    %1741 = vmatprep.subr.bf16.mxu0 %v474
    %1742 = vmatpush1.bf16.msra.mxu0 %v473
    %1743 = vmatprep.subr.bf16.mxu0 %v478
    %1744 = vmatpush1.bf16.msra.mxu0 %v477
    %1745 = vmatprep.subr.bf16.mxu0 %v482
    %1746 = vmatpush1.bf16.msra.mxu0 %v481
    %1747 = vmatprep.subr.bf16.mxu0 %v486
    %1748 = vmatpush1.bf16.msra.mxu0 %v485
    %1749 = vmatprep.subr.bf16.mxu0 %v490
    %1750 = vmatpush1.bf16.msra.mxu0 %v489
    %1751 = vmatprep.subr.bf16.mxu0 %v494
    %1752 = vmatpush1.bf16.msra.mxu0 %v493
    %1753 = vmatprep.subr.bf16.mxu0 0
    %1754 = vmatpush1.bf16.msra.mxu0 0
    %1755 = vmatprep.subr.bf16.mxu0 0
    %1756 = vmatpush1.bf16.msra.mxu0 0
    %1757 = vmatprep.subr.bf16.mxu0 0
    %1758 = vmatpush1.bf16.msra.mxu0 0
    %1759 = vmatprep.subr.bf16.mxu0 0
    %1760 = vmatpush1.bf16.msra.mxu0 0
    %1761 = vmatprep.subr.bf16.mxu0 0
    %1762 = vmatpush1.bf16.msra.mxu0 0
    %1763 = vmatprep.subr.bf16.mxu0 0
    %1764 = vmatpush1.bf16.msra.mxu0 0
    %1765 = vmatprep.subr.bf16.mxu0 0
    %1766 = vmatpush1.bf16.msra.mxu0 0
    %1767 = vmatprep.subr.bf16.mxu0 0
    %1768 = vmatpush1.bf16.msra.mxu0 0
    %1769 = vmatprep.mubr.bf16.mxu0 0
    %1770 = vmatmul.mubr.bf16.gmra.mrb[0].mxu0 %v1625
    %v1771 = vpop.f32.mrb[0].mxu0
    %v1772 = vadd.f32 0.0, %v1771
    %v1773 = vpop.f32.mrb[0].mxu0
    %v1774 = vadd.f32 0.0, %v1773
    %v1775 = vpop.f32.mrb[0].mxu0
    %v1776 = vpop.f32.mrb[0].mxu0
    %1777 = vdwg.mxu0
    %1778 = vmatprep.subr.bf16.mxu0 %v468
    %1779 = vmatpush1.bf16.msra.mxu0 %v467
    %1780 = vmatprep.subr.bf16.mxu0 %v472
    %1781 = vmatpush1.bf16.msra.mxu0 %v471
    %1782 = vmatprep.subr.bf16.mxu0 %v476
    %1783 = vmatpush1.bf16.msra.mxu0 %v475
    %1784 = vmatprep.subr.bf16.mxu0 %v480
    %1785 = vmatpush1.bf16.msra.mxu0 %v479
    %1786 = vmatprep.subr.bf16.mxu0 %v484
    %1787 = vmatpush1.bf16.msra.mxu0 %v483
    %1788 = vmatprep.subr.bf16.mxu0 %v488
    %1789 = vmatpush1.bf16.msra.mxu0 %v487
    %1790 = vmatprep.subr.bf16.mxu0 %v492
    %1791 = vmatpush1.bf16.msra.mxu0 %v491
    %1792 = vmatprep.subr.bf16.mxu0 %v496
    %1793 = vmatpush1.bf16.msra.mxu0 %v495
    %1794 = vmatprep.subr.bf16.mxu0 0
    %1795 = vmatpush1.bf16.msra.mxu0 0
    %1796 = vmatprep.subr.bf16.mxu0 0
    %1797 = vmatpush1.bf16.msra.mxu0 0
    %1798 = vmatprep.subr.bf16.mxu0 0
    %1799 = vmatpush1.bf16.msra.mxu0 0
    %1800 = vmatprep.subr.bf16.mxu0 0
    %1801 = vmatpush1.bf16.msra.mxu0 0
    %1802 = vmatprep.subr.bf16.mxu0 0
    %1803 = vmatpush1.bf16.msra.mxu0 0
    %1804 = vmatprep.subr.bf16.mxu0 0
    %1805 = vmatpush1.bf16.msra.mxu0 0
    %1806 = vmatprep.subr.bf16.mxu0 0
    %1807 = vmatpush1.bf16.msra.mxu0 0
    %1808 = vmatprep.subr.bf16.mxu0 0
    %1809 = vmatpush1.bf16.msra.mxu0 0
    %1810 = vmatprep.mubr.bf16.mxu0 0
    %1811 = vmatmul.mubr.bf16.gmra.mrb[0].mxu0 %v1625
    %v1812 = vpop.f32.mrb[0].mxu0
    %v1813 = vadd.f32 0.0, %v1812
    %v1814 = vpop.f32.mrb[0].mxu0
    %v1815 = vadd.f32 0.0, %v1814
    %v1816 = vpop.f32.mrb[0].mxu0
    %v1817 = vpop.f32.mrb[0].mxu0
    %1818 = vdwg.mxu0
    %v1819 = vadd.f32 %v1733, %v1772
    %v1820 = vadd.f32 %v1734, %v1774
    %v1821 = vadd.f32 %v1735, %v1813
    %v1822 = vadd.f32 %v1736, %v1815
    %v1823 = vxor.u32 %v1819, 2147483648
    %v1824 = vxor.u32 %v1820, 2147483648
    %v1825 = vxor.u32 %v1821, 2147483648
    %v1826 = vmul.f32 %v1823, 1.442695
    %v1827 = vpow.pop %v1826
    %v1828 = vmul.f32 %v1824, 1.442695
    %v1829 = vpow.pop %v1828
    %v1830 = vmul.f32 %v1825, 1.442695
    %v1831 = vpow.pop %v1830
    %v1832 = vadd.f32 %v1827, 1.0
    %v1833 = vadd.f32 %v1829, 1.0
    %v1834 = vadd.f32 %v1831, 1.0
    %v1835 = vrcp.pop %v1832
    %v1836 = vmul.f32 1.0, %v1835
    %v1837 = vrcp.pop %v1833
    %v1838 = vmul.f32 1.0, %v1837
    %v1839 = vrcp.pop %v1834
    %v1840 = vmul.f32 1.0, %v1839
    %v1841 = vtanh.pop %v1822
    %v1842 = vmul.f32 %v1838, %v1622
    %v1843 = vmul.f32 %v1836, %v1841
    %v1844 = vadd.f32 %v1842, %v1843
    %v1845 = vtanh.pop %v1844
    %v1846 = vmul.f32 %v1840, %v1845
    %v1847 = vpack.c.bf16 %v1846, %v1846
    %1848 = vmatprep.subr.bf16.mxu0 %v833
    %1849 = vmatpush1.bf16.msra.mxu0 %v832
    %1850 = vmatprep.subr.bf16.mxu0 %v837
    %1851 = vmatpush1.bf16.msra.mxu0 %v836
    %1852 = vmatprep.subr.bf16.mxu0 %v841
    %1853 = vmatpush1.bf16.msra.mxu0 %v840
    %1854 = vmatprep.subr.bf16.mxu0 %v845
    %1855 = vmatpush1.bf16.msra.mxu0 %v844
    %1856 = vmatprep.subr.bf16.mxu0 %v849
    %1857 = vmatpush1.bf16.msra.mxu0 %v848
    %1858 = vmatprep.subr.bf16.mxu0 %v853
    %1859 = vmatpush1.bf16.msra.mxu0 %v852
    %1860 = vmatprep.subr.bf16.mxu0 %v857
    %1861 = vmatpush1.bf16.msra.mxu0 %v856
    %1862 = vmatprep.subr.bf16.mxu0 %v861
    %1863 = vmatpush1.bf16.msra.mxu0 %v860
    %1864 = vmatprep.subr.bf16.mxu0 %v865
    %1865 = vmatpush1.bf16.msra.mxu0 %v864
    %1866 = vmatprep.subr.bf16.mxu0 %v869
    %1867 = vmatpush1.bf16.msra.mxu0 %v868
    %1868 = vmatprep.subr.bf16.mxu0 %v873
    %1869 = vmatpush1.bf16.msra.mxu0 %v872
    %1870 = vmatprep.subr.bf16.mxu0 %v877
    %1871 = vmatpush1.bf16.msra.mxu0 %v876
    %1872 = vmatprep.subr.bf16.mxu0 %v881
    %1873 = vmatpush1.bf16.msra.mxu0 %v880
    %1874 = vmatprep.subr.bf16.mxu0 %v885
    %1875 = vmatpush1.bf16.msra.mxu0 %v884
    %1876 = vmatprep.subr.bf16.mxu0 %v889
    %1877 = vmatpush1.bf16.msra.mxu0 %v888
    %1878 = vmatprep.subr.bf16.mxu0 %v893
    %1879 = vmatpush1.bf16.msra.mxu0 %v892
    %1880 = vmatprep.mubr.bf16.mxu0 %v1732
    %1881 = vmatmul.mubr.bf16.gmra.mrb[0].mxu0 %v1847
    %v1882 = vpop.f32.mrb[0].mxu0
    %v1883 = vadd.f32 %v348, %v1882
    %v1884 = vpop.f32.mrb[0].mxu0
    %v1885 = vadd.f32 %v352, %v1884
    %v1886 = vpop.f32.mrb[0].mxu0
    %v1887 = vpop.f32.mrb[0].mxu0
    %1888 = vdwg.mxu0
    %1889 = vmatprep.subr.bf16.mxu0 %v835
    %1890 = vmatpush1.bf16.msra.mxu0 %v834
    %1891 = vmatprep.subr.bf16.mxu0 %v839
    %1892 = vmatpush1.bf16.msra.mxu0 %v838
    %1893 = vmatprep.subr.bf16.mxu0 %v843
    %1894 = vmatpush1.bf16.msra.mxu0 %v842
    %1895 = vmatprep.subr.bf16.mxu0 %v847
    %1896 = vmatpush1.bf16.msra.mxu0 %v846
    %1897 = vmatprep.subr.bf16.mxu0 %v851
    %1898 = vmatpush1.bf16.msra.mxu0 %v850
    %1899 = vmatprep.subr.bf16.mxu0 %v855
    %1900 = vmatpush1.bf16.msra.mxu0 %v854
    %1901 = vmatprep.subr.bf16.mxu0 %v859
    %1902 = vmatpush1.bf16.msra.mxu0 %v858
    %1903 = vmatprep.subr.bf16.mxu0 %v863
    %1904 = vmatpush1.bf16.msra.mxu0 %v862
    %1905 = vmatprep.subr.bf16.mxu0 %v867
    %1906 = vmatpush1.bf16.msra.mxu0 %v866
    %1907 = vmatprep.subr.bf16.mxu0 %v871
    %1908 = vmatpush1.bf16.msra.mxu0 %v870
    %1909 = vmatprep.subr.bf16.mxu0 %v875
    %1910 = vmatpush1.bf16.msra.mxu0 %v874
    %1911 = vmatprep.subr.bf16.mxu0 %v879
    %1912 = vmatpush1.bf16.msra.mxu0 %v878
    %1913 = vmatprep.subr.bf16.mxu0 %v883
    %1914 = vmatpush1.bf16.msra.mxu0 %v882
    %1915 = vmatprep.subr.bf16.mxu0 %v887
    %1916 = vmatpush1.bf16.msra.mxu0 %v886
    %1917 = vmatprep.subr.bf16.mxu0 %v891
    %1918 = vmatpush1.bf16.msra.mxu0 %v890
    %1919 = vmatprep.subr.bf16.mxu0 %v895
    %1920 = vmatpush1.bf16.msra.mxu0 %v894
    %1921 = vmatprep.mubr.bf16.mxu0 %v1732
    %1922 = vmatmul.mubr.bf16.gmra.mrb[0].mxu0 %v1847
    %v1923 = vpop.f32.mrb[0].mxu0
    %v1924 = vadd.f32 %v356, %v1923
    %v1925 = vpop.f32.mrb[0].mxu0
    %v1926 = vadd.f32 %v360, %v1925
    %v1927 = vpop.f32.mrb[0].mxu0
    %v1928 = vpop.f32.mrb[0].mxu0
    %1929 = vdwg.mxu0
    %v1930 = vxor.u32 %v1883, 2147483648
    %v1931 = vxor.u32 %v1885, 2147483648
    %v1932 = vxor.u32 %v1924, 2147483648
    %v1933 = vmul.f32 %v1930, 1.442695
    %v1934 = vpow.pop %v1933
    %v1935 = vmul.f32 %v1931, 1.442695
    %v1936 = vpow.pop %v1935
    %v1937 = vmul.f32 %v1932, 1.442695
    %v1938 = vpow.pop %v1937
    %v1939 = vadd.f32 %v1934, 1.0
    %v1940 = vadd.f32 %v1936, 1.0
    %v1941 = vadd.f32 %v1938, 1.0
    %v1942 = vrcp.pop %v1939
    %v1943 = vmul.f32 1.0, %v1942
    %v1944 = vrcp.pop %v1940
    %v1945 = vmul.f32 1.0, %v1944
    %v1946 = vrcp.pop %v1941
    %v1947 = vmul.f32 1.0, %v1946
    %v1948 = vtanh.pop %v1926
    %v1949 = vmul.f32 %v1945, %v1729
    %v1950 = vmul.f32 %v1943, %v1948
    %v1951 = vadd.f32 %v1949, %v1950
    %v1952 = vtanh.pop %v1951
    %v1953 = vmul.f32 %v1947, %v1952
    %v1954 = vpack.c.bf16 %v1953, %v1953
    %v1955 = vld [vmem:[#allocation2 + $0xa0] sm:$0xff]
    %v1956 = vld [vmem:[#allocation2 + $0xa8] sm:$0xff]
    %v1957 = vld [vmem:[#allocation2 + $0xb0] sm:$0xff]
    %v1958 = vld [vmem:[#allocation2 + $0xb8] sm:$0xff]
    %1959 = vmatprep.subr.bf16.mxu0 %v466
    %1960 = vmatpush1.bf16.msra.mxu0 %v465
    %1961 = vmatprep.subr.bf16.mxu0 %v470
    %1962 = vmatpush1.bf16.msra.mxu0 %v469
    %1963 = vmatprep.subr.bf16.mxu0 %v474
    %1964 = vmatpush1.bf16.msra.mxu0 %v473
    %1965 = vmatprep.subr.bf16.mxu0 %v478
    %1966 = vmatpush1.bf16.msra.mxu0 %v477
    %1967 = vmatprep.subr.bf16.mxu0 %v482
    %1968 = vmatpush1.bf16.msra.mxu0 %v481
    %1969 = vmatprep.subr.bf16.mxu0 %v486
    %1970 = vmatpush1.bf16.msra.mxu0 %v485
    %1971 = vmatprep.subr.bf16.mxu0 %v490
    %1972 = vmatpush1.bf16.msra.mxu0 %v489
    %1973 = vmatprep.subr.bf16.mxu0 %v494
    %1974 = vmatpush1.bf16.msra.mxu0 %v493
    %1975 = vmatprep.subr.bf16.mxu0 0
    %1976 = vmatpush1.bf16.msra.mxu0 0
    %1977 = vmatprep.subr.bf16.mxu0 0
    %1978 = vmatpush1.bf16.msra.mxu0 0
    %1979 = vmatprep.subr.bf16.mxu0 0
    %1980 = vmatpush1.bf16.msra.mxu0 0
    %1981 = vmatprep.subr.bf16.mxu0 0
    %1982 = vmatpush1.bf16.msra.mxu0 0
    %1983 = vmatprep.subr.bf16.mxu0 0
    %1984 = vmatpush1.bf16.msra.mxu0 0
    %1985 = vmatprep.subr.bf16.mxu0 0
    %1986 = vmatpush1.bf16.msra.mxu0 0
    %1987 = vmatprep.subr.bf16.mxu0 0
    %1988 = vmatpush1.bf16.msra.mxu0 0
    %1989 = vmatprep.subr.bf16.mxu0 0
    %1990 = vmatpush1.bf16.msra.mxu0 0
    %1991 = vmatprep.mubr.bf16.mxu0 0
    %1992 = vmatmul.mubr.bf16.gmra.mrb[0].mxu0 %v1847
    %v1993 = vpop.f32.mrb[0].mxu0
    %v1994 = vadd.f32 0.0, %v1993
    %v1995 = vpop.f32.mrb[0].mxu0
    %v1996 = vadd.f32 0.0, %v1995
    %v1997 = vpop.f32.mrb[0].mxu0
    %v1998 = vpop.f32.mrb[0].mxu0
    %1999 = vdwg.mxu0
    %2000 = vmatprep.subr.bf16.mxu0 %v468
    %2001 = vmatpush1.bf16.msra.mxu0 %v467
    %2002 = vmatprep.subr.bf16.mxu0 %v472
    %2003 = vmatpush1.bf16.msra.mxu0 %v471
    %2004 = vmatprep.subr.bf16.mxu0 %v476
    %2005 = vmatpush1.bf16.msra.mxu0 %v475
    %2006 = vmatprep.subr.bf16.mxu0 %v480
    %2007 = vmatpush1.bf16.msra.mxu0 %v479
    %2008 = vmatprep.subr.bf16.mxu0 %v484
    %2009 = vmatpush1.bf16.msra.mxu0 %v483
    %2010 = vmatprep.subr.bf16.mxu0 %v488
    %2011 = vmatpush1.bf16.msra.mxu0 %v487
    %2012 = vmatprep.subr.bf16.mxu0 %v492
    %2013 = vmatpush1.bf16.msra.mxu0 %v491
    %2014 = vmatprep.subr.bf16.mxu0 %v496
    %2015 = vmatpush1.bf16.msra.mxu0 %v495
    %2016 = vmatprep.subr.bf16.mxu0 0
    %2017 = vmatpush1.bf16.msra.mxu0 0
    %2018 = vmatprep.subr.bf16.mxu0 0
    %2019 = vmatpush1.bf16.msra.mxu0 0
    %2020 = vmatprep.subr.bf16.mxu0 0
    %2021 = vmatpush1.bf16.msra.mxu0 0
    %2022 = vmatprep.subr.bf16.mxu0 0
    %2023 = vmatpush1.bf16.msra.mxu0 0
    %2024 = vmatprep.subr.bf16.mxu0 0
    %2025 = vmatpush1.bf16.msra.mxu0 0
    %2026 = vmatprep.subr.bf16.mxu0 0
    %2027 = vmatpush1.bf16.msra.mxu0 0
    %2028 = vmatprep.subr.bf16.mxu0 0
    %2029 = vmatpush1.bf16.msra.mxu0 0
    %2030 = vmatprep.subr.bf16.mxu0 0
    %2031 = vmatpush1.bf16.msra.mxu0 0
    %2032 = vmatprep.mubr.bf16.mxu0 0
    %2033 = vmatmul.mubr.bf16.gmra.mrb[0].mxu0 %v1847
    %v2034 = vpop.f32.mrb[0].mxu0
    %v2035 = vadd.f32 0.0, %v2034
    %v2036 = vpop.f32.mrb[0].mxu0
    %v2037 = vadd.f32 0.0, %v2036
    %v2038 = vpop.f32.mrb[0].mxu0
    %v2039 = vpop.f32.mrb[0].mxu0
    %2040 = vdwg.mxu0
    %v2041 = vadd.f32 %v1955, %v1994
    %v2042 = vadd.f32 %v1956, %v1996
    %v2043 = vadd.f32 %v1957, %v2035
    %v2044 = vadd.f32 %v1958, %v2037
    %v2045 = vxor.u32 %v2041, 2147483648
    %v2046 = vxor.u32 %v2042, 2147483648
    %v2047 = vxor.u32 %v2043, 2147483648
    %v2048 = vmul.f32 %v2045, 1.442695
    %v2049 = vpow.pop %v2048
    %v2050 = vmul.f32 %v2046, 1.442695
    %v2051 = vpow.pop %v2050
    %v2052 = vmul.f32 %v2047, 1.442695
    %v2053 = vpow.pop %v2052
    %v2054 = vadd.f32 %v2049, 1.0
    %v2055 = vadd.f32 %v2051, 1.0
    %v2056 = vadd.f32 %v2053, 1.0
    %v2057 = vrcp.pop %v2054
    %v2058 = vmul.f32 1.0, %v2057
    %v2059 = vrcp.pop %v2055
    %v2060 = vmul.f32 1.0, %v2059
    %v2061 = vrcp.pop %v2056
    %v2062 = vmul.f32 1.0, %v2061
    %v2063 = vtanh.pop %v2044
    %v2064 = vmul.f32 %v2060, %v1844
    %v2065 = vmul.f32 %v2058, %v2063
    %v2066 = vadd.f32 %v2064, %v2065
    %v2067 = vtanh.pop %v2066
    %v2068 = vmul.f32 %v2062, %v2067
    %v2069 = vpack.c.bf16 %v2068, %v2068
    %2070 = vmatprep.subr.bf16.mxu0 %v833
    %2071 = vmatpush1.bf16.msra.mxu0 %v832
    %2072 = vmatprep.subr.bf16.mxu0 %v837
    %2073 = vmatpush1.bf16.msra.mxu0 %v836
    %2074 = vmatprep.subr.bf16.mxu0 %v841
    %2075 = vmatpush1.bf16.msra.mxu0 %v840
    %2076 = vmatprep.subr.bf16.mxu0 %v845
    %2077 = vmatpush1.bf16.msra.mxu0 %v844
    %2078 = vmatprep.subr.bf16.mxu0 %v849
    %2079 = vmatpush1.bf16.msra.mxu0 %v848
    %2080 = vmatprep.subr.bf16.mxu0 %v853
    %2081 = vmatpush1.bf16.msra.mxu0 %v852
    %2082 = vmatprep.subr.bf16.mxu0 %v857
    %2083 = vmatpush1.bf16.msra.mxu0 %v856
    %2084 = vmatprep.subr.bf16.mxu0 %v861
    %2085 = vmatpush1.bf16.msra.mxu0 %v860
    %2086 = vmatprep.subr.bf16.mxu0 %v865
    %2087 = vmatpush1.bf16.msra.mxu0 %v864
    %2088 = vmatprep.subr.bf16.mxu0 %v869
    %2089 = vmatpush1.bf16.msra.mxu0 %v868
    %2090 = vmatprep.subr.bf16.mxu0 %v873
    %2091 = vmatpush1.bf16.msra.mxu0 %v872
    %2092 = vmatprep.subr.bf16.mxu0 %v877
    %2093 = vmatpush1.bf16.msra.mxu0 %v876
    %2094 = vmatprep.subr.bf16.mxu0 %v881
    %2095 = vmatpush1.bf16.msra.mxu0 %v880
    %2096 = vmatprep.subr.bf16.mxu0 %v885
    %2097 = vmatpush1.bf16.msra.mxu0 %v884
    %2098 = vmatprep.subr.bf16.mxu0 %v889
    %2099 = vmatpush1.bf16.msra.mxu0 %v888
    %2100 = vmatprep.subr.bf16.mxu0 %v893
    %2101 = vmatpush1.bf16.msra.mxu0 %v892
    %2102 = vmatprep.mubr.bf16.mxu0 %v1954
    %2103 = vmatmul.mubr.bf16.gmra.mrb[0].mxu0 %v2069
    %v2104 = vpop.f32.mrb[0].mxu0
    %v2105 = vadd.f32 %v348, %v2104
    %v2106 = vpop.f32.mrb[0].mxu0
    %v2107 = vadd.f32 %v352, %v2106
    %v2108 = vpop.f32.mrb[0].mxu0
    %v2109 = vpop.f32.mrb[0].mxu0
    %2110 = vdwg.mxu0
    %2111 = vmatprep.subr.bf16.mxu0 %v835
    %2112 = vmatpush1.bf16.msra.mxu0 %v834
    %2113 = vmatprep.subr.bf16.mxu0 %v839
    %2114 = vmatpush1.bf16.msra.mxu0 %v838
    %2115 = vmatprep.subr.bf16.mxu0 %v843
    %2116 = vmatpush1.bf16.msra.mxu0 %v842
    %2117 = vmatprep.subr.bf16.mxu0 %v847
    %2118 = vmatpush1.bf16.msra.mxu0 %v846
    %2119 = vmatprep.subr.bf16.mxu0 %v851
    %2120 = vmatpush1.bf16.msra.mxu0 %v850
    %2121 = vmatprep.subr.bf16.mxu0 %v855
    %2122 = vmatpush1.bf16.msra.mxu0 %v854
    %2123 = vmatprep.subr.bf16.mxu0 %v859
    %2124 = vmatpush1.bf16.msra.mxu0 %v858
    %2125 = vmatprep.subr.bf16.mxu0 %v863
    %2126 = vmatpush1.bf16.msra.mxu0 %v862
    %2127 = vmatprep.subr.bf16.mxu0 %v867
    %2128 = vmatpush1.bf16.msra.mxu0 %v866
    %2129 = vmatprep.subr.bf16.mxu0 %v871
    %2130 = vmatpush1.bf16.msra.mxu0 %v870
    %2131 = vmatprep.subr.bf16.mxu0 %v875
    %2132 = vmatpush1.bf16.msra.mxu0 %v874
    %2133 = vmatprep.subr.bf16.mxu0 %v879
    %2134 = vmatpush1.bf16.msra.mxu0 %v878
    %2135 = vmatprep.subr.bf16.mxu0 %v883
    %2136 = vmatpush1.bf16.msra.mxu0 %v882
    %2137 = vmatprep.subr.bf16.mxu0 %v887
    %2138 = vmatpush1.bf16.msra.mxu0 %v886
    %2139 = vmatprep.subr.bf16.mxu0 %v891
    %2140 = vmatpush1.bf16.msra.mxu0 %v890
    %2141 = vmatprep.subr.bf16.mxu0 %v895
    %2142 = vmatpush1.bf16.msra.mxu0 %v894
    %2143 = vmatprep.mubr.bf16.mxu0 %v1954
    %2144 = vmatmul.mubr.bf16.gmra.mrb[0].mxu0 %v2069
    %v2145 = vpop.f32.mrb[0].mxu0
    %v2146 = vadd.f32 %v356, %v2145
    %v2147 = vpop.f32.mrb[0].mxu0
    %v2148 = vadd.f32 %v360, %v2147
    %v2149 = vpop.f32.mrb[0].mxu0
    %v2150 = vpop.f32.mrb[0].mxu0
    %2151 = vdwg.mxu0
    %v2152 = vxor.u32 %v2105, 2147483648
    %v2153 = vxor.u32 %v2107, 2147483648
    %v2154 = vxor.u32 %v2146, 2147483648
    %v2155 = vmul.f32 %v2152, 1.442695
    %v2156 = vpow.pop %v2155
    %v2157 = vmul.f32 %v2153, 1.442695
    %v2158 = vpow.pop %v2157
    %v2159 = vmul.f32 %v2154, 1.442695
    %v2160 = vpow.pop %v2159
    %v2161 = vadd.f32 %v2156, 1.0
    %v2162 = vadd.f32 %v2158, 1.0
    %v2163 = vadd.f32 %v2160, 1.0
    %v2164 = vrcp.pop %v2161
    %v2165 = vmul.f32 1.0, %v2164
    %v2166 = vrcp.pop %v2162
    %v2167 = vmul.f32 1.0, %v2166
    %v2168 = vrcp.pop %v2163
    %v2169 = vmul.f32 1.0, %v2168
    %v2170 = vtanh.pop %v2148
    %v2171 = vmul.f32 %v2167, %v1951
    %v2172 = vmul.f32 %v2165, %v2170
    %v2173 = vadd.f32 %v2171, %v2172
    %v2174 = vtanh.pop %v2173
    %v2175 = vmul.f32 %v2169, %v2174
    %v2176 = vpack.c.bf16 %v2175, %v2175
    %v2177 = vld [vmem:[#allocation2 + $0xc0] sm:$0xff]
    %v2178 = vld [vmem:[#allocation2 + $0xc8] sm:$0xff]
    %v2179 = vld [vmem:[#allocation2 + $0xd0] sm:$0xff]
    %v2180 = vld [vmem:[#allocation2 + $0xd8] sm:$0xff]
    %2181 = vmatprep.subr.bf16.mxu0 %v466
    %2182 = vmatpush1.bf16.msra.mxu0 %v465
    %2183 = vmatprep.subr.bf16.mxu0 %v470
    %2184 = vmatpush1.bf16.msra.mxu0 %v469
    %2185 = vmatprep.subr.bf16.mxu0 %v474
    %2186 = vmatpush1.bf16.msra.mxu0 %v473
    %2187 = vmatprep.subr.bf16.mxu0 %v478
    %2188 = vmatpush1.bf16.msra.mxu0 %v477
    %2189 = vmatprep.subr.bf16.mxu0 %v482
    %2190 = vmatpush1.bf16.msra.mxu0 %v481
    %2191 = vmatprep.subr.bf16.mxu0 %v486
    %2192 = vmatpush1.bf16.msra.mxu0 %v485
    %2193 = vmatprep.subr.bf16.mxu0 %v490
    %2194 = vmatpush1.bf16.msra.mxu0 %v489
    %2195 = vmatprep.subr.bf16.mxu0 %v494
    %2196 = vmatpush1.bf16.msra.mxu0 %v493
    %2197 = vmatprep.subr.bf16.mxu0 0
    %2198 = vmatpush1.bf16.msra.mxu0 0
    %2199 = vmatprep.subr.bf16.mxu0 0
    %2200 = vmatpush1.bf16.msra.mxu0 0
    %2201 = vmatprep.subr.bf16.mxu0 0
    %2202 = vmatpush1.bf16.msra.mxu0 0
    %2203 = vmatprep.subr.bf16.mxu0 0
    %2204 = vmatpush1.bf16.msra.mxu0 0
    %2205 = vmatprep.subr.bf16.mxu0 0
    %2206 = vmatpush1.bf16.msra.mxu0 0
    %2207 = vmatprep.subr.bf16.mxu0 0
    %2208 = vmatpush1.bf16.msra.mxu0 0
    %2209 = vmatprep.subr.bf16.mxu0 0
    %2210 = vmatpush1.bf16.msra.mxu0 0
    %2211 = vmatprep.subr.bf16.mxu0 0
    %2212 = vmatpush1.bf16.msra.mxu0 0
    %2213 = vmatprep.mubr.bf16.mxu0 0
    %2214 = vmatmul.mubr.bf16.gmra.mrb[0].mxu0 %v2069
    %v2215 = vpop.f32.mrb[0].mxu0
    %v2216 = vadd.f32 0.0, %v2215
    %v2217 = vpop.f32.mrb[0].mxu0
    %v2218 = vadd.f32 0.0, %v2217
    %v2219 = vpop.f32.mrb[0].mxu0
    %v2220 = vpop.f32.mrb[0].mxu0
    %2221 = vdwg.mxu0
    %2222 = vmatprep.subr.bf16.mxu0 %v468
    %2223 = vmatpush1.bf16.msra.mxu0 %v467
    %2224 = vmatprep.subr.bf16.mxu0 %v472
    %2225 = vmatpush1.bf16.msra.mxu0 %v471
    %2226 = vmatprep.subr.bf16.mxu0 %v476
    %2227 = vmatpush1.bf16.msra.mxu0 %v475
    %2228 = vmatprep.subr.bf16.mxu0 %v480
    %2229 = vmatpush1.bf16.msra.mxu0 %v479
    %2230 = vmatprep.subr.bf16.mxu0 %v484
    %2231 = vmatpush1.bf16.msra.mxu0 %v483
    %2232 = vmatprep.subr.bf16.mxu0 %v488
    %2233 = vmatpush1.bf16.msra.mxu0 %v487
    %2234 = vmatprep.subr.bf16.mxu0 %v492
    %2235 = vmatpush1.bf16.msra.mxu0 %v491
    %2236 = vmatprep.subr.bf16.mxu0 %v496
    %2237 = vmatpush1.bf16.msra.mxu0 %v495
    %2238 = vmatprep.subr.bf16.mxu0 0
    %2239 = vmatpush1.bf16.msra.mxu0 0
    %2240 = vmatprep.subr.bf16.mxu0 0
    %2241 = vmatpush1.bf16.msra.mxu0 0
    %2242 = vmatprep.subr.bf16.mxu0 0
    %2243 = vmatpush1.bf16.msra.mxu0 0
    %2244 = vmatprep.subr.bf16.mxu0 0
    %2245 = vmatpush1.bf16.msra.mxu0 0
    %2246 = vmatprep.subr.bf16.mxu0 0
    %2247 = vmatpush1.bf16.msra.mxu0 0
    %2248 = vmatprep.subr.bf16.mxu0 0
    %2249 = vmatpush1.bf16.msra.mxu0 0
    %2250 = vmatprep.subr.bf16.mxu0 0
    %2251 = vmatpush1.bf16.msra.mxu0 0
    %2252 = vmatprep.subr.bf16.mxu0 0
    %2253 = vmatpush1.bf16.msra.mxu0 0
    %2254 = vmatprep.mubr.bf16.mxu0 0
    %2255 = vmatmul.mubr.bf16.gmra.mrb[0].mxu0 %v2069
    %v2256 = vpop.f32.mrb[0].mxu0
    %v2257 = vadd.f32 0.0, %v2256
    %v2258 = vpop.f32.mrb[0].mxu0
    %v2259 = vadd.f32 0.0, %v2258
    %v2260 = vpop.f32.mrb[0].mxu0
    %v2261 = vpop.f32.mrb[0].mxu0
    %2262 = vdwg.mxu0
    %v2263 = vadd.f32 %v2177, %v2216
    %v2264 = vadd.f32 %v2178, %v2218
    %v2265 = vadd.f32 %v2179, %v2257
    %v2266 = vadd.f32 %v2180, %v2259
    %v2267 = vxor.u32 %v2263, 2147483648
    %v2268 = vxor.u32 %v2264, 2147483648
    %v2269 = vxor.u32 %v2265, 2147483648
    %v2270 = vmul.f32 %v2267, 1.442695
    %v2271 = vpow.pop %v2270
    %v2272 = vmul.f32 %v2268, 1.442695
    %v2273 = vpow.pop %v2272
    %v2274 = vmul.f32 %v2269, 1.442695
    %v2275 = vpow.pop %v2274
    %v2276 = vadd.f32 %v2271, 1.0
    %v2277 = vadd.f32 %v2273, 1.0
    %v2278 = vadd.f32 %v2275, 1.0
    %v2279 = vrcp.pop %v2276
    %v2280 = vmul.f32 1.0, %v2279
    %v2281 = vrcp.pop %v2277
    %v2282 = vmul.f32 1.0, %v2281
    %v2283 = vrcp.pop %v2278
    %v2284 = vmul.f32 1.0, %v2283
    %v2285 = vtanh.pop %v2266
    %v2286 = vmul.f32 %v2282, %v2066
    %v2287 = vmul.f32 %v2280, %v2285
    %v2288 = vadd.f32 %v2286, %v2287
    %v2289 = vtanh.pop %v2288
    %v2290 = vmul.f32 %v2284, %v2289
    %v2291 = vpack.c.bf16 %v2290, %v2290
    %2292 = vmatprep.subr.bf16.mxu0 %v833
    %2293 = vmatpush1.bf16.msra.mxu0 %v832
    %2294 = vmatprep.subr.bf16.mxu0 %v837
    %2295 = vmatpush1.bf16.msra.mxu0 %v836
    %2296 = vmatprep.subr.bf16.mxu0 %v841
    %2297 = vmatpush1.bf16.msra.mxu0 %v840
    %2298 = vmatprep.subr.bf16.mxu0 %v845
    %2299 = vmatpush1.bf16.msra.mxu0 %v844
    %2300 = vmatprep.subr.bf16.mxu0 %v849
    %2301 = vmatpush1.bf16.msra.mxu0 %v848
    %2302 = vmatprep.subr.bf16.mxu0 %v853
    %2303 = vmatpush1.bf16.msra.mxu0 %v852
    %2304 = vmatprep.subr.bf16.mxu0 %v857
    %2305 = vmatpush1.bf16.msra.mxu0 %v856
    %2306 = vmatprep.subr.bf16.mxu0 %v861
    %2307 = vmatpush1.bf16.msra.mxu0 %v860
    %2308 = vmatprep.subr.bf16.mxu0 %v865
    %2309 = vmatpush1.bf16.msra.mxu0 %v864
    %2310 = vmatprep.subr.bf16.mxu0 %v869
    %2311 = vmatpush1.bf16.msra.mxu0 %v868
    %2312 = vmatprep.subr.bf16.mxu0 %v873
    %2313 = vmatpush1.bf16.msra.mxu0 %v872
    %2314 = vmatprep.subr.bf16.mxu0 %v877
    %2315 = vmatpush1.bf16.msra.mxu0 %v876
    %2316 = vmatprep.subr.bf16.mxu0 %v881
    %2317 = vmatpush1.bf16.msra.mxu0 %v880
    %2318 = vmatprep.subr.bf16.mxu0 %v885
    %2319 = vmatpush1.bf16.msra.mxu0 %v884
    %2320 = vmatprep.subr.bf16.mxu0 %v889
    %2321 = vmatpush1.bf16.msra.mxu0 %v888
    %2322 = vmatprep.subr.bf16.mxu0 %v893
    %2323 = vmatpush1.bf16.msra.mxu0 %v892
    %2324 = vmatprep.mubr.bf16.mxu0 %v2176
    %2325 = vmatmul.mubr.bf16.gmra.mrb[0].mxu0 %v2291
    %v2326 = vpop.f32.mrb[0].mxu0
    %v2327 = vadd.f32 %v348, %v2326
    %v2328 = vpop.f32.mrb[0].mxu0
    %v2329 = vadd.f32 %v352, %v2328
    %v2330 = vpop.f32.mrb[0].mxu0
    %v2331 = vpop.f32.mrb[0].mxu0
    %2332 = vdwg.mxu0
    %2333 = vmatprep.subr.bf16.mxu0 %v835
    %2334 = vmatpush1.bf16.msra.mxu0 %v834
    %2335 = vmatprep.subr.bf16.mxu0 %v839
    %2336 = vmatpush1.bf16.msra.mxu0 %v838
    %2337 = vmatprep.subr.bf16.mxu0 %v843
    %2338 = vmatpush1.bf16.msra.mxu0 %v842
    %2339 = vmatprep.subr.bf16.mxu0 %v847
    %2340 = vmatpush1.bf16.msra.mxu0 %v846
    %2341 = vmatprep.subr.bf16.mxu0 %v851
    %2342 = vmatpush1.bf16.msra.mxu0 %v850
    %2343 = vmatprep.subr.bf16.mxu0 %v855
    %2344 = vmatpush1.bf16.msra.mxu0 %v854
    %2345 = vmatprep.subr.bf16.mxu0 %v859
    %2346 = vmatpush1.bf16.msra.mxu0 %v858
    %2347 = vmatprep.subr.bf16.mxu0 %v863
    %2348 = vmatpush1.bf16.msra.mxu0 %v862
    %2349 = vmatprep.subr.bf16.mxu0 %v867
    %2350 = vmatpush1.bf16.msra.mxu0 %v866
    %2351 = vmatprep.subr.bf16.mxu0 %v871
    %2352 = vmatpush1.bf16.msra.mxu0 %v870
    %2353 = vmatprep.subr.bf16.mxu0 %v875
    %2354 = vmatpush1.bf16.msra.mxu0 %v874
    %2355 = vmatprep.subr.bf16.mxu0 %v879
    %2356 = vmatpush1.bf16.msra.mxu0 %v878
    %2357 = vmatprep.subr.bf16.mxu0 %v883
    %2358 = vmatpush1.bf16.msra.mxu0 %v882
    %2359 = vmatprep.subr.bf16.mxu0 %v887
    %2360 = vmatpush1.bf16.msra.mxu0 %v886
    %2361 = vmatprep.subr.bf16.mxu0 %v891
    %2362 = vmatpush1.bf16.msra.mxu0 %v890
    %2363 = vmatprep.subr.bf16.mxu0 %v895
    %2364 = vmatpush1.bf16.msra.mxu0 %v894
    %2365 = vmatprep.mubr.bf16.mxu0 %v2176
    %2366 = vmatmul.mubr.bf16.gmra.mrb[0].mxu0 %v2291
    %v2367 = vpop.f32.mrb[0].mxu0
    %v2368 = vadd.f32 %v356, %v2367
    %v2369 = vpop.f32.mrb[0].mxu0
    %v2370 = vadd.f32 %v360, %v2369
    %v2371 = vpop.f32.mrb[0].mxu0
    %v2372 = vpop.f32.mrb[0].mxu0
    %2373 = vdwg.mxu0
    %v2374 = vxor.u32 %v2327, 2147483648
    %v2375 = vxor.u32 %v2329, 2147483648
    %v2376 = vxor.u32 %v2368, 2147483648
    %v2377 = vmul.f32 %v2374, 1.442695
    %v2378 = vpow.pop %v2377
    %v2379 = vmul.f32 %v2375, 1.442695
    %v2380 = vpow.pop %v2379
    %v2381 = vmul.f32 %v2376, 1.442695
    %v2382 = vpow.pop %v2381
    %v2383 = vadd.f32 %v2378, 1.0
    %v2384 = vadd.f32 %v2380, 1.0
    %v2385 = vadd.f32 %v2382, 1.0
    %v2386 = vrcp.pop %v2383
    %v2387 = vmul.f32 1.0, %v2386
    %v2388 = vrcp.pop %v2384
    %v2389 = vmul.f32 1.0, %v2388
    %v2390 = vrcp.pop %v2385
    %v2391 = vmul.f32 1.0, %v2390
    %v2392 = vtanh.pop %v2370
    %v2393 = vmul.f32 %v2389, %v2173
    %v2394 = vmul.f32 %v2387, %v2392
    %v2395 = vadd.f32 %v2393, %v2394
    %v2396 = vtanh.pop %v2395
    %v2397 = vmul.f32 %v2391, %v2396
    %v2398 = vpack.c.bf16 %v2397, %v2397
    %v2399 = vld [vmem:[#allocation2 + $0xe0] sm:$0xff]
    %v2400 = vld [vmem:[#allocation2 + $0xe8] sm:$0xff]
    %v2401 = vld [vmem:[#allocation2 + $0xf0] sm:$0xff]
    %v2402 = vld [vmem:[#allocation2 + $0xf8] sm:$0xff]
    %2403 = vmatprep.subr.bf16.mxu0 %v466
    %2404 = vmatpush1.bf16.msra.mxu0 %v465
    %2405 = vmatprep.subr.bf16.mxu0 %v470
    %2406 = vmatpush1.bf16.msra.mxu0 %v469
    %2407 = vmatprep.subr.bf16.mxu0 %v474
    %2408 = vmatpush1.bf16.msra.mxu0 %v473
    %2409 = vmatprep.subr.bf16.mxu0 %v478
    %2410 = vmatpush1.bf16.msra.mxu0 %v477
    %2411 = vmatprep.subr.bf16.mxu0 %v482
    %2412 = vmatpush1.bf16.msra.mxu0 %v481
    %2413 = vmatprep.subr.bf16.mxu0 %v486
    %2414 = vmatpush1.bf16.msra.mxu0 %v485
    %2415 = vmatprep.subr.bf16.mxu0 %v490
    %2416 = vmatpush1.bf16.msra.mxu0 %v489
    %2417 = vmatprep.subr.bf16.mxu0 %v494
    %2418 = vmatpush1.bf16.msra.mxu0 %v493
    %2419 = vmatprep.subr.bf16.mxu0 0
    %2420 = vmatpush1.bf16.msra.mxu0 0
    %2421 = vmatprep.subr.bf16.mxu0 0
    %2422 = vmatpush1.bf16.msra.mxu0 0
    %2423 = vmatprep.subr.bf16.mxu0 0
    %2424 = vmatpush1.bf16.msra.mxu0 0
    %2425 = vmatprep.subr.bf16.mxu0 0
    %2426 = vmatpush1.bf16.msra.mxu0 0
    %2427 = vmatprep.subr.bf16.mxu0 0
    %2428 = vmatpush1.bf16.msra.mxu0 0
    %2429 = vmatprep.subr.bf16.mxu0 0
    %2430 = vmatpush1.bf16.msra.mxu0 0
    %2431 = vmatprep.subr.bf16.mxu0 0
    %2432 = vmatpush1.bf16.msra.mxu0 0
    %2433 = vmatprep.subr.bf16.mxu0 0
    %2434 = vmatpush1.bf16.msra.mxu0 0
    %2435 = vmatprep.mubr.bf16.mxu0 0
    %2436 = vmatmul.mubr.bf16.gmra.mrb[0].mxu0 %v2291
    %v2437 = vpop.f32.mrb[0].mxu0
    %v2438 = vadd.f32 0.0, %v2437
    %v2439 = vpop.f32.mrb[0].mxu0
    %v2440 = vadd.f32 0.0, %v2439
    %v2441 = vpop.f32.mrb[0].mxu0
    %v2442 = vpop.f32.mrb[0].mxu0
    %2443 = vdwg.mxu0
    %2444 = vmatprep.subr.bf16.mxu0 %v468
    %2445 = vmatpush1.bf16.msra.mxu0 %v467
    %2446 = vmatprep.subr.bf16.mxu0 %v472
    %2447 = vmatpush1.bf16.msra.mxu0 %v471
    %2448 = vmatprep.subr.bf16.mxu0 %v476
    %2449 = vmatpush1.bf16.msra.mxu0 %v475
    %2450 = vmatprep.subr.bf16.mxu0 %v480
    %2451 = vmatpush1.bf16.msra.mxu0 %v479
    %2452 = vmatprep.subr.bf16.mxu0 %v484
    %2453 = vmatpush1.bf16.msra.mxu0 %v483
    %2454 = vmatprep.subr.bf16.mxu0 %v488
    %2455 = vmatpush1.bf16.msra.mxu0 %v487
    %2456 = vmatprep.subr.bf16.mxu0 %v492
    %2457 = vmatpush1.bf16.msra.mxu0 %v491
    %2458 = vmatprep.subr.bf16.mxu0 %v496
    %2459 = vmatpush1.bf16.msra.mxu0 %v495
    %2460 = vmatprep.subr.bf16.mxu0 0
    %2461 = vmatpush1.bf16.msra.mxu0 0
    %2462 = vmatprep.subr.bf16.mxu0 0
    %2463 = vmatpush1.bf16.msra.mxu0 0
    %2464 = vmatprep.subr.bf16.mxu0 0
    %2465 = vmatpush1.bf16.msra.mxu0 0
    %2466 = vmatprep.subr.bf16.mxu0 0
    %2467 = vmatpush1.bf16.msra.mxu0 0
    %2468 = vmatprep.subr.bf16.mxu0 0
    %2469 = vmatpush1.bf16.msra.mxu0 0
    %2470 = vmatprep.subr.bf16.mxu0 0
    %2471 = vmatpush1.bf16.msra.mxu0 0
    %2472 = vmatprep.subr.bf16.mxu0 0
    %2473 = vmatpush1.bf16.msra.mxu0 0
    %2474 = vmatprep.subr.bf16.mxu0 0
    %2475 = vmatpush1.bf16.msra.mxu0 0
    %2476 = vmatprep.mubr.bf16.mxu0 0
    %2477 = vmatmul.mubr.bf16.gmra.mrb[0].mxu0 %v2291
    %v2478 = vpop.f32.mrb[0].mxu0
    %v2479 = vadd.f32 0.0, %v2478
    %v2480 = vpop.f32.mrb[0].mxu0
    %v2481 = vadd.f32 0.0, %v2480
    %v2482 = vpop.f32.mrb[0].mxu0
    %v2483 = vpop.f32.mrb[0].mxu0
    %2484 = vdwg.mxu0
    %v2485 = vadd.f32 %v2399, %v2438
    %v2486 = vadd.f32 %v2400, %v2440
    %v2487 = vadd.f32 %v2401, %v2479
    %v2488 = vadd.f32 %v2402, %v2481
    %v2489 = vxor.u32 %v2485, 2147483648
    %v2490 = vxor.u32 %v2486, 2147483648
    %v2491 = vxor.u32 %v2487, 2147483648
    %v2492 = vmul.f32 %v2489, 1.442695
    %v2493 = vpow.pop %v2492
    %v2494 = vmul.f32 %v2490, 1.442695
    %v2495 = vpow.pop %v2494
    %v2496 = vmul.f32 %v2491, 1.442695
    %v2497 = vpow.pop %v2496
    %v2498 = vadd.f32 %v2493, 1.0
    %v2499 = vadd.f32 %v2495, 1.0
    %v2500 = vadd.f32 %v2497, 1.0
    %v2501 = vrcp.pop %v2498
    %v2502 = vmul.f32 1.0, %v2501
    %v2503 = vrcp.pop %v2499
    %v2504 = vmul.f32 1.0, %v2503
    %v2505 = vrcp.pop %v2500
    %v2506 = vmul.f32 1.0, %v2505
    %v2507 = vtanh.pop %v2488
    %v2508 = vmul.f32 %v2504, %v2288
    %v2509 = vmul.f32 %v2502, %v2507
    %v2510 = vadd.f32 %v2508, %v2509
    %v2511 = vtanh.pop %v2510
    %v2512 = vmul.f32 %v2506, %v2511
    %v2513 = vpack.c.bf16 %v2512, %v2512
    %2514 = vmatprep.subr.bf16.mxu0 %v833
    %2515 = vmatpush1.bf16.msra.mxu0 %v832
    %2516 = vmatprep.subr.bf16.mxu0 %v837
    %2517 = vmatpush1.bf16.msra.mxu0 %v836
    %2518 = vmatprep.subr.bf16.mxu0 %v841
    %2519 = vmatpush1.bf16.msra.mxu0 %v840
    %2520 = vmatprep.subr.bf16.mxu0 %v845
    %2521 = vmatpush1.bf16.msra.mxu0 %v844
    %2522 = vmatprep.subr.bf16.mxu0 %v849
    %2523 = vmatpush1.bf16.msra.mxu0 %v848
    %2524 = vmatprep.subr.bf16.mxu0 %v853
    %2525 = vmatpush1.bf16.msra.mxu0 %v852
    %2526 = vmatprep.subr.bf16.mxu0 %v857
    %2527 = vmatpush1.bf16.msra.mxu0 %v856
    %2528 = vmatprep.subr.bf16.mxu0 %v861
    %2529 = vmatpush1.bf16.msra.mxu0 %v860
    %2530 = vmatprep.subr.bf16.mxu0 %v865
    %2531 = vmatpush1.bf16.msra.mxu0 %v864
    %2532 = vmatprep.subr.bf16.mxu0 %v869
    %2533 = vmatpush1.bf16.msra.mxu0 %v868
    %2534 = vmatprep.subr.bf16.mxu0 %v873
    %2535 = vmatpush1.bf16.msra.mxu0 %v872
    %2536 = vmatprep.subr.bf16.mxu0 %v877
    %2537 = vmatpush1.bf16.msra.mxu0 %v876
    %2538 = vmatprep.subr.bf16.mxu0 %v881
    %2539 = vmatpush1.bf16.msra.mxu0 %v880
    %2540 = vmatprep.subr.bf16.mxu0 %v885
    %2541 = vmatpush1.bf16.msra.mxu0 %v884
    %2542 = vmatprep.subr.bf16.mxu0 %v889
    %2543 = vmatpush1.bf16.msra.mxu0 %v888
    %2544 = vmatprep.subr.bf16.mxu0 %v893
    %2545 = vmatpush1.bf16.msra.mxu0 %v892
    %2546 = vmatprep.mubr.bf16.mxu0 %v2398
    %2547 = vmatmul.mubr.bf16.gmra.mrb[0].mxu0 %v2513
    %v2548 = vpop.f32.mrb[0].mxu0
    %v2549 = vadd.f32 %v348, %v2548
    %v2550 = vpop.f32.mrb[0].mxu0
    %v2551 = vadd.f32 %v352, %v2550
    %v2552 = vpop.f32.mrb[0].mxu0
    %v2553 = vpop.f32.mrb[0].mxu0
    %2554 = vdwg.mxu0
    %2555 = vmatprep.subr.bf16.mxu0 %v835
    %2556 = vmatpush1.bf16.msra.mxu0 %v834
    %2557 = vmatprep.subr.bf16.mxu0 %v839
    %2558 = vmatpush1.bf16.msra.mxu0 %v838
    %2559 = vmatprep.subr.bf16.mxu0 %v843
    %2560 = vmatpush1.bf16.msra.mxu0 %v842
    %2561 = vmatprep.subr.bf16.mxu0 %v847
    %2562 = vmatpush1.bf16.msra.mxu0 %v846
    %2563 = vmatprep.subr.bf16.mxu0 %v851
    %2564 = vmatpush1.bf16.msra.mxu0 %v850
    %2565 = vmatprep.subr.bf16.mxu0 %v855
    %2566 = vmatpush1.bf16.msra.mxu0 %v854
    %2567 = vmatprep.subr.bf16.mxu0 %v859
    %2568 = vmatpush1.bf16.msra.mxu0 %v858
    %2569 = vmatprep.subr.bf16.mxu0 %v863
    %2570 = vmatpush1.bf16.msra.mxu0 %v862
    %2571 = vmatprep.subr.bf16.mxu0 %v867
    %2572 = vmatpush1.bf16.msra.mxu0 %v866
    %2573 = vmatprep.subr.bf16.mxu0 %v871
    %2574 = vmatpush1.bf16.msra.mxu0 %v870
    %2575 = vmatprep.subr.bf16.mxu0 %v875
    %2576 = vmatpush1.bf16.msra.mxu0 %v874
    %2577 = vmatprep.subr.bf16.mxu0 %v879
    %2578 = vmatpush1.bf16.msra.mxu0 %v878
    %2579 = vmatprep.subr.bf16.mxu0 %v883
    %2580 = vmatpush1.bf16.msra.mxu0 %v882
    %2581 = vmatprep.subr.bf16.mxu0 %v887
    %2582 = vmatpush1.bf16.msra.mxu0 %v886
    %2583 = vmatprep.subr.bf16.mxu0 %v891
    %2584 = vmatpush1.bf16.msra.mxu0 %v890
    %2585 = vmatprep.subr.bf16.mxu0 %v895
    %2586 = vmatpush1.bf16.msra.mxu0 %v894
    %2587 = vmatprep.mubr.bf16.mxu0 %v2398
    %2588 = vmatmul.mubr.bf16.gmra.mrb[0].mxu0 %v2513
    %v2589 = vpop.f32.mrb[0].mxu0
    %v2590 = vadd.f32 %v356, %v2589
    %v2591 = vpop.f32.mrb[0].mxu0
    %v2592 = vadd.f32 %v360, %v2591
    %v2593 = vpop.f32.mrb[0].mxu0
    %v2594 = vpop.f32.mrb[0].mxu0
    %2595 = vdwg.mxu0
    %v2596 = vxor.u32 %v2549, 2147483648
    %v2597 = vxor.u32 %v2551, 2147483648
    %v2598 = vxor.u32 %v2590, 2147483648
    %v2599 = vmul.f32 %v2596, 1.442695
    %v2600 = vpow.pop %v2599
    %v2601 = vmul.f32 %v2597, 1.442695
    %v2602 = vpow.pop %v2601
    %v2603 = vmul.f32 %v2598, 1.442695
    %v2604 = vpow.pop %v2603
    %v2605 = vadd.f32 %v2600, 1.0
    %v2606 = vadd.f32 %v2602, 1.0
    %v2607 = vadd.f32 %v2604, 1.0
    %v2608 = vrcp.pop %v2605
    %v2609 = vmul.f32 1.0, %v2608
    %v2610 = vrcp.pop %v2606
    %v2611 = vmul.f32 1.0, %v2610
    %v2612 = vrcp.pop %v2607
    %v2613 = vmul.f32 1.0, %v2612
    %v2614 = vtanh.pop %v2592
    %v2615 = vmul.f32 %v2611, %v2395
    %v2616 = vmul.f32 %v2609, %v2614
    %v2617 = vadd.f32 %v2615, %v2616
    %v2618 = vtanh.pop %v2617
    %v2619 = vmul.f32 %v2613, %v2618
    %v2620 = vpack.c.bf16 %v2619, %v2619
    %v2621 = vld [vmem:[%s6] sm:$0xf]
    %v2622 = vld [vmem:[%s6 + $0x4] sm:$0xf]
    %v2623 = vld [vmem:[%s6 + $0x8] sm:$0xf]
    %v2624 = vld [vmem:[%s6 + $0xc] sm:$0xf]
    %v2625 = vld [vmem:[%s6 + $0x10] sm:$0xf]
    %v2626 = vld [vmem:[%s6 + $0x14] sm:$0xf]
    %v2627 = vld [vmem:[%s6 + $0x18] sm:$0xf]
    %v2628 = vld [vmem:[%s6 + $0x1c] sm:$0xf]
    %v2629 = vld [vmem:[%s6 + $0x20] sm:$0xf]
    %v2630 = vld [vmem:[%s6 + $0x24] sm:$0xf]
    %v2631 = vld [vmem:[%s6 + $0x28] sm:$0xf]
    %v2632 = vld [vmem:[%s6 + $0x2c] sm:$0xf]
    %v2633 = vld [vmem:[%s6 + $0x30] sm:$0xf]
    %v2634 = vld [vmem:[%s6 + $0x34] sm:$0xf]
    %v2635 = vld [vmem:[%s6 + $0x38] sm:$0xf]
    %v2636 = vld [vmem:[%s6 + $0x3c] sm:$0xf]
    %v2637 = vld [vmem:[%s7] sm:$0x1]
    %v2639 = vlaneseq
    %v2640 = vshrl.u32 %v2639, 7
    %v2641 = vsub.s32 0, %v2640
    %v2642 = vrot.slane %v2637, %v2641
    %v2660 = vunpack.c.l.b16 %v2621
    %v2661 = vunpack.c.l.b16 %v2622
    %v2662 = vunpack.c.l.b16 %v2623
    %v2663 = vunpack.c.l.b16 %v2624
    %v2664 = vunpack.c.l.b16 %v2625
    %v2665 = vunpack.c.l.b16 %v2626
    %v2666 = vunpack.c.l.b16 %v2627
    %v2667 = vunpack.c.l.b16 %v2628
    %v2668 = vunpack.c.l.b16 %v2629
    %v2669 = vunpack.c.l.b16 %v2630
    %v2670 = vunpack.c.l.b16 %v2631
    %v2671 = vunpack.c.l.b16 %v2632
    %v2672 = vunpack.c.l.b16 %v2633
    %v2673 = vunpack.c.l.b16 %v2634
    %v2674 = vunpack.c.l.b16 %v2635
    %v2675 = vunpack.c.l.b16 %v2636
    %v2676 = vpack.c.b16 %v2661, %v2660
    %v2677 = vpack.c.b16 %v2663, %v2662
    %v2678 = vpack.c.b16 %v2665, %v2664
    %v2679 = vpack.c.b16 %v2667, %v2666
    %v2680 = vpack.c.b16 %v2669, %v2668
    %v2681 = vpack.c.b16 %v2671, %v2670
    %v2682 = vpack.c.b16 %v2673, %v2672
    %v2683 = vpack.c.b16 %v2675, %v2674
    %2692 = vmatprep.subr.bf16.mxu0 0
    %2693 = vmatpush1.bf16.msra.mxu0 %v2676
    %2694 = vmatprep.subr.bf16.mxu0 0
    %2695 = vmatpush1.bf16.msra.mxu0 %v2677
    %2696 = vmatprep.subr.bf16.mxu0 0
    %2697 = vmatpush1.bf16.msra.mxu0 %v2678
    %2698 = vmatprep.subr.bf16.mxu0 0
    %2699 = vmatpush1.bf16.msra.mxu0 %v2679
    %2700 = vmatprep.subr.bf16.mxu0 0
    %2701 = vmatpush1.bf16.msra.mxu0 %v2680
    %2702 = vmatprep.subr.bf16.mxu0 0
    %2703 = vmatpush1.bf16.msra.mxu0 %v2681
    %2704 = vmatprep.subr.bf16.mxu0 0
    %2705 = vmatpush1.bf16.msra.mxu0 %v2682
    %2706 = vmatprep.subr.bf16.mxu0 0
    %2707 = vmatpush1.bf16.msra.mxu0 %v2683
    %2708 = vmatprep.subr.bf16.mxu0 0
    %2709 = vmatpush1.bf16.msra.mxu0 0
    %2710 = vmatprep.subr.bf16.mxu0 0
    %2711 = vmatpush1.bf16.msra.mxu0 0
    %2712 = vmatprep.subr.bf16.mxu0 0
    %2713 = vmatpush1.bf16.msra.mxu0 0
    %2714 = vmatprep.subr.bf16.mxu0 0
    %2715 = vmatpush1.bf16.msra.mxu0 0
    %2716 = vmatprep.subr.bf16.mxu0 0
    %2717 = vmatpush1.bf16.msra.mxu0 0
    %2718 = vmatprep.subr.bf16.mxu0 0
    %2719 = vmatpush1.bf16.msra.mxu0 0
    %2720 = vmatprep.subr.bf16.mxu0 0
    %2721 = vmatpush1.bf16.msra.mxu0 0
    %2722 = vmatprep.subr.bf16.mxu0 0
    %2723 = vmatpush1.bf16.msra.mxu0 0
    %2724 = vmatprep.mubr.bf16.mxu0 0
    %2725 = vmatmul.mubr.bf16.gmra.mrb[0].mxu0 %v2620
    %v2726 = vpop.f32.mrb[0].mxu0
    %v2727 = vadd.f32 %v2642, %v2726
    %v2728 = vpop.f32.mrb[0].mxu0
    %v2729 = vpop.f32.mrb[0].mxu0
    %v2730 = vpop.f32.mrb[0].mxu0
    %2731 = vdwg.mxu0
    %2732 = vst [vmem:[#allocation8] sm:$0xff] %v2727
    // Predicated region
    $region42: #{tpu_custom_call.1} parent=1 // pred_check
      _
    $region43: #{tpu_custom_call.1} parent=1 // pred_check_branch
      %2734 = sbr.rel (0) target = $region45
    $region44: #{tpu_custom_call.1} parent=1 // pred_region
      %s2736 = ssub.s32 128, 128
      %2737 = vsyncadd [#allocation5], %s2736
      %s2739 = sshll.u32 [#allocation8], 4
      %s2740 = int_to_ptr.vmem [resolvable:$true] %s2739
      %2742 = dma.vmem_to_hbm [thread:$0]  %s2740, 128, %s8, [#allocation5]
    $region45: #{tpu_custom_call.1} parent=1 // pred_fallthru
      _
    // Predicated region
    $region46: #{tpu_custom_call.1} parent=1 // pred_check
      _
    $region47: #{tpu_custom_call.1} parent=1 // pred_check_branch
      %2744 = sbr.rel (0) target = $region49
    $region48: #{tpu_custom_call.1} parent=1 // pred_region
      %2745 = dma.done [#allocation5], 128
    $region49: #{tpu_custom_call.1} parent=1 // pred_fallthru
      _
    %2746 = vsyncpa [#allocation4], 1
    %2747 = vsyncpa [#allocation7], 1
    %2748 = vsyncpa [#allocation5], 1

</llo_original>
